<compile_context>
chip_gen: v6e
topology: v6e:2x2x1
jax: 0.10.0
libtpu: 0.0.40
codegen_flags: <defaults>
</compile_context>

<pallas_src>
import jax
import jax.numpy as jnp
from jax.experimental import pallas as pl
from jax.experimental.pallas import tpu as pltpu

BN_EPS = 1e-5


# ------------------------- Pallas kernels -------------------------

def _conv1_bn_relu_conv2_kernel(p_ref, w1_ref, g_ref, beta_ref,
                                w2_ref, b2_ref, o_ref):
    # conv1 as matmul (bias dropped: cancelled by train-mode BN), batch-norm
    # over the row axis (rows == N*H1*W1 == the full batch), ReLU, then
    # conv2 (1x1) as a second MXU matmul + bias, all without leaving VMEM.
    y = jnp.dot(p_ref[...], w1_ref[...], preferred_element_type=jnp.float32)
    mean = jnp.mean(y, axis=0, keepdims=True)
    var = jnp.mean((y - mean) ** 2, axis=0, keepdims=True)   # biased variance
    yhat = (y - mean) * jax.lax.rsqrt(var + BN_EPS)
    a = jnp.maximum(yhat * g_ref[...] + beta_ref[...], 0.0)
    o_ref[...] = (
        jnp.dot(a, w2_ref[...], preferred_element_type=jnp.float32)
        + b2_ref[...]
    )


def _maxpool5x5_kernel(x_ref, o_ref):
    # x_ref: (N*Hout, 5, Wout, 5, C); the two 5-wide axes are the pool window.
    # Column window (axis 3, 2nd-minor) -> single sublane max reduce.
    # Row window (axis 1, leading dim)  -> log-depth tree of VPU maxima.
    x = jnp.max(x_ref[...], axis=3)                 # (R, 5, Wout, C)
    m01 = jnp.maximum(x[:, 0], x[:, 1])
    m23 = jnp.maximum(x[:, 2], x[:, 3])
    o_ref[...] = jnp.maximum(jnp.maximum(m01, m23), x[:, 4])


def _conv3_bn_relu_kernel(p_ref, w_ref, g_ref, beta_ref, o_ref):
    # conv3 as matmul (bias dropped: cancelled by train-mode BN) + BN + ReLU.
    y = jnp.dot(p_ref[...], w_ref[...], preferred_element_type=jnp.float32)
    mean = jnp.mean(y, axis=0, keepdims=True)
    var = jnp.mean((y - mean) ** 2, axis=0, keepdims=True)
    yhat = (y - mean) * jax.lax.rsqrt(var + BN_EPS)
    o_ref[...] = jnp.maximum(yhat * g_ref[...] + beta_ref[...], 0.0)


def _vmem():
    return pl.BlockSpec(memory_space=pltpu.MemorySpace.VMEM)


def conv1_bn_relu_conv2(p, w1, g, beta, w2, b2):
    M = p.shape[0]
    C = w2.shape[1]
    return pl.pallas_call(
        _conv1_bn_relu_conv2_kernel,
        out_shape=jax.ShapeDtypeStruct((M, C), jnp.float32),
        in_specs=[_vmem() for _ in range(6)],
        out_specs=_vmem(),
    )(p, w1, g, beta, w2, b2)


def maxpool5x5(x):
    R, _, Wo, _, C = x.shape
    return pl.pallas_call(
        _maxpool5x5_kernel,
        out_shape=jax.ShapeDtypeStruct((R, Wo, C), jnp.float32),
        in_specs=[_vmem()],
        out_specs=_vmem(),
    )(x)


def conv3_bn_relu(p, w, g, beta):
    M = p.shape[0]
    C = w.shape[1]
    return pl.pallas_call(
        _conv3_bn_relu_kernel,
        out_shape=jax.ShapeDtypeStruct((M, C), jnp.float32),
        in_specs=[_vmem() for _ in range(4)],
        out_specs=_vmem(),
    )(p, w, g, beta)


# ------------------------- JAX glue -------------------------

def im2col(x_nhwc, kh, kw, stride, pad):
    """Extract conv patches; returns ((N*Hout*Wout, kh*kw*C), Hout, Wout)."""
    N, H, W, C = x_nhwc.shape
    xp = jnp.pad(x_nhwc, ((0, 0), (pad, pad), (pad, pad), (0, 0)))
    Hp, Wp = H + 2 * pad, W + 2 * pad
    Hout = (Hp - kh) // stride + 1
    Wout = (Wp - kw) // stride + 1
    cols = []
    for i in range(kh):
        for j in range(kw):
            cols.append(
                xp[:, i:i + stride * (Hout - 1) + 1:stride,
                      j:j + stride * (Wout - 1) + 1:stride, :]
            )
    patches = jnp.concatenate(cols, axis=-1)      # (N, Hout, Wout, kh*kw*C)
    return patches.reshape(N * Hout * Wout, kh * kw * C), Hout, Wout


def flatten_conv_weight(w_oihw):
    """(Cout, Cin, KH, KW) -> (KH*KW*Cin, Cout), matching im2col ordering."""
    Cout, Cin, KH, KW = w_oihw.shape
    return jnp.transpose(w_oihw, (2, 3, 1, 0)).reshape(KH * KW * Cin, Cout)


def model_forward(x_nchw, params):
    x = jnp.transpose(x_nchw, (0, 2, 3, 1)).astype(jnp.float32)  # NCHW->NHWC
    N = x.shape[0]

    # conv1 + BN + ReLU + conv2(1x1), single fused Pallas kernel over the
    # stride-2 interior grid.  (b1 intentionally not passed: cancelled by
    # training-mode batch statistics inside the BN.)
    p1, H1, W1 = im2col(x, 3, 3, stride=2, pad=1)
    y12 = conv1_bn_relu_conv2(
        p1, flatten_conv_weight(params["w1"]),
        params["g1"][None, :], params["be1"][None, :],
        flatten_conv_weight(params["w2"]), params["b2"][None, :])
    y12 = y12.reshape(N, H1, W1, 32)

    # conv2 has padding=1: a 1x1 conv on the zero-padded ring is exactly b2,
    # so compose the border in the wrapper instead of matmul-ing it.
    H2, W2 = H1 + 2, W1 + 2
    y2 = jnp.broadcast_to(params["b2"], (N, H2, W2, 32))
    y2 = y2.at[:, 1:1 + H1, 1:1 + W1, :].set(y12)

    # MaxPool2d(5, stride=5, pad=2): -inf padding (PyTorch semantics), slice
    # to the covered window region, contiguous-split reshape to expose the
    # two 5-wide window axes, reduce inside the Pallas kernel (no transpose).
    Hpo = (H2 + 2 * 2 - 5) // 5 + 1
    Wpo = (W2 + 2 * 2 - 5) // 5 + 1
    y2p = jnp.pad(y2, ((0, 0), (2, 2), (2, 2), (0, 0)),
                  constant_values=-jnp.inf)
    pool_in = y2p[:, :Hpo * 5, :Wpo * 5, :].reshape(N * Hpo, 5, Wpo, 5, 32)
    y3 = maxpool5x5(pool_in).reshape(N, Hpo, Wpo, 32)

    # conv3 + BN + ReLU, fused Pallas kernel (b3 dropped, cancelled by BN).
    p3, H3, W3 = im2col(y3, 3, 3, stride=1, pad=1)
    y4 = conv3_bn_relu(
        p3, flatten_conv_weight(params["w3"]),
        params["g2"][None, :], params["be2"][None, :])
    y4 = y4.reshape(N, H3, W3, 64)

    return jnp.transpose(y4, (0, 3, 1, 2))          # NHWC -> NCHW


# ------------------------- deterministic params -------------------------

def init_params(key):
    ks = jax.random.split(key, 6)

    def conv_w(k, cout, cin, kh, kw):
        fan_in = cin * kh * kw
        return jax.random.normal(k, (cout, cin, kh, kw), jnp.float32) / jnp.sqrt(
            jnp.float32(fan_in))

    return dict(
        w1=conv_w(ks[0], 32, 3, 3, 3),
        # b1/b3 kept for module fidelity but mathematically cancelled by the
        # training-mode BatchNorm that immediately follows, so never passed
        # to the kernels.
        b1=0.05 * jax.random.normal(ks[1], (32,), jnp.float32),
        # BatchNorm2d defaults: weight=1, bias=0 (fresh PyTorch module)
        g1=jnp.ones((32,), jnp.float32),
        be1=jnp.zeros((32,), jnp.float32),
        w2=conv_w(ks[2], 32, 32, 1, 1),
        b2=0.05 * jax.random.normal(ks[3], (32,), jnp.float32),
        w3=conv_w(ks[4], 64, 32, 3, 3),
        b3=0.05 * jax.random.normal(ks[5], (64,), jnp.float32),
        g2=jnp.ones((64,), jnp.float32),
        be2=jnp.zeros((64,), jnp.float32),
    )


if __name__ == "__main__":
    key = jax.random.PRNGKey(0)
    pkey, xkey = jax.random.split(key)
    params = init_params(pkey)
    x = jax.random.normal(xkey, (1, 3, 64, 64), jnp.float32)  # matches x1

    out = jax.jit(model_forward)(x, params)
    out = jax.block_until_ready(out)

    assert out.shape == (1, 64, 7, 7), out.shape
    assert bool(jnp.all(jnp.isfinite(out)))
    assert bool(jnp.all(out >= 0.0))  # ends with ReLU
    print("KERNEL_OK")
</pallas_src>

<mosaic_0001>
module attributes {stable_mosaic.version = 11 : i64} {
  func.func @_conv1_bn_relu_conv2_kernel(%arg0: memref<1024x27xf32, #tpu.memory_space<vmem>>, %arg1: memref<27x32xf32, #tpu.memory_space<vmem>>, %arg2: memref<1x32xf32, #tpu.memory_space<vmem>>, %arg3: memref<1x32xf32, #tpu.memory_space<vmem>>, %arg4: memref<32x32xf32, #tpu.memory_space<vmem>>, %arg5: memref<1x32xf32, #tpu.memory_space<vmem>>, %arg6: memref<1024x32xf32, #tpu.memory_space<vmem>>) attributes {dimension_semantics = [], scalar_prefetch = 0 : i64, scratch_operands = 0 : i64, tpu.core_type = #tpu.core_type<tc>} {
    %c0 = arith.constant 0 : index
    %c0_0 = arith.constant 0 : index
    %0 = vector.load %arg0[%c0, %c0_0] : memref<1024x27xf32, #tpu.memory_space<vmem>>, vector<1024x27xf32>
    %c0_1 = arith.constant 0 : index
    %c0_2 = arith.constant 0 : index
    %1 = vector.load %arg1[%c0_1, %c0_2] : memref<27x32xf32, #tpu.memory_space<vmem>>, vector<27x32xf32>
    %cst = arith.constant dense<0.000000e+00> : vector<1024x32xf32>
    %2 = tpu.matmul %0, %1, %cst {dimension_numbers = #tpu.dot_dimension_numbers<[1], [0], [0], [1], [0, 0, 1, 1], [], []>} : vector<1024x27xf32>, vector<27x32xf32>, vector<1024x32xf32> -> vector<1024x32xf32>
    %cst_3 = arith.constant dense<0.000000e+00> : vector<32xf32>
    %3 = vector.multi_reduction <add>, %2, %cst_3 [0] : vector<1024x32xf32> to vector<32xf32>
    %4 = vector.shape_cast %3 : vector<32xf32> to vector<1x32xf32>
    %cst_4 = arith.constant 1.024000e+03 : f32
    %5 = vector.broadcast %cst_4 : f32 to vector<1x32xf32>
    %6 = arith.divf %4, %5 : vector<1x32xf32>
    %7 = vector.broadcast %6 : vector<1x32xf32> to vector<1024x32xf32>
    %8 = arith.subf %2, %7 : vector<1024x32xf32>
    %9 = arith.mulf %8, %8 : vector<1024x32xf32>
    %cst_5 = arith.constant dense<0.000000e+00> : vector<32xf32>
    %10 = vector.multi_reduction <add>, %9, %cst_5 [0] : vector<1024x32xf32> to vector<32xf32>
    %11 = vector.shape_cast %10 : vector<32xf32> to vector<1x32xf32>
    %cst_6 = arith.constant 1.024000e+03 : f32
    %12 = vector.broadcast %cst_6 : f32 to vector<1x32xf32>
    %13 = arith.divf %11, %12 : vector<1x32xf32>
    %14 = vector.broadcast %6 : vector<1x32xf32> to vector<1024x32xf32>
    %15 = arith.subf %2, %14 : vector<1024x32xf32>
    %cst_7 = arith.constant 9.99999974E-6 : f32
    %16 = vector.broadcast %cst_7 : f32 to vector<1x32xf32>
    %17 = arith.addf %13, %16 : vector<1x32xf32>
    %18 = math.rsqrt %17 : vector<1x32xf32>
    %19 = vector.broadcast %18 : vector<1x32xf32> to vector<1024x32xf32>
    %20 = arith.mulf %15, %19 : vector<1024x32xf32>
    %c0_8 = arith.constant 0 : index
    %c0_9 = arith.constant 0 : index
    %21 = vector.load %arg2[%c0_8, %c0_9] : memref<1x32xf32, #tpu.memory_space<vmem>>, vector<1x32xf32>
    %22 = vector.broadcast %21 : vector<1x32xf32> to vector<1024x32xf32>
    %23 = arith.mulf %20, %22 : vector<1024x32xf32>
    %c0_10 = arith.constant 0 : index
    %c0_11 = arith.constant 0 : index
    %24 = vector.load %arg3[%c0_10, %c0_11] : memref<1x32xf32, #tpu.memory_space<vmem>>, vector<1x32xf32>
    %25 = vector.broadcast %24 : vector<1x32xf32> to vector<1024x32xf32>
    %26 = arith.addf %23, %25 : vector<1024x32xf32>
    %cst_12 = arith.constant 0.000000e+00 : f32
    %27 = vector.broadcast %cst_12 : f32 to vector<1024x32xf32>
    %28 = arith.maximumf %26, %27 : vector<1024x32xf32>
    %c0_13 = arith.constant 0 : index
    %c0_14 = arith.constant 0 : index
    %29 = vector.load %arg4[%c0_13, %c0_14] : memref<32x32xf32, #tpu.memory_space<vmem>>, vector<32x32xf32>
    %cst_15 = arith.constant dense<0.000000e+00> : vector<1024x32xf32>
    %30 = tpu.matmul %28, %29, %cst_15 {dimension_numbers = #tpu.dot_dimension_numbers<[1], [0], [0], [1], [0, 0, 1, 1], [], []>} : vector<1024x32xf32>, vector<32x32xf32>, vector<1024x32xf32> -> vector<1024x32xf32>
    %c0_16 = arith.constant 0 : index
    %c0_17 = arith.constant 0 : index
    %31 = vector.load %arg5[%c0_16, %c0_17] : memref<1x32xf32, #tpu.memory_space<vmem>>, vector<1x32xf32>
    %32 = vector.broadcast %31 : vector<1x32xf32> to vector<1024x32xf32>
    %33 = arith.addf %30, %32 : vector<1024x32xf32>
    %c0_18 = arith.constant 0 : index
    %c0_19 = arith.constant 0 : index
    %34 = vector.load %arg6[%c0_18, %c0_19] : memref<1024x32xf32, #tpu.memory_space<vmem>>, vector<1024x32xf32>
    tpu.vector_store %arg6[%c0_18, %c0_19], %33 {strides = array<i32>} : memref<1024x32xf32, #tpu.memory_space<vmem>>, vector<1024x32xf32>,
    return
  }
}

module attributes {stable_mosaic.version = 11 : i64} {
  func.func @_maxpool5x5_kernel(%arg0: memref<7x5x7x5x32xf32, #tpu.memory_space<vmem>>, %arg1: memref<7x7x32xf32, #tpu.memory_space<vmem>>) attributes {dimension_semantics = [], scalar_prefetch = 0 : i64, scratch_operands = 0 : i64, tpu.core_type = #tpu.core_type<tc>} {
    %c0 = arith.constant 0 : index
    %c0_0 = arith.constant 0 : index
    %c0_1 = arith.constant 0 : index
    %c0_2 = arith.constant 0 : index
    %c0_3 = arith.constant 0 : index
    %0 = vector.load %arg0[%c0, %c0_0, %c0_1, %c0_2, %c0_3] : memref<7x5x7x5x32xf32, #tpu.memory_space<vmem>>, vector<7x5x7x5x32xf32>
    %cst = arith.constant dense<0xFF800000> : vector<7x5x7x32xf32>
    %1 = vector.multi_reduction <maximumf>, %0, %cst [3] : vector<7x5x7x5x32xf32> to vector<7x5x7x32xf32>
    %2 = vector.extract_strided_slice %1 {offsets = [0, 0, 0, 0], sizes = [7, 1, 7, 32], strides = [1, 1, 1, 1]} : vector<7x5x7x32xf32> to vector<7x1x7x32xf32>
    %3 = vector.shape_cast %2 : vector<7x1x7x32xf32> to vector<7x7x32xf32>
    %4 = vector.extract_strided_slice %1 {offsets = [0, 1, 0, 0], sizes = [7, 1, 7, 32], strides = [1, 1, 1, 1]} : vector<7x5x7x32xf32> to vector<7x1x7x32xf32>
    %5 = vector.shape_cast %4 : vector<7x1x7x32xf32> to vector<7x7x32xf32>
    %6 = arith.maximumf %3, %5 : vector<7x7x32xf32>
    %7 = vector.extract_strided_slice %1 {offsets = [0, 2, 0, 0], sizes = [7, 1, 7, 32], strides = [1, 1, 1, 1]} : vector<7x5x7x32xf32> to vector<7x1x7x32xf32>
    %8 = vector.shape_cast %7 : vector<7x1x7x32xf32> to vector<7x7x32xf32>
    %9 = vector.extract_strided_slice %1 {offsets = [0, 3, 0, 0], sizes = [7, 1, 7, 32], strides = [1, 1, 1, 1]} : vector<7x5x7x32xf32> to vector<7x1x7x32xf32>
    %10 = vector.shape_cast %9 : vector<7x1x7x32xf32> to vector<7x7x32xf32>
    %11 = arith.maximumf %8, %10 : vector<7x7x32xf32>
    %12 = arith.maximumf %6, %11 : vector<7x7x32xf32>
    %13 = vector.extract_strided_slice %1 {offsets = [0, 4, 0, 0], sizes = [7, 1, 7, 32], strides = [1, 1, 1, 1]} : vector<7x5x7x32xf32> to vector<7x1x7x32xf32>
    %14 = vector.shape_cast %13 : vector<7x1x7x32xf32> to vector<7x7x32xf32>
    %15 = arith.maximumf %12, %14 : vector<7x7x32xf32>
    %c0_4 = arith.constant 0 : index
    %c0_5 = arith.constant 0 : index
    %c0_6 = arith.constant 0 : index
    %16 = vector.load %arg1[%c0_4, %c0_5, %c0_6] : memref<7x7x32xf32, #tpu.memory_space<vmem>>, vector<7x7x32xf32>
    tpu.vector_store %arg1[%c0_4, %c0_5, %c0_6], %15 {strides = array<i32>} : memref<7x7x32xf32, #tpu.memory_space<vmem>>, vector<7x7x32xf32>,
    return
  }
}

module attributes {stable_mosaic.version = 11 : i64} {
  func.func @_conv3_bn_relu_kernel(%arg0: memref<49x288xf32, #tpu.memory_space<vmem>>, %arg1: memref<288x64xf32, #tpu.memory_space<vmem>>, %arg2: memref<1x64xf32, #tpu.memory_space<vmem>>, %arg3: memref<1x64xf32, #tpu.memory_space<vmem>>, %arg4: memref<49x64xf32, #tpu.memory_space<vmem>>) attributes {dimension_semantics = [], scalar_prefetch = 0 : i64, scratch_operands = 0 : i64, tpu.core_type = #tpu.core_type<tc>} {
    %c0 = arith.constant 0 : index
    %c0_0 = arith.constant 0 : index
    %0 = vector.load %arg0[%c0, %c0_0] : memref<49x288xf32, #tpu.memory_space<vmem>>, vector<49x288xf32>
    %c0_1 = arith.constant 0 : index
    %c0_2 = arith.constant 0 : index
    %1 = vector.load %arg1[%c0_1, %c0_2] : memref<288x64xf32, #tpu.memory_space<vmem>>, vector<288x64xf32>
    %cst = arith.constant dense<0.000000e+00> : vector<49x64xf32>
    %2 = tpu.matmul %0, %1, %cst {dimension_numbers = #tpu.dot_dimension_numbers<[1], [0], [0], [1], [0, 0, 1, 1], [], []>} : vector<49x288xf32>, vector<288x64xf32>, vector<49x64xf32> -> vector<49x64xf32>
    %cst_3 = arith.constant dense<0.000000e+00> : vector<64xf32>
    %3 = vector.multi_reduction <add>, %2, %cst_3 [0] : vector<49x64xf32> to vector<64xf32>
    %4 = vector.shape_cast %3 : vector<64xf32> to vector<1x64xf32>
    %cst_4 = arith.constant 4.900000e+01 : f32
    %5 = vector.broadcast %cst_4 : f32 to vector<1x64xf32>
    %6 = arith.divf %4, %5 : vector<1x64xf32>
    %7 = vector.broadcast %6 : vector<1x64xf32> to vector<49x64xf32>
    %8 = arith.subf %2, %7 : vector<49x64xf32>
    %9 = arith.mulf %8, %8 : vector<49x64xf32>
    %cst_5 = arith.constant dense<0.000000e+00> : vector<64xf32>
    %10 = vector.multi_reduction <add>, %9, %cst_5 [0] : vector<49x64xf32> to vector<64xf32>
    %11 = vector.shape_cast %10 : vector<64xf32> to vector<1x64xf32>
    %cst_6 = arith.constant 4.900000e+01 : f32
    %12 = vector.broadcast %cst_6 : f32 to vector<1x64xf32>
    %13 = arith.divf %11, %12 : vector<1x64xf32>
    %14 = vector.broadcast %6 : vector<1x64xf32> to vector<49x64xf32>
    %15 = arith.subf %2, %14 : vector<49x64xf32>
    %cst_7 = arith.constant 9.99999974E-6 : f32
    %16 = vector.broadcast %cst_7 : f32 to vector<1x64xf32>
    %17 = arith.addf %13, %16 : vector<1x64xf32>
    %18 = math.rsqrt %17 : vector<1x64xf32>
    %19 = vector.broadcast %18 : vector<1x64xf32> to vector<49x64xf32>
    %20 = arith.mulf %15, %19 : vector<49x64xf32>
    %c0_8 = arith.constant 0 : index
    %c0_9 = arith.constant 0 : index
    %21 = vector.load %arg2[%c0_8, %c0_9] : memref<1x64xf32, #tpu.memory_space<vmem>>, vector<1x64xf32>
    %22 = vector.broadcast %21 : vector<1x64xf32> to vector<49x64xf32>
    %23 = arith.mulf %20, %22 : vector<49x64xf32>
    %c0_10 = arith.constant 0 : index
    %c0_11 = arith.constant 0 : index
    %24 = vector.load %arg3[%c0_10, %c0_11] : memref<1x64xf32, #tpu.memory_space<vmem>>, vector<1x64xf32>
    %25 = vector.broadcast %24 : vector<1x64xf32> to vector<49x64xf32>
    %26 = arith.addf %23, %25 : vector<49x64xf32>
    %cst_12 = arith.constant 0.000000e+00 : f32
    %27 = vector.broadcast %cst_12 : f32 to vector<49x64xf32>
    %28 = arith.maximumf %26, %27 : vector<49x64xf32>
    %c0_13 = arith.constant 0 : index
    %c0_14 = arith.constant 0 : index
    %29 = vector.load %arg4[%c0_13, %c0_14] : memref<49x64xf32, #tpu.memory_space<vmem>>, vector<49x64xf32>
    tpu.vector_store %arg4[%c0_13, %c0_14], %28 {strides = array<i32>} : memref<49x64xf32, #tpu.memory_space<vmem>>, vector<49x64xf32>,
    return
  }
}

</mosaic_0001>

<llo_original>
// kernel: model_forward.3
$region0: #{model_forward.3}
  #allocation0 [shape = 'u32[]', space=smem, size = 0x4, offset = 0x4, fixed_abs, tag = 'smem constant byte address 0x4 - core index']
  #allocation1 [shape = 'u32[144,128]{1,0:T(1,128)}', space=vmem, size = 0x12000, scoped, tag = 'internal scratch']
  %s0 = inlined_call_operand.vmem [shape: f32[1024,27], index: 0, kind: input, shape index: {}]
  %s1 = inlined_call_operand.vmem [shape: f32[27,32], index: 1, kind: input, shape index: {}]
  %s2 = inlined_call_operand.vmem [shape: f32[1,32], index: 2, kind: input, shape index: {}]
  %s3 = inlined_call_operand.vmem [shape: f32[1,32], index: 3, kind: input, shape index: {}]
  %s4 = inlined_call_operand.vmem [shape: f32[32,32], index: 4, kind: input, shape index: {}]
  %s5 = inlined_call_operand.vmem [shape: f32[1,32], index: 5, kind: input, shape index: {}]
  %s6 = inlined_call_operand.vmem [shape: f32[1024,32], index: 6, kind: output, shape index: {}]
  %s7 = sld [smem:[#allocation0]]
  $region34: #{model_forward.3} parent=0
    _
  %s9 = ssub.s32 1, %s7
  %s10 = scalar_select 0, %s9, %s7
  // Predicated region
  $region2: #{model_forward.3} parent=0 // pred_check
    _
  $region3: #{model_forward.3} parent=0 // pred_check_branch
    %12 = sbr.rel (0) target = $region5
  $region4: #{model_forward.3} parent=0 // pred_region
    _
  $region5: #{model_forward.3} parent=0 // pred_fallthru
    _
  // Predicated region
  $region6: #{model_forward.3} parent=0 // pred_check
    _
  $region7: #{model_forward.3} parent=0 // pred_check_branch
    %14 = sbr.rel (0) target = $region9
  $region8: #{model_forward.3} parent=0 // pred_region
    _
  $region9: #{model_forward.3} parent=0 // pred_fallthru
    _
  // Predicated region
  $region10: #{model_forward.3} parent=0 // pred_check
    _
  $region11: #{model_forward.3} parent=0 // pred_check_branch
    %16 = sbr.rel (0) target = $region13
  $region12: #{model_forward.3} parent=0 // pred_region
    _
  $region13: #{model_forward.3} parent=0 // pred_fallthru
    _
  // Predicated region
  $region14: #{model_forward.3} parent=0 // pred_check
    _
  $region15: #{model_forward.3} parent=0 // pred_check_branch
    %18 = sbr.rel (0) target = $region17
  $region16: #{model_forward.3} parent=0 // pred_region
    _
  $region17: #{model_forward.3} parent=0 // pred_fallthru
    _
  // Predicated region
  $region18: #{model_forward.3} parent=0 // pred_check
    _
  $region19: #{model_forward.3} parent=0 // pred_check_branch
    %20 = sbr.rel (0) target = $region21
  $region20: #{model_forward.3} parent=0 // pred_region
    _
  $region21: #{model_forward.3} parent=0 // pred_fallthru
    _
  // Predicated region
  $region22: #{model_forward.3} parent=0 // pred_check
    _
  $region23: #{model_forward.3} parent=0 // pred_check_branch
    %22 = sbr.rel (0) target = $region25
  $region24: #{model_forward.3} parent=0 // pred_region
    _
  $region25: #{model_forward.3} parent=0 // pred_fallthru
    _
  %v23 = vld [vmem:[%s0] sm:$0xff]
  %v24 = vld [vmem:[%s0 + $0x8] sm:$0xff]
  %v25 = vld [vmem:[%s0 + $0x10] sm:$0xff]
  %v26 = vld [vmem:[%s0 + $0x18] sm:$0xff]
  %v27 = vld [vmem:[%s0 + $0x20] sm:$0xff]
  %v28 = vld [vmem:[%s0 + $0x28] sm:$0xff]
  %v29 = vld [vmem:[%s0 + $0x30] sm:$0xff]
  %v30 = vld [vmem:[%s0 + $0x38] sm:$0xff]
  %v31 = vld [vmem:[%s0 + $0x40] sm:$0xff]
  %v32 = vld [vmem:[%s0 + $0x48] sm:$0xff]
  %v33 = vld [vmem:[%s0 + $0x50] sm:$0xff]
  %v34 = vld [vmem:[%s0 + $0x58] sm:$0xff]
  %v35 = vld [vmem:[%s0 + $0x60] sm:$0xff]
  %v36 = vld [vmem:[%s0 + $0x68] sm:$0xff]
  %v37 = vld [vmem:[%s0 + $0x70] sm:$0xff]
  %v38 = vld [vmem:[%s0 + $0x78] sm:$0xff]
  %v39 = vld [vmem:[%s0 + $0x80] sm:$0xff]
  %v40 = vld [vmem:[%s0 + $0x88] sm:$0xff]
  %v41 = vld [vmem:[%s0 + $0x90] sm:$0xff]
  %v42 = vld [vmem:[%s0 + $0x98] sm:$0xff]
  %v43 = vld [vmem:[%s0 + $0xa0] sm:$0xff]
  %v44 = vld [vmem:[%s0 + $0xa8] sm:$0xff]
  %v45 = vld [vmem:[%s0 + $0xb0] sm:$0xff]
  %v46 = vld [vmem:[%s0 + $0xb8] sm:$0xff]
  %v47 = vld [vmem:[%s0 + $0xc0] sm:$0xff]
  %v48 = vld [vmem:[%s0 + $0xc8] sm:$0xff]
  %v49 = vld [vmem:[%s0 + $0xd0] sm:$0xff]
  %v50 = vld [vmem:[%s0 + $0xd8] sm:$0xff]
  %v51 = vld [vmem:[%s0 + $0xe0] sm:$0xff]
  %v52 = vld [vmem:[%s0 + $0xe8] sm:$0xff]
  %v53 = vld [vmem:[%s0 + $0xf0] sm:$0xff]
  %v54 = vld [vmem:[%s0 + $0xf8] sm:$0xff]
  %v55 = vld [vmem:[%s0 + $0x100] sm:$0xff]
  %v56 = vld [vmem:[%s0 + $0x108] sm:$0xff]
  %v57 = vld [vmem:[%s0 + $0x110] sm:$0xff]
  %v58 = vld [vmem:[%s0 + $0x118] sm:$0xff]
  %v59 = vld [vmem:[%s0 + $0x120] sm:$0xff]
  %v60 = vld [vmem:[%s0 + $0x128] sm:$0xff]
  %v61 = vld [vmem:[%s0 + $0x130] sm:$0xff]
  %v62 = vld [vmem:[%s0 + $0x138] sm:$0xff]
  %v63 = vld [vmem:[%s0 + $0x140] sm:$0xff]
  %v64 = vld [vmem:[%s0 + $0x148] sm:$0xff]
  %v65 = vld [vmem:[%s0 + $0x150] sm:$0xff]
  %v66 = vld [vmem:[%s0 + $0x158] sm:$0xff]
  %v67 = vld [vmem:[%s0 + $0x160] sm:$0xff]
  %v68 = vld [vmem:[%s0 + $0x168] sm:$0xff]
  %v69 = vld [vmem:[%s0 + $0x170] sm:$0xff]
  %v70 = vld [vmem:[%s0 + $0x178] sm:$0xff]
  %v71 = vld [vmem:[%s0 + $0x180] sm:$0xff]
  %v72 = vld [vmem:[%s0 + $0x188] sm:$0xff]
  %v73 = vld [vmem:[%s0 + $0x190] sm:$0xff]
  %v74 = vld [vmem:[%s0 + $0x198] sm:$0xff]
  %v75 = vld [vmem:[%s0 + $0x1a0] sm:$0xff]
  %v76 = vld [vmem:[%s0 + $0x1a8] sm:$0xff]
  %v77 = vld [vmem:[%s0 + $0x1b0] sm:$0xff]
  %v78 = vld [vmem:[%s0 + $0x1b8] sm:$0xff]
  %v79 = vld [vmem:[%s0 + $0x1c0] sm:$0xff]
  %v80 = vld [vmem:[%s0 + $0x1c8] sm:$0xff]
  %v81 = vld [vmem:[%s0 + $0x1d0] sm:$0xff]
  %v82 = vld [vmem:[%s0 + $0x1d8] sm:$0xff]
  %v83 = vld [vmem:[%s0 + $0x1e0] sm:$0xff]
  %v84 = vld [vmem:[%s0 + $0x1e8] sm:$0xff]
  %v85 = vld [vmem:[%s0 + $0x1f0] sm:$0xff]
  %v86 = vld [vmem:[%s0 + $0x1f8] sm:$0xff]
  %v87 = vld [vmem:[%s0 + $0x200] sm:$0xff]
  %v88 = vld [vmem:[%s0 + $0x208] sm:$0xff]
  %v89 = vld [vmem:[%s0 + $0x210] sm:$0xff]
  %v90 = vld [vmem:[%s0 + $0x218] sm:$0xff]
  %v91 = vld [vmem:[%s0 + $0x220] sm:$0xff]
  %v92 = vld [vmem:[%s0 + $0x228] sm:$0xff]
  %v93 = vld [vmem:[%s0 + $0x230] sm:$0xff]
  %v94 = vld [vmem:[%s0 + $0x238] sm:$0xff]
  %v95 = vld [vmem:[%s0 + $0x240] sm:$0xff]
  %v96 = vld [vmem:[%s0 + $0x248] sm:$0xff]
  %v97 = vld [vmem:[%s0 + $0x250] sm:$0xff]
  %v98 = vld [vmem:[%s0 + $0x258] sm:$0xff]
  %v99 = vld [vmem:[%s0 + $0x260] sm:$0xff]
  %v100 = vld [vmem:[%s0 + $0x268] sm:$0xff]
  %v101 = vld [vmem:[%s0 + $0x270] sm:$0xff]
  %v102 = vld [vmem:[%s0 + $0x278] sm:$0xff]
  %v103 = vld [vmem:[%s0 + $0x280] sm:$0xff]
  %v104 = vld [vmem:[%s0 + $0x288] sm:$0xff]
  %v105 = vld [vmem:[%s0 + $0x290] sm:$0xff]
  %v106 = vld [vmem:[%s0 + $0x298] sm:$0xff]
  %v107 = vld [vmem:[%s0 + $0x2a0] sm:$0xff]
  %v108 = vld [vmem:[%s0 + $0x2a8] sm:$0xff]
  %v109 = vld [vmem:[%s0 + $0x2b0] sm:$0xff]
  %v110 = vld [vmem:[%s0 + $0x2b8] sm:$0xff]
  %v111 = vld [vmem:[%s0 + $0x2c0] sm:$0xff]
  %v112 = vld [vmem:[%s0 + $0x2c8] sm:$0xff]
  %v113 = vld [vmem:[%s0 + $0x2d0] sm:$0xff]
  %v114 = vld [vmem:[%s0 + $0x2d8] sm:$0xff]
  %v115 = vld [vmem:[%s0 + $0x2e0] sm:$0xff]
  %v116 = vld [vmem:[%s0 + $0x2e8] sm:$0xff]
  %v117 = vld [vmem:[%s0 + $0x2f0] sm:$0xff]
  %v118 = vld [vmem:[%s0 + $0x2f8] sm:$0xff]
  %v119 = vld [vmem:[%s0 + $0x300] sm:$0xff]
  %v120 = vld [vmem:[%s0 + $0x308] sm:$0xff]
  %v121 = vld [vmem:[%s0 + $0x310] sm:$0xff]
  %v122 = vld [vmem:[%s0 + $0x318] sm:$0xff]
  %v123 = vld [vmem:[%s0 + $0x320] sm:$0xff]
  %v124 = vld [vmem:[%s0 + $0x328] sm:$0xff]
  %v125 = vld [vmem:[%s0 + $0x330] sm:$0xff]
  %v126 = vld [vmem:[%s0 + $0x338] sm:$0xff]
  %v127 = vld [vmem:[%s0 + $0x340] sm:$0xff]
  %v128 = vld [vmem:[%s0 + $0x348] sm:$0xff]
  %v129 = vld [vmem:[%s0 + $0x350] sm:$0xff]
  %v130 = vld [vmem:[%s0 + $0x358] sm:$0xff]
  %v131 = vld [vmem:[%s0 + $0x360] sm:$0xff]
  %v132 = vld [vmem:[%s0 + $0x368] sm:$0xff]
  %v133 = vld [vmem:[%s0 + $0x370] sm:$0xff]
  %v134 = vld [vmem:[%s0 + $0x378] sm:$0xff]
  %v135 = vld [vmem:[%s0 + $0x380] sm:$0xff]
  %v136 = vld [vmem:[%s0 + $0x388] sm:$0xff]
  %v137 = vld [vmem:[%s0 + $0x390] sm:$0xff]
  %v138 = vld [vmem:[%s0 + $0x398] sm:$0xff]
  %v139 = vld [vmem:[%s0 + $0x3a0] sm:$0xff]
  %v140 = vld [vmem:[%s0 + $0x3a8] sm:$0xff]
  %v141 = vld [vmem:[%s0 + $0x3b0] sm:$0xff]
  %v142 = vld [vmem:[%s0 + $0x3b8] sm:$0xff]
  %v143 = vld [vmem:[%s0 + $0x3c0] sm:$0xff]
  %v144 = vld [vmem:[%s0 + $0x3c8] sm:$0xff]
  %v145 = vld [vmem:[%s0 + $0x3d0] sm:$0xff]
  %v146 = vld [vmem:[%s0 + $0x3d8] sm:$0xff]
  %v147 = vld [vmem:[%s0 + $0x3e0] sm:$0xff]
  %v148 = vld [vmem:[%s0 + $0x3e8] sm:$0xff]
  %v149 = vld [vmem:[%s0 + $0x3f0] sm:$0xff]
  %v150 = vld [vmem:[%s0 + $0x3f8] sm:$0xff]
  %v151 = vld [vmem:[%s1] sm:$0xff]
  %v152 = vld [vmem:[%s1 + $0x8] sm:$0xff]
  %v153 = vld [vmem:[%s1 + $0x10] sm:$0xff]
  %v154 = vld [vmem:[%s1 + $0x18] sm:$0x7]
  %vm155 = vcmask 220160
  %v157 = vsel %vm155, %v23, 0
  %v160 = vsel %vm155, %v24, 0
  %v163 = vsel %vm155, %v25, 0
  %v166 = vsel %vm155, %v26, 0
  %v169 = vsel %vm155, %v27, 0
  %v172 = vsel %vm155, %v28, 0
  %v175 = vsel %vm155, %v29, 0
  %v178 = vsel %vm155, %v30, 0
  %v181 = vsel %vm155, %v31, 0
  %v184 = vsel %vm155, %v32, 0
  %v187 = vsel %vm155, %v33, 0
  %v190 = vsel %vm155, %v34, 0
  %v193 = vsel %vm155, %v35, 0
  %v196 = vsel %vm155, %v36, 0
  %v199 = vsel %vm155, %v37, 0
  %v202 = vsel %vm155, %v38, 0
  %v205 = vsel %vm155, %v39, 0
  %v208 = vsel %vm155, %v40, 0
  %v211 = vsel %vm155, %v41, 0
  %v214 = vsel %vm155, %v42, 0
  %v217 = vsel %vm155, %v43, 0
  %v220 = vsel %vm155, %v44, 0
  %v223 = vsel %vm155, %v45, 0
  %v226 = vsel %vm155, %v46, 0
  %v229 = vsel %vm155, %v47, 0
  %v232 = vsel %vm155, %v48, 0
  %v235 = vsel %vm155, %v49, 0
  %v238 = vsel %vm155, %v50, 0
  %v241 = vsel %vm155, %v51, 0
  %v244 = vsel %vm155, %v52, 0
  %v247 = vsel %vm155, %v53, 0
  %v250 = vsel %vm155, %v54, 0
  %v253 = vsel %vm155, %v55, 0
  %v256 = vsel %vm155, %v56, 0
  %v259 = vsel %vm155, %v57, 0
  %v262 = vsel %vm155, %v58, 0
  %v265 = vsel %vm155, %v59, 0
  %v268 = vsel %vm155, %v60, 0
  %v271 = vsel %vm155, %v61, 0
  %v274 = vsel %vm155, %v62, 0
  %v277 = vsel %vm155, %v63, 0
  %v280 = vsel %vm155, %v64, 0
  %v283 = vsel %vm155, %v65, 0
  %v286 = vsel %vm155, %v66, 0
  %v289 = vsel %vm155, %v67, 0
  %v292 = vsel %vm155, %v68, 0
  %v295 = vsel %vm155, %v69, 0
  %v298 = vsel %vm155, %v70, 0
  %v301 = vsel %vm155, %v71, 0
  %v304 = vsel %vm155, %v72, 0
  %v307 = vsel %vm155, %v73, 0
  %v310 = vsel %vm155, %v74, 0
  %v313 = vsel %vm155, %v75, 0
  %v316 = vsel %vm155, %v76, 0
  %v319 = vsel %vm155, %v77, 0
  %v322 = vsel %vm155, %v78, 0
  %v325 = vsel %vm155, %v79, 0
  %v328 = vsel %vm155, %v80, 0
  %v331 = vsel %vm155, %v81, 0
  %v334 = vsel %vm155, %v82, 0
  %v337 = vsel %vm155, %v83, 0
  %v340 = vsel %vm155, %v84, 0
  %v343 = vsel %vm155, %v85, 0
  %v346 = vsel %vm155, %v86, 0
  %v349 = vsel %vm155, %v87, 0
  %v352 = vsel %vm155, %v88, 0
  %v355 = vsel %vm155, %v89, 0
  %v358 = vsel %vm155, %v90, 0
  %v361 = vsel %vm155, %v91, 0
  %v364 = vsel %vm155, %v92, 0
  %v367 = vsel %vm155, %v93, 0
  %v370 = vsel %vm155, %v94, 0
  %v373 = vsel %vm155, %v95, 0
  %v376 = vsel %vm155, %v96, 0
  %v379 = vsel %vm155, %v97, 0
  %v382 = vsel %vm155, %v98, 0
  %v385 = vsel %vm155, %v99, 0
  %v388 = vsel %vm155, %v100, 0
  %v391 = vsel %vm155, %v101, 0
  %v394 = vsel %vm155, %v102, 0
  %v397 = vsel %vm155, %v103, 0
  %v400 = vsel %vm155, %v104, 0
  %v403 = vsel %vm155, %v105, 0
  %v406 = vsel %vm155, %v106, 0
  %v409 = vsel %vm155, %v107, 0
  %v412 = vsel %vm155, %v108, 0
  %v415 = vsel %vm155, %v109, 0
  %v418 = vsel %vm155, %v110, 0
  %v421 = vsel %vm155, %v111, 0
  %v424 = vsel %vm155, %v112, 0
  %v427 = vsel %vm155, %v113, 0
  %v430 = vsel %vm155, %v114, 0
  %v433 = vsel %vm155, %v115, 0
  %v436 = vsel %vm155, %v116, 0
  %v439 = vsel %vm155, %v117, 0
  %v442 = vsel %vm155, %v118, 0
  %v445 = vsel %vm155, %v119, 0
  %v448 = vsel %vm155, %v120, 0
  %v451 = vsel %vm155, %v121, 0
  %v454 = vsel %vm155, %v122, 0
  %v457 = vsel %vm155, %v123, 0
  %v460 = vsel %vm155, %v124, 0
  %v463 = vsel %vm155, %v125, 0
  %v466 = vsel %vm155, %v126, 0
  %v469 = vsel %vm155, %v127, 0
  %v472 = vsel %vm155, %v128, 0
  %v475 = vsel %vm155, %v129, 0
  %v478 = vsel %vm155, %v130, 0
  %v481 = vsel %vm155, %v131, 0
  %v484 = vsel %vm155, %v132, 0
  %v487 = vsel %vm155, %v133, 0
  %v490 = vsel %vm155, %v134, 0
  %v493 = vsel %vm155, %v135, 0
  %v496 = vsel %vm155, %v136, 0
  %v499 = vsel %vm155, %v137, 0
  %v502 = vsel %vm155, %v138, 0
  %v505 = vsel %vm155, %v139, 0
  %v508 = vsel %vm155, %v140, 0
  %v511 = vsel %vm155, %v141, 0
  %v514 = vsel %vm155, %v142, 0
  %v517 = vsel %vm155, %v143, 0
  %v520 = vsel %vm155, %v144, 0
  %v523 = vsel %vm155, %v145, 0
  %v526 = vsel %vm155, %v146, 0
  %v529 = vsel %vm155, %v147, 0
  %v532 = vsel %vm155, %v148, 0
  %v535 = vsel %vm155, %v149, 0
  %v538 = vsel %vm155, %v150, 0
  %vm540 = vcmask 1042432
  %v542 = vsel %vm540, %v154, 0
  %544 = vmatprep.subr.mxu0 0.0
  %545 = vmatpush1.msra.mxu0 0.0
  %546 = vmatprep.subr.mxu0 0.0
  %547 = vmatpush1.msra.mxu0 0.0
  %548 = vmatprep.subr.mxu0 0.0
  %549 = vmatpush1.msra.mxu0 0.0
  %550 = vmatprep.subr.mxu0 0.0
  %551 = vmatpush1.msra.mxu0 0.0
  %552 = vmatprep.subr.mxu0 0.0
  %553 = vmatpush1.msra.mxu0 0.0
  %554 = vmatprep.subr.mxu0 0.0
  %555 = vmatpush1.msra.mxu0 0.0
  %556 = vmatprep.subr.mxu0 0.0
  %557 = vmatpush1.msra.mxu0 0.0
  %558 = vmatprep.subr.mxu0 0.0
  %559 = vmatpush1.msra.mxu0 0.0
  %560 = vmatprep.subr.mxu0 0.0
  %561 = vmatpush1.msra.mxu0 0.0
  %562 = vmatprep.subr.mxu0 0.0
  %563 = vmatpush1.msra.mxu0 0.0
  %564 = vmatprep.subr.mxu0 0.0
  %565 = vmatpush1.msra.mxu0 0.0
  %566 = vmatprep.subr.mxu0 0.0
  %567 = vmatpush1.msra.mxu0 0.0
  %568 = vmatprep.subr.mxu0 0.0
  %569 = vmatpush1.msra.mxu0 %v542
  %570 = vmatprep.subr.mxu0 0.0
  %571 = vmatpush1.msra.mxu0 %v153
  %572 = vmatprep.subr.mxu0 0.0
  %573 = vmatpush1.msra.mxu0 %v152
  %574 = vmatprep.subr.mxu0 0.0
  %575 = vmatpush1.msra.mxu0 %v151
  %576 = vmatprep.subr.mxu0 0.0
  %577 = vmatpush2.msra.mxu0 0.0
  %578 = vmatprep.subr.mxu0 0.0
  %579 = vmatpush2.msra.mxu0 0.0
  %580 = vmatprep.subr.mxu0 0.0
  %581 = vmatpush2.msra.mxu0 0.0
  %582 = vmatprep.subr.mxu0 0.0
  %583 = vmatpush2.msra.mxu0 0.0
  %584 = vmatprep.subr.mxu0 0.0
  %585 = vmatpush2.msra.mxu0 0.0
  %586 = vmatprep.subr.mxu0 0.0
  %587 = vmatpush2.msra.mxu0 0.0
  %588 = vmatprep.subr.mxu0 0.0
  %589 = vmatpush2.msra.mxu0 0.0
  %590 = vmatprep.subr.mxu0 0.0
  %591 = vmatpush2.msra.mxu0 0.0
  %592 = vmatprep.subr.mxu0 0.0
  %593 = vmatpush2.msra.mxu0 0.0
  %594 = vmatprep.subr.mxu0 0.0
  %595 = vmatpush2.msra.mxu0 0.0
  %596 = vmatprep.subr.mxu0 0.0
  %597 = vmatpush2.msra.mxu0 0.0
  %598 = vmatprep.subr.mxu0 0.0
  %599 = vmatpush2.msra.mxu0 0.0
  %600 = vmatprep.subr.mxu0 0.0
  %601 = vmatpush2.msra.mxu0 0.0
  %602 = vmatprep.subr.mxu0 0.0
  %603 = vmatpush2.msra.mxu0 0.0
  %604 = vmatprep.subr.mxu0 0.0
  %605 = vmatpush2.msra.mxu0 0.0
  %606 = vmatprep.subr.mxu0 0.0
  %607 = vmatpush2.msra.mxu0 0.0
  %608 = vmatprep.mubr.f32.mxu0 0.0
  %609 = vmatmul.mubr.f32.gmra.mxu0 %v157
  %v610 = vpop.f32.mrf.mxu0
  %v611 = vadd.f32 0.0, %v610
  %v612 = vpop.f32.mrf.mxu0
  %613 = vmatprep.mubr.f32.mxu0 0.0
  %614 = vmatmul.mubr.f32.gmra.mxu0 %v160
  %v615 = vpop.f32.mrf.mxu0
  %v616 = vadd.f32 0.0, %v615
  %v617 = vpop.f32.mrf.mxu0
  %618 = vmatprep.mubr.f32.mxu0 0.0
  %619 = vmatmul.mubr.f32.gmra.mxu0 %v163
  %v620 = vpop.f32.mrf.mxu0
  %v621 = vadd.f32 0.0, %v620
  %v622 = vpop.f32.mrf.mxu0
  %623 = vmatprep.mubr.f32.mxu0 0.0
  %624 = vmatmul.mubr.f32.gmra.mxu0 %v166
  %v625 = vpop.f32.mrf.mxu0
  %v626 = vadd.f32 0.0, %v625
  %v627 = vpop.f32.mrf.mxu0
  %628 = vmatprep.mubr.f32.mxu0 0.0
  %629 = vmatmul.mubr.f32.gmra.mxu0 %v169
  %v630 = vpop.f32.mrf.mxu0
  %v631 = vadd.f32 0.0, %v630
  %v632 = vpop.f32.mrf.mxu0
  %633 = vmatprep.mubr.f32.mxu0 0.0
  %634 = vmatmul.mubr.f32.gmra.mxu0 %v172
  %v635 = vpop.f32.mrf.mxu0
  %v636 = vadd.f32 0.0, %v635
  %v637 = vpop.f32.mrf.mxu0
  %638 = vmatprep.mubr.f32.mxu0 0.0
  %639 = vmatmul.mubr.f32.gmra.mxu0 %v175
  %v640 = vpop.f32.mrf.mxu0
  %v641 = vadd.f32 0.0, %v640
  %v642 = vpop.f32.mrf.mxu0
  %643 = vmatprep.mubr.f32.mxu0 0.0
  %644 = vmatmul.mubr.f32.gmra.mxu0 %v178
  %v645 = vpop.f32.mrf.mxu0
  %v646 = vadd.f32 0.0, %v645
  %v647 = vpop.f32.mrf.mxu0
  %648 = vmatprep.mubr.f32.mxu0 0.0
  %649 = vmatmul.mubr.f32.gmra.mxu0 %v181
  %v650 = vpop.f32.mrf.mxu0
  %v651 = vadd.f32 0.0, %v650
  %v652 = vpop.f32.mrf.mxu0
  %653 = vmatprep.mubr.f32.mxu0 0.0
  %654 = vmatmul.mubr.f32.gmra.mxu0 %v184
  %v655 = vpop.f32.mrf.mxu0
  %v656 = vadd.f32 0.0, %v655
  %v657 = vpop.f32.mrf.mxu0
  %658 = vmatprep.mubr.f32.mxu0 0.0
  %659 = vmatmul.mubr.f32.gmra.mxu0 %v187
  %v660 = vpop.f32.mrf.mxu0
  %v661 = vadd.f32 0.0, %v660
  %v662 = vpop.f32.mrf.mxu0
  %663 = vmatprep.mubr.f32.mxu0 0.0
  %664 = vmatmul.mubr.f32.gmra.mxu0 %v190
  %v665 = vpop.f32.mrf.mxu0
  %v666 = vadd.f32 0.0, %v665
  %v667 = vpop.f32.mrf.mxu0
  %668 = vmatprep.mubr.f32.mxu0 0.0
  %669 = vmatmul.mubr.f32.gmra.mxu0 %v193
  %v670 = vpop.f32.mrf.mxu0
  %v671 = vadd.f32 0.0, %v670
  %v672 = vpop.f32.mrf.mxu0
  %673 = vmatprep.mubr.f32.mxu0 0.0
  %674 = vmatmul.mubr.f32.gmra.mxu0 %v196
  %v675 = vpop.f32.mrf.mxu0
  %v676 = vadd.f32 0.0, %v675
  %v677 = vpop.f32.mrf.mxu0
  %678 = vmatprep.mubr.f32.mxu0 0.0
  %679 = vmatmul.mubr.f32.gmra.mxu0 %v199
  %v680 = vpop.f32.mrf.mxu0
  %v681 = vadd.f32 0.0, %v680
  %v682 = vpop.f32.mrf.mxu0
  %683 = vmatprep.mubr.f32.mxu0 0.0
  %684 = vmatmul.mubr.f32.gmra.mxu0 %v202
  %v685 = vpop.f32.mrf.mxu0
  %v686 = vadd.f32 0.0, %v685
  %v687 = vpop.f32.mrf.mxu0
  %688 = vmatprep.mubr.f32.mxu0 0.0
  %689 = vmatmul.mubr.f32.gmra.mxu0 %v205
  %v690 = vpop.f32.mrf.mxu0
  %v691 = vadd.f32 0.0, %v690
  %v692 = vpop.f32.mrf.mxu0
  %693 = vmatprep.mubr.f32.mxu0 0.0
  %694 = vmatmul.mubr.f32.gmra.mxu0 %v208
  %v695 = vpop.f32.mrf.mxu0
  %v696 = vadd.f32 0.0, %v695
  %v697 = vpop.f32.mrf.mxu0
  %698 = vmatprep.mubr.f32.mxu0 0.0
  %699 = vmatmul.mubr.f32.gmra.mxu0 %v211
  %v700 = vpop.f32.mrf.mxu0
  %v701 = vadd.f32 0.0, %v700
  %v702 = vpop.f32.mrf.mxu0
  %703 = vmatprep.mubr.f32.mxu0 0.0
  %704 = vmatmul.mubr.f32.gmra.mxu0 %v214
  %v705 = vpop.f32.mrf.mxu0
  %v706 = vadd.f32 0.0, %v705
  %v707 = vpop.f32.mrf.mxu0
  %708 = vmatprep.mubr.f32.mxu0 0.0
  %709 = vmatmul.mubr.f32.gmra.mxu0 %v217
  %v710 = vpop.f32.mrf.mxu0
  %v711 = vadd.f32 0.0, %v710
  %v712 = vpop.f32.mrf.mxu0
  %713 = vmatprep.mubr.f32.mxu0 0.0
  %714 = vmatmul.mubr.f32.gmra.mxu0 %v220
  %v715 = vpop.f32.mrf.mxu0
  %v716 = vadd.f32 0.0, %v715
  %v717 = vpop.f32.mrf.mxu0
  %718 = vmatprep.mubr.f32.mxu0 0.0
  %719 = vmatmul.mubr.f32.gmra.mxu0 %v223
  %v720 = vpop.f32.mrf.mxu0
  %v721 = vadd.f32 0.0, %v720
  %v722 = vpop.f32.mrf.mxu0
  %723 = vmatprep.mubr.f32.mxu0 0.0
  %724 = vmatmul.mubr.f32.gmra.mxu0 %v226
  %v725 = vpop.f32.mrf.mxu0
  %v726 = vadd.f32 0.0, %v725
  %v727 = vpop.f32.mrf.mxu0
  %728 = vmatprep.mubr.f32.mxu0 0.0
  %729 = vmatmul.mubr.f32.gmra.mxu0 %v229
  %v730 = vpop.f32.mrf.mxu0
  %v731 = vadd.f32 0.0, %v730
  %v732 = vpop.f32.mrf.mxu0
  %733 = vmatprep.mubr.f32.mxu0 0.0
  %734 = vmatmul.mubr.f32.gmra.mxu0 %v232
  %v735 = vpop.f32.mrf.mxu0
  %v736 = vadd.f32 0.0, %v735
  %v737 = vpop.f32.mrf.mxu0
  %738 = vmatprep.mubr.f32.mxu0 0.0
  %739 = vmatmul.mubr.f32.gmra.mxu0 %v235
  %v740 = vpop.f32.mrf.mxu0
  %v741 = vadd.f32 0.0, %v740
  %v742 = vpop.f32.mrf.mxu0
  %743 = vmatprep.mubr.f32.mxu0 0.0
  %744 = vmatmul.mubr.f32.gmra.mxu0 %v238
  %v745 = vpop.f32.mrf.mxu0
  %v746 = vadd.f32 0.0, %v745
  %v747 = vpop.f32.mrf.mxu0
  %748 = vmatprep.mubr.f32.mxu0 0.0
  %749 = vmatmul.mubr.f32.gmra.mxu0 %v241
  %v750 = vpop.f32.mrf.mxu0
  %v751 = vadd.f32 0.0, %v750
  %v752 = vpop.f32.mrf.mxu0
  %753 = vmatprep.mubr.f32.mxu0 0.0
  %754 = vmatmul.mubr.f32.gmra.mxu0 %v244
  %v755 = vpop.f32.mrf.mxu0
  %v756 = vadd.f32 0.0, %v755
  %v757 = vpop.f32.mrf.mxu0
  %758 = vmatprep.mubr.f32.mxu0 0.0
  %759 = vmatmul.mubr.f32.gmra.mxu0 %v247
  %v760 = vpop.f32.mrf.mxu0
  %v761 = vadd.f32 0.0, %v760
  %v762 = vpop.f32.mrf.mxu0
  %763 = vmatprep.mubr.f32.mxu0 0.0
  %764 = vmatmul.mubr.f32.gmra.mxu0 %v250
  %v765 = vpop.f32.mrf.mxu0
  %v766 = vadd.f32 0.0, %v765
  %v767 = vpop.f32.mrf.mxu0
  %768 = vmatprep.mubr.f32.mxu0 0.0
  %769 = vmatmul.mubr.f32.gmra.mxu0 %v253
  %v770 = vpop.f32.mrf.mxu0
  %v771 = vadd.f32 0.0, %v770
  %v772 = vpop.f32.mrf.mxu0
  %773 = vmatprep.mubr.f32.mxu0 0.0
  %774 = vmatmul.mubr.f32.gmra.mxu0 %v256
  %v775 = vpop.f32.mrf.mxu0
  %v776 = vadd.f32 0.0, %v775
  %v777 = vpop.f32.mrf.mxu0
  %778 = vmatprep.mubr.f32.mxu0 0.0
  %779 = vmatmul.mubr.f32.gmra.mxu0 %v259
  %v780 = vpop.f32.mrf.mxu0
  %v781 = vadd.f32 0.0, %v780
  %v782 = vpop.f32.mrf.mxu0
  %783 = vmatprep.mubr.f32.mxu0 0.0
  %784 = vmatmul.mubr.f32.gmra.mxu0 %v262
  %v785 = vpop.f32.mrf.mxu0
  %v786 = vadd.f32 0.0, %v785
  %v787 = vpop.f32.mrf.mxu0
  %788 = vmatprep.mubr.f32.mxu0 0.0
  %789 = vmatmul.mubr.f32.gmra.mxu0 %v265
  %v790 = vpop.f32.mrf.mxu0
  %v791 = vadd.f32 0.0, %v790
  %v792 = vpop.f32.mrf.mxu0
  %793 = vmatprep.mubr.f32.mxu0 0.0
  %794 = vmatmul.mubr.f32.gmra.mxu0 %v268
  %v795 = vpop.f32.mrf.mxu0
  %v796 = vadd.f32 0.0, %v795
  %v797 = vpop.f32.mrf.mxu0
  %798 = vmatprep.mubr.f32.mxu0 0.0
  %799 = vmatmul.mubr.f32.gmra.mxu0 %v271
  %v800 = vpop.f32.mrf.mxu0
  %v801 = vadd.f32 0.0, %v800
  %v802 = vpop.f32.mrf.mxu0
  %803 = vmatprep.mubr.f32.mxu0 0.0
  %804 = vmatmul.mubr.f32.gmra.mxu0 %v274
  %v805 = vpop.f32.mrf.mxu0
  %v806 = vadd.f32 0.0, %v805
  %v807 = vpop.f32.mrf.mxu0
  %808 = vmatprep.mubr.f32.mxu0 0.0
  %809 = vmatmul.mubr.f32.gmra.mxu0 %v277
  %v810 = vpop.f32.mrf.mxu0
  %v811 = vadd.f32 0.0, %v810
  %v812 = vpop.f32.mrf.mxu0
  %813 = vmatprep.mubr.f32.mxu0 0.0
  %814 = vmatmul.mubr.f32.gmra.mxu0 %v280
  %v815 = vpop.f32.mrf.mxu0
  %v816 = vadd.f32 0.0, %v815
  %v817 = vpop.f32.mrf.mxu0
  %818 = vmatprep.mubr.f32.mxu0 0.0
  %819 = vmatmul.mubr.f32.gmra.mxu0 %v283
  %v820 = vpop.f32.mrf.mxu0
  %v821 = vadd.f32 0.0, %v820
  %v822 = vpop.f32.mrf.mxu0
  %823 = vmatprep.mubr.f32.mxu0 0.0
  %824 = vmatmul.mubr.f32.gmra.mxu0 %v286
  %v825 = vpop.f32.mrf.mxu0
  %v826 = vadd.f32 0.0, %v825
  %v827 = vpop.f32.mrf.mxu0
  %828 = vmatprep.mubr.f32.mxu0 0.0
  %829 = vmatmul.mubr.f32.gmra.mxu0 %v289
  %v830 = vpop.f32.mrf.mxu0
  %v831 = vadd.f32 0.0, %v830
  %v832 = vpop.f32.mrf.mxu0
  %833 = vmatprep.mubr.f32.mxu0 0.0
  %834 = vmatmul.mubr.f32.gmra.mxu0 %v292
  %v835 = vpop.f32.mrf.mxu0
  %v836 = vadd.f32 0.0, %v835
  %v837 = vpop.f32.mrf.mxu0
  %838 = vmatprep.mubr.f32.mxu0 0.0
  %839 = vmatmul.mubr.f32.gmra.mxu0 %v295
  %v840 = vpop.f32.mrf.mxu0
  %v841 = vadd.f32 0.0, %v840
  %v842 = vpop.f32.mrf.mxu0
  %843 = vmatprep.mubr.f32.mxu0 0.0
  %844 = vmatmul.mubr.f32.gmra.mxu0 %v298
  %v845 = vpop.f32.mrf.mxu0
  %v846 = vadd.f32 0.0, %v845
  %v847 = vpop.f32.mrf.mxu0
  %848 = vmatprep.mubr.f32.mxu0 0.0
  %849 = vmatmul.mubr.f32.gmra.mxu0 %v301
  %v850 = vpop.f32.mrf.mxu0
  %v851 = vadd.f32 0.0, %v850
  %v852 = vpop.f32.mrf.mxu0
  %853 = vmatprep.mubr.f32.mxu0 0.0
  %854 = vmatmul.mubr.f32.gmra.mxu0 %v304
  %v855 = vpop.f32.mrf.mxu0
  %v856 = vadd.f32 0.0, %v855
  %v857 = vpop.f32.mrf.mxu0
  %858 = vmatprep.mubr.f32.mxu0 0.0
  %859 = vmatmul.mubr.f32.gmra.mxu0 %v307
  %v860 = vpop.f32.mrf.mxu0
  %v861 = vadd.f32 0.0, %v860
  %v862 = vpop.f32.mrf.mxu0
  %863 = vmatprep.mubr.f32.mxu0 0.0
  %864 = vmatmul.mubr.f32.gmra.mxu0 %v310
  %v865 = vpop.f32.mrf.mxu0
  %v866 = vadd.f32 0.0, %v865
  %v867 = vpop.f32.mrf.mxu0
  %868 = vmatprep.mubr.f32.mxu0 0.0
  %869 = vmatmul.mubr.f32.gmra.mxu0 %v313
  %v870 = vpop.f32.mrf.mxu0
  %v871 = vadd.f32 0.0, %v870
  %v872 = vpop.f32.mrf.mxu0
  %873 = vmatprep.mubr.f32.mxu0 0.0
  %874 = vmatmul.mubr.f32.gmra.mxu0 %v316
  %v875 = vpop.f32.mrf.mxu0
  %v876 = vadd.f32 0.0, %v875
  %v877 = vpop.f32.mrf.mxu0
  %878 = vmatprep.mubr.f32.mxu0 0.0
  %879 = vmatmul.mubr.f32.gmra.mxu0 %v319
  %v880 = vpop.f32.mrf.mxu0
  %v881 = vadd.f32 0.0, %v880
  %v882 = vpop.f32.mrf.mxu0
  %883 = vmatprep.mubr.f32.mxu0 0.0
  %884 = vmatmul.mubr.f32.gmra.mxu0 %v322
  %v885 = vpop.f32.mrf.mxu0
  %v886 = vadd.f32 0.0, %v885
  %v887 = vpop.f32.mrf.mxu0
  %888 = vmatprep.mubr.f32.mxu0 0.0
  %889 = vmatmul.mubr.f32.gmra.mxu0 %v325
  %v890 = vpop.f32.mrf.mxu0
  %v891 = vadd.f32 0.0, %v890
  %v892 = vpop.f32.mrf.mxu0
  %893 = vmatprep.mubr.f32.mxu0 0.0
  %894 = vmatmul.mubr.f32.gmra.mxu0 %v328
  %v895 = vpop.f32.mrf.mxu0
  %v896 = vadd.f32 0.0, %v895
  %v897 = vpop.f32.mrf.mxu0
  %898 = vmatprep.mubr.f32.mxu0 0.0
  %899 = vmatmul.mubr.f32.gmra.mxu0 %v331
  %v900 = vpop.f32.mrf.mxu0
  %v901 = vadd.f32 0.0, %v900
  %v902 = vpop.f32.mrf.mxu0
  %903 = vmatprep.mubr.f32.mxu0 0.0
  %904 = vmatmul.mubr.f32.gmra.mxu0 %v334
  %v905 = vpop.f32.mrf.mxu0
  %v906 = vadd.f32 0.0, %v905
  %v907 = vpop.f32.mrf.mxu0
  %908 = vmatprep.mubr.f32.mxu0 0.0
  %909 = vmatmul.mubr.f32.gmra.mxu0 %v337
  %v910 = vpop.f32.mrf.mxu0
  %v911 = vadd.f32 0.0, %v910
  %v912 = vpop.f32.mrf.mxu0
  %913 = vmatprep.mubr.f32.mxu0 0.0
  %914 = vmatmul.mubr.f32.gmra.mxu0 %v340
  %v915 = vpop.f32.mrf.mxu0
  %v916 = vadd.f32 0.0, %v915
  %v917 = vpop.f32.mrf.mxu0
  %918 = vmatprep.mubr.f32.mxu0 0.0
  %919 = vmatmul.mubr.f32.gmra.mxu0 %v343
  %v920 = vpop.f32.mrf.mxu0
  %v921 = vadd.f32 0.0, %v920
  %v922 = vpop.f32.mrf.mxu0
  %923 = vmatprep.mubr.f32.mxu0 0.0
  %924 = vmatmul.mubr.f32.gmra.mxu0 %v346
  %v925 = vpop.f32.mrf.mxu0
  %v926 = vadd.f32 0.0, %v925
  %v927 = vpop.f32.mrf.mxu0
  %928 = vmatprep.mubr.f32.mxu0 0.0
  %929 = vmatmul.mubr.f32.gmra.mxu0 %v349
  %v930 = vpop.f32.mrf.mxu0
  %v931 = vadd.f32 0.0, %v930
  %v932 = vpop.f32.mrf.mxu0
  %933 = vmatprep.mubr.f32.mxu0 0.0
  %934 = vmatmul.mubr.f32.gmra.mxu0 %v352
  %v935 = vpop.f32.mrf.mxu0
  %v936 = vadd.f32 0.0, %v935
  %v937 = vpop.f32.mrf.mxu0
  %938 = vmatprep.mubr.f32.mxu0 0.0
  %939 = vmatmul.mubr.f32.gmra.mxu0 %v355
  %v940 = vpop.f32.mrf.mxu0
  %v941 = vadd.f32 0.0, %v940
  %v942 = vpop.f32.mrf.mxu0
  %943 = vmatprep.mubr.f32.mxu0 0.0
  %944 = vmatmul.mubr.f32.gmra.mxu0 %v358
  %v945 = vpop.f32.mrf.mxu0
  %v946 = vadd.f32 0.0, %v945
  %v947 = vpop.f32.mrf.mxu0
  %948 = vmatprep.mubr.f32.mxu0 0.0
  %949 = vmatmul.mubr.f32.gmra.mxu0 %v361
  %v950 = vpop.f32.mrf.mxu0
  %v951 = vadd.f32 0.0, %v950
  %v952 = vpop.f32.mrf.mxu0
  %953 = vmatprep.mubr.f32.mxu0 0.0
  %954 = vmatmul.mubr.f32.gmra.mxu0 %v364
  %v955 = vpop.f32.mrf.mxu0
  %v956 = vadd.f32 0.0, %v955
  %v957 = vpop.f32.mrf.mxu0
  %958 = vmatprep.mubr.f32.mxu0 0.0
  %959 = vmatmul.mubr.f32.gmra.mxu0 %v367
  %v960 = vpop.f32.mrf.mxu0
  %v961 = vadd.f32 0.0, %v960
  %v962 = vpop.f32.mrf.mxu0
  %963 = vmatprep.mubr.f32.mxu0 0.0
  %964 = vmatmul.mubr.f32.gmra.mxu0 %v370
  %v965 = vpop.f32.mrf.mxu0
  %v966 = vadd.f32 0.0, %v965
  %v967 = vpop.f32.mrf.mxu0
  %968 = vmatprep.mubr.f32.mxu0 0.0
  %969 = vmatmul.mubr.f32.gmra.mxu0 %v373
  %v970 = vpop.f32.mrf.mxu0
  %v971 = vadd.f32 0.0, %v970
  %v972 = vpop.f32.mrf.mxu0
  %973 = vmatprep.mubr.f32.mxu0 0.0
  %974 = vmatmul.mubr.f32.gmra.mxu0 %v376
  %v975 = vpop.f32.mrf.mxu0
  %v976 = vadd.f32 0.0, %v975
  %v977 = vpop.f32.mrf.mxu0
  %978 = vmatprep.mubr.f32.mxu0 0.0
  %979 = vmatmul.mubr.f32.gmra.mxu0 %v379
  %v980 = vpop.f32.mrf.mxu0
  %v981 = vadd.f32 0.0, %v980
  %v982 = vpop.f32.mrf.mxu0
  %983 = vmatprep.mubr.f32.mxu0 0.0
  %984 = vmatmul.mubr.f32.gmra.mxu0 %v382
  %v985 = vpop.f32.mrf.mxu0
  %v986 = vadd.f32 0.0, %v985
  %v987 = vpop.f32.mrf.mxu0
  %988 = vmatprep.mubr.f32.mxu0 0.0
  %989 = vmatmul.mubr.f32.gmra.mxu0 %v385
  %v990 = vpop.f32.mrf.mxu0
  %v991 = vadd.f32 0.0, %v990
  %v992 = vpop.f32.mrf.mxu0
  %993 = vmatprep.mubr.f32.mxu0 0.0
  %994 = vmatmul.mubr.f32.gmra.mxu0 %v388
  %v995 = vpop.f32.mrf.mxu0
  %v996 = vadd.f32 0.0, %v995
  %v997 = vpop.f32.mrf.mxu0
  %998 = vmatprep.mubr.f32.mxu0 0.0
  %999 = vmatmul.mubr.f32.gmra.mxu0 %v391
  %v1000 = vpop.f32.mrf.mxu0
  %v1001 = vadd.f32 0.0, %v1000
  %v1002 = vpop.f32.mrf.mxu0
  %1003 = vmatprep.mubr.f32.mxu0 0.0
  %1004 = vmatmul.mubr.f32.gmra.mxu0 %v394
  %v1005 = vpop.f32.mrf.mxu0
  %v1006 = vadd.f32 0.0, %v1005
  %v1007 = vpop.f32.mrf.mxu0
  %1008 = vmatprep.mubr.f32.mxu0 0.0
  %1009 = vmatmul.mubr.f32.gmra.mxu0 %v397
  %v1010 = vpop.f32.mrf.mxu0
  %v1011 = vadd.f32 0.0, %v1010
  %v1012 = vpop.f32.mrf.mxu0
  %1013 = vmatprep.mubr.f32.mxu0 0.0
  %1014 = vmatmul.mubr.f32.gmra.mxu0 %v400
  %v1015 = vpop.f32.mrf.mxu0
  %v1016 = vadd.f32 0.0, %v1015
  %v1017 = vpop.f32.mrf.mxu0
  %1018 = vmatprep.mubr.f32.mxu0 0.0
  %1019 = vmatmul.mubr.f32.gmra.mxu0 %v403
  %v1020 = vpop.f32.mrf.mxu0
  %v1021 = vadd.f32 0.0, %v1020
  %v1022 = vpop.f32.mrf.mxu0
  %1023 = vmatprep.mubr.f32.mxu0 0.0
  %1024 = vmatmul.mubr.f32.gmra.mxu0 %v406
  %v1025 = vpop.f32.mrf.mxu0
  %v1026 = vadd.f32 0.0, %v1025
  %v1027 = vpop.f32.mrf.mxu0
  %1028 = vmatprep.mubr.f32.mxu0 0.0
  %1029 = vmatmul.mubr.f32.gmra.mxu0 %v409
  %v1030 = vpop.f32.mrf.mxu0
  %v1031 = vadd.f32 0.0, %v1030
  %v1032 = vpop.f32.mrf.mxu0
  %1033 = vmatprep.mubr.f32.mxu0 0.0
  %1034 = vmatmul.mubr.f32.gmra.mxu0 %v412
  %v1035 = vpop.f32.mrf.mxu0
  %v1036 = vadd.f32 0.0, %v1035
  %v1037 = vpop.f32.mrf.mxu0
  %1038 = vmatprep.mubr.f32.mxu0 0.0
  %1039 = vmatmul.mubr.f32.gmra.mxu0 %v415
  %v1040 = vpop.f32.mrf.mxu0
  %v1041 = vadd.f32 0.0, %v1040
  %v1042 = vpop.f32.mrf.mxu0
  %1043 = vmatprep.mubr.f32.mxu0 0.0
  %1044 = vmatmul.mubr.f32.gmra.mxu0 %v418
  %v1045 = vpop.f32.mrf.mxu0
  %v1046 = vadd.f32 0.0, %v1045
  %v1047 = vpop.f32.mrf.mxu0
  %1048 = vmatprep.mubr.f32.mxu0 0.0
  %1049 = vmatmul.mubr.f32.gmra.mxu0 %v421
  %v1050 = vpop.f32.mrf.mxu0
  %v1051 = vadd.f32 0.0, %v1050
  %v1052 = vpop.f32.mrf.mxu0
  %1053 = vmatprep.mubr.f32.mxu0 0.0
  %1054 = vmatmul.mubr.f32.gmra.mxu0 %v424
  %v1055 = vpop.f32.mrf.mxu0
  %v1056 = vadd.f32 0.0, %v1055
  %v1057 = vpop.f32.mrf.mxu0
  %1058 = vmatprep.mubr.f32.mxu0 0.0
  %1059 = vmatmul.mubr.f32.gmra.mxu0 %v427
  %v1060 = vpop.f32.mrf.mxu0
  %v1061 = vadd.f32 0.0, %v1060
  %v1062 = vpop.f32.mrf.mxu0
  %1063 = vmatprep.mubr.f32.mxu0 0.0
  %1064 = vmatmul.mubr.f32.gmra.mxu0 %v430
  %v1065 = vpop.f32.mrf.mxu0
  %v1066 = vadd.f32 0.0, %v1065
  %v1067 = vpop.f32.mrf.mxu0
  %1068 = vmatprep.mubr.f32.mxu0 0.0
  %1069 = vmatmul.mubr.f32.gmra.mxu0 %v433
  %v1070 = vpop.f32.mrf.mxu0
  %v1071 = vadd.f32 0.0, %v1070
  %v1072 = vpop.f32.mrf.mxu0
  %1073 = vmatprep.mubr.f32.mxu0 0.0
  %1074 = vmatmul.mubr.f32.gmra.mxu0 %v436
  %v1075 = vpop.f32.mrf.mxu0
  %v1076 = vadd.f32 0.0, %v1075
  %v1077 = vpop.f32.mrf.mxu0
  %1078 = vmatprep.mubr.f32.mxu0 0.0
  %1079 = vmatmul.mubr.f32.gmra.mxu0 %v439
  %v1080 = vpop.f32.mrf.mxu0
  %v1081 = vadd.f32 0.0, %v1080
  %v1082 = vpop.f32.mrf.mxu0
  %1083 = vmatprep.mubr.f32.mxu0 0.0
  %1084 = vmatmul.mubr.f32.gmra.mxu0 %v442
  %v1085 = vpop.f32.mrf.mxu0
  %v1086 = vadd.f32 0.0, %v1085
  %v1087 = vpop.f32.mrf.mxu0
  %1088 = vmatprep.mubr.f32.mxu0 0.0
  %1089 = vmatmul.mubr.f32.gmra.mxu0 %v445
  %v1090 = vpop.f32.mrf.mxu0
  %v1091 = vadd.f32 0.0, %v1090
  %v1092 = vpop.f32.mrf.mxu0
  %1093 = vmatprep.mubr.f32.mxu0 0.0
  %1094 = vmatmul.mubr.f32.gmra.mxu0 %v448
  %v1095 = vpop.f32.mrf.mxu0
  %v1096 = vadd.f32 0.0, %v1095
  %v1097 = vpop.f32.mrf.mxu0
  %1098 = vmatprep.mubr.f32.mxu0 0.0
  %1099 = vmatmul.mubr.f32.gmra.mxu0 %v451
  %v1100 = vpop.f32.mrf.mxu0
  %v1101 = vadd.f32 0.0, %v1100
  %v1102 = vpop.f32.mrf.mxu0
  %1103 = vmatprep.mubr.f32.mxu0 0.0
  %1104 = vmatmul.mubr.f32.gmra.mxu0 %v454
  %v1105 = vpop.f32.mrf.mxu0
  %v1106 = vadd.f32 0.0, %v1105
  %v1107 = vpop.f32.mrf.mxu0
  %1108 = vmatprep.mubr.f32.mxu0 0.0
  %1109 = vmatmul.mubr.f32.gmra.mxu0 %v457
  %v1110 = vpop.f32.mrf.mxu0
  %v1111 = vadd.f32 0.0, %v1110
  %v1112 = vpop.f32.mrf.mxu0
  %1113 = vmatprep.mubr.f32.mxu0 0.0
  %1114 = vmatmul.mubr.f32.gmra.mxu0 %v460
  %v1115 = vpop.f32.mrf.mxu0
  %v1116 = vadd.f32 0.0, %v1115
  %v1117 = vpop.f32.mrf.mxu0
  %1118 = vmatprep.mubr.f32.mxu0 0.0
  %1119 = vmatmul.mubr.f32.gmra.mxu0 %v463
  %v1120 = vpop.f32.mrf.mxu0
  %v1121 = vadd.f32 0.0, %v1120
  %v1122 = vpop.f32.mrf.mxu0
  %1123 = vmatprep.mubr.f32.mxu0 0.0
  %1124 = vmatmul.mubr.f32.gmra.mxu0 %v466
  %v1125 = vpop.f32.mrf.mxu0
  %v1126 = vadd.f32 0.0, %v1125
  %v1127 = vpop.f32.mrf.mxu0
  %1128 = vmatprep.mubr.f32.mxu0 0.0
  %1129 = vmatmul.mubr.f32.gmra.mxu0 %v469
  %v1130 = vpop.f32.mrf.mxu0
  %v1131 = vadd.f32 0.0, %v1130
  %v1132 = vpop.f32.mrf.mxu0
  %1133 = vmatprep.mubr.f32.mxu0 0.0
  %1134 = vmatmul.mubr.f32.gmra.mxu0 %v472
  %v1135 = vpop.f32.mrf.mxu0
  %v1136 = vadd.f32 0.0, %v1135
  %v1137 = vpop.f32.mrf.mxu0
  %1138 = vmatprep.mubr.f32.mxu0 0.0
  %1139 = vmatmul.mubr.f32.gmra.mxu0 %v475
  %v1140 = vpop.f32.mrf.mxu0
  %v1141 = vadd.f32 0.0, %v1140
  %v1142 = vpop.f32.mrf.mxu0
  %1143 = vmatprep.mubr.f32.mxu0 0.0
  %1144 = vmatmul.mubr.f32.gmra.mxu0 %v478
  %v1145 = vpop.f32.mrf.mxu0
  %v1146 = vadd.f32 0.0, %v1145
  %v1147 = vpop.f32.mrf.mxu0
  %1148 = vmatprep.mubr.f32.mxu0 0.0
  %1149 = vmatmul.mubr.f32.gmra.mxu0 %v481
  %v1150 = vpop.f32.mrf.mxu0
  %v1151 = vadd.f32 0.0, %v1150
  %v1152 = vpop.f32.mrf.mxu0
  %1153 = vmatprep.mubr.f32.mxu0 0.0
  %1154 = vmatmul.mubr.f32.gmra.mxu0 %v484
  %v1155 = vpop.f32.mrf.mxu0
  %v1156 = vadd.f32 0.0, %v1155
  %v1157 = vpop.f32.mrf.mxu0
  %1158 = vmatprep.mubr.f32.mxu0 0.0
  %1159 = vmatmul.mubr.f32.gmra.mxu0 %v487
  %v1160 = vpop.f32.mrf.mxu0
  %v1161 = vadd.f32 0.0, %v1160
  %v1162 = vpop.f32.mrf.mxu0
  %1163 = vmatprep.mubr.f32.mxu0 0.0
  %1164 = vmatmul.mubr.f32.gmra.mxu0 %v490
  %v1165 = vpop.f32.mrf.mxu0
  %v1166 = vadd.f32 0.0, %v1165
  %v1167 = vpop.f32.mrf.mxu0
  %1168 = vmatprep.mubr.f32.mxu0 0.0
  %1169 = vmatmul.mubr.f32.gmra.mxu0 %v493
  %v1170 = vpop.f32.mrf.mxu0
  %v1171 = vadd.f32 0.0, %v1170
  %v1172 = vpop.f32.mrf.mxu0
  %1173 = vmatprep.mubr.f32.mxu0 0.0
  %1174 = vmatmul.mubr.f32.gmra.mxu0 %v496
  %v1175 = vpop.f32.mrf.mxu0
  %v1176 = vadd.f32 0.0, %v1175
  %v1177 = vpop.f32.mrf.mxu0
  %1178 = vmatprep.mubr.f32.mxu0 0.0
  %1179 = vmatmul.mubr.f32.gmra.mxu0 %v499
  %v1180 = vpop.f32.mrf.mxu0
  %v1181 = vadd.f32 0.0, %v1180
  %v1182 = vpop.f32.mrf.mxu0
  %1183 = vmatprep.mubr.f32.mxu0 0.0
  %1184 = vmatmul.mubr.f32.gmra.mxu0 %v502
  %v1185 = vpop.f32.mrf.mxu0
  %v1186 = vadd.f32 0.0, %v1185
  %v1187 = vpop.f32.mrf.mxu0
  %1188 = vmatprep.mubr.f32.mxu0 0.0
  %1189 = vmatmul.mubr.f32.gmra.mxu0 %v505
  %v1190 = vpop.f32.mrf.mxu0
  %v1191 = vadd.f32 0.0, %v1190
  %v1192 = vpop.f32.mrf.mxu0
  %1193 = vmatprep.mubr.f32.mxu0 0.0
  %1194 = vmatmul.mubr.f32.gmra.mxu0 %v508
  %v1195 = vpop.f32.mrf.mxu0
  %v1196 = vadd.f32 0.0, %v1195
  %v1197 = vpop.f32.mrf.mxu0
  %1198 = vmatprep.mubr.f32.mxu0 0.0
  %1199 = vmatmul.mubr.f32.gmra.mxu0 %v511
  %v1200 = vpop.f32.mrf.mxu0
  %v1201 = vadd.f32 0.0, %v1200
  %v1202 = vpop.f32.mrf.mxu0
  %1203 = vmatprep.mubr.f32.mxu0 0.0
  %1204 = vmatmul.mubr.f32.gmra.mxu0 %v514
  %v1205 = vpop.f32.mrf.mxu0
  %v1206 = vadd.f32 0.0, %v1205
  %v1207 = vpop.f32.mrf.mxu0
  %1208 = vmatprep.mubr.f32.mxu0 0.0
  %1209 = vmatmul.mubr.f32.gmra.mxu0 %v517
  %v1210 = vpop.f32.mrf.mxu0
  %v1211 = vadd.f32 0.0, %v1210
  %v1212 = vpop.f32.mrf.mxu0
  %1213 = vmatprep.mubr.f32.mxu0 0.0
  %1214 = vmatmul.mubr.f32.gmra.mxu0 %v520
  %v1215 = vpop.f32.mrf.mxu0
  %v1216 = vadd.f32 0.0, %v1215
  %v1217 = vpop.f32.mrf.mxu0
  %1218 = vmatprep.mubr.f32.mxu0 0.0
  %1219 = vmatmul.mubr.f32.gmra.mxu0 %v523
  %v1220 = vpop.f32.mrf.mxu0
  %v1221 = vadd.f32 0.0, %v1220
  %v1222 = vpop.f32.mrf.mxu0
  %1223 = vmatprep.mubr.f32.mxu0 0.0
  %1224 = vmatmul.mubr.f32.gmra.mxu0 %v526
  %v1225 = vpop.f32.mrf.mxu0
  %v1226 = vadd.f32 0.0, %v1225
  %v1227 = vpop.f32.mrf.mxu0
  %1228 = vmatprep.mubr.f32.mxu0 0.0
  %1229 = vmatmul.mubr.f32.gmra.mxu0 %v529
  %v1230 = vpop.f32.mrf.mxu0
  %v1231 = vadd.f32 0.0, %v1230
  %v1232 = vpop.f32.mrf.mxu0
  %1233 = vmatprep.mubr.f32.mxu0 0.0
  %1234 = vmatmul.mubr.f32.gmra.mxu0 %v532
  %v1235 = vpop.f32.mrf.mxu0
  %v1236 = vadd.f32 0.0, %v1235
  %v1237 = vpop.f32.mrf.mxu0
  %1238 = vmatprep.mubr.f32.mxu0 0.0
  %1239 = vmatmul.mubr.f32.gmra.mxu0 %v535
  %v1240 = vpop.f32.mrf.mxu0
  %v1241 = vadd.f32 0.0, %v1240
  %v1242 = vpop.f32.mrf.mxu0
  %1243 = vmatprep.mubr.f32.mxu0 0.0
  %1244 = vmatmul.mubr.f32.gmra.mxu0 %v538
  %v1245 = vpop.f32.mrf.mxu0
  %v1246 = vadd.f32 0.0, %v1245
  %v1247 = vpop.f32.mrf.mxu0
  %1248 = vdwg.mxu0
  %vm1249 = vcmask 261120
  %v1250 = vsel %vm1249, %v611, 0.0
  %v1251 = vsel %vm1249, %v616, 0.0
  %v1252 = vadd.f32 %v1250, %v1251
  %v1253 = vsel %vm1249, %v621, 0.0
  %v1254 = vadd.f32 %v1252, %v1253
  %v1255 = vsel %vm1249, %v626, 0.0
  %v1256 = vadd.f32 %v1254, %v1255
  %v1257 = vsel %vm1249, %v631, 0.0
  %v1258 = vadd.f32 %v1256, %v1257
  %v1259 = vsel %vm1249, %v636, 0.0
  %v1260 = vadd.f32 %v1258, %v1259
  %v1261 = vsel %vm1249, %v641, 0.0
  %v1262 = vadd.f32 %v1260, %v1261
  %v1263 = vsel %vm1249, %v646, 0.0
  %v1264 = vadd.f32 %v1262, %v1263
  %v1265 = vsel %vm1249, %v651, 0.0
  %v1266 = vadd.f32 %v1264, %v1265
  %v1267 = vsel %vm1249, %v656, 0.0
  %v1268 = vadd.f32 %v1266, %v1267
  %v1269 = vsel %vm1249, %v661, 0.0
  %v1270 = vadd.f32 %v1268, %v1269
  %v1271 = vsel %vm1249, %v666, 0.0
  %v1272 = vadd.f32 %v1270, %v1271
  %v1273 = vsel %vm1249, %v671, 0.0
  %v1274 = vadd.f32 %v1272, %v1273
  %v1275 = vsel %vm1249, %v676, 0.0
  %v1276 = vadd.f32 %v1274, %v1275
  %v1277 = vsel %vm1249, %v681, 0.0
  %v1278 = vadd.f32 %v1276, %v1277
  %v1279 = vsel %vm1249, %v686, 0.0
  %v1280 = vadd.f32 %v1278, %v1279
  %v1281 = vsel %vm1249, %v691, 0.0
  %v1282 = vadd.f32 %v1280, %v1281
  %v1283 = vsel %vm1249, %v696, 0.0
  %v1284 = vadd.f32 %v1282, %v1283
  %v1285 = vsel %vm1249, %v701, 0.0
  %v1286 = vadd.f32 %v1284, %v1285
  %v1287 = vsel %vm1249, %v706, 0.0
  %v1288 = vadd.f32 %v1286, %v1287
  %v1289 = vsel %vm1249, %v711, 0.0
  %v1290 = vadd.f32 %v1288, %v1289
  %v1291 = vsel %vm1249, %v716, 0.0
  %v1292 = vadd.f32 %v1290, %v1291
  %v1293 = vsel %vm1249, %v721, 0.0
  %v1294 = vadd.f32 %v1292, %v1293
  %v1295 = vsel %vm1249, %v726, 0.0
  %v1296 = vadd.f32 %v1294, %v1295
  %v1297 = vsel %vm1249, %v731, 0.0
  %v1298 = vadd.f32 %v1296, %v1297
  %v1299 = vsel %vm1249, %v736, 0.0
  %v1300 = vadd.f32 %v1298, %v1299
  %v1301 = vsel %vm1249, %v741, 0.0
  %v1302 = vadd.f32 %v1300, %v1301
  %v1303 = vsel %vm1249, %v746, 0.0
  %v1304 = vadd.f32 %v1302, %v1303
  %v1305 = vsel %vm1249, %v751, 0.0
  %v1306 = vadd.f32 %v1304, %v1305
  %v1307 = vsel %vm1249, %v756, 0.0
  %v1308 = vadd.f32 %v1306, %v1307
  %v1309 = vsel %vm1249, %v761, 0.0
  %v1310 = vadd.f32 %v1308, %v1309
  %v1311 = vsel %vm1249, %v766, 0.0
  %v1312 = vadd.f32 %v1310, %v1311
  %v1313 = vsel %vm1249, %v771, 0.0
  %v1314 = vadd.f32 %v1312, %v1313
  %v1315 = vsel %vm1249, %v776, 0.0
  %v1316 = vadd.f32 %v1314, %v1315
  %v1317 = vsel %vm1249, %v781, 0.0
  %v1318 = vadd.f32 %v1316, %v1317
  %v1319 = vsel %vm1249, %v786, 0.0
  %v1320 = vadd.f32 %v1318, %v1319
  %v1321 = vsel %vm1249, %v791, 0.0
  %v1322 = vadd.f32 %v1320, %v1321
  %v1323 = vsel %vm1249, %v796, 0.0
  %v1324 = vadd.f32 %v1322, %v1323
  %v1325 = vsel %vm1249, %v801, 0.0
  %v1326 = vadd.f32 %v1324, %v1325
  %v1327 = vsel %vm1249, %v806, 0.0
  %v1328 = vadd.f32 %v1326, %v1327
  %v1329 = vsel %vm1249, %v811, 0.0
  %v1330 = vadd.f32 %v1328, %v1329
  %v1331 = vsel %vm1249, %v816, 0.0
  %v1332 = vadd.f32 %v1330, %v1331
  %v1333 = vsel %vm1249, %v821, 0.0
  %v1334 = vadd.f32 %v1332, %v1333
  %v1335 = vsel %vm1249, %v826, 0.0
  %v1336 = vadd.f32 %v1334, %v1335
  %v1337 = vsel %vm1249, %v831, 0.0
  %v1338 = vadd.f32 %v1336, %v1337
  %v1339 = vsel %vm1249, %v836, 0.0
  %v1340 = vadd.f32 %v1338, %v1339
  %v1341 = vsel %vm1249, %v841, 0.0
  %v1342 = vadd.f32 %v1340, %v1341
  %v1343 = vsel %vm1249, %v846, 0.0
  %v1344 = vadd.f32 %v1342, %v1343
  %v1345 = vsel %vm1249, %v851, 0.0
  %v1346 = vadd.f32 %v1344, %v1345
  %v1347 = vsel %vm1249, %v856, 0.0
  %v1348 = vadd.f32 %v1346, %v1347
  %v1349 = vsel %vm1249, %v861, 0.0
  %v1350 = vadd.f32 %v1348, %v1349
  %v1351 = vsel %vm1249, %v866, 0.0
  %v1352 = vadd.f32 %v1350, %v1351
  %v1353 = vsel %vm1249, %v871, 0.0
  %v1354 = vadd.f32 %v1352, %v1353
  %v1355 = vsel %vm1249, %v876, 0.0
  %v1356 = vadd.f32 %v1354, %v1355
  %v1357 = vsel %vm1249, %v881, 0.0
  %v1358 = vadd.f32 %v1356, %v1357
  %v1359 = vsel %vm1249, %v886, 0.0
  %v1360 = vadd.f32 %v1358, %v1359
  %v1361 = vsel %vm1249, %v891, 0.0
  %v1362 = vadd.f32 %v1360, %v1361
  %v1363 = vsel %vm1249, %v896, 0.0
  %v1364 = vadd.f32 %v1362, %v1363
  %v1365 = vsel %vm1249, %v901, 0.0
  %v1366 = vadd.f32 %v1364, %v1365
  %v1367 = vsel %vm1249, %v906, 0.0
  %v1368 = vadd.f32 %v1366, %v1367
  %v1369 = vsel %vm1249, %v911, 0.0
  %v1370 = vadd.f32 %v1368, %v1369
  %v1371 = vsel %vm1249, %v916, 0.0
  %v1372 = vadd.f32 %v1370, %v1371
  %v1373 = vsel %vm1249, %v921, 0.0
  %v1374 = vadd.f32 %v1372, %v1373
  %v1375 = vsel %vm1249, %v926, 0.0
  %v1376 = vadd.f32 %v1374, %v1375
  %v1377 = vsel %vm1249, %v931, 0.0
  %v1378 = vadd.f32 %v1376, %v1377
  %v1379 = vsel %vm1249, %v936, 0.0
  %v1380 = vadd.f32 %v1378, %v1379
  %v1381 = vsel %vm1249, %v941, 0.0
  %v1382 = vadd.f32 %v1380, %v1381
  %v1383 = vsel %vm1249, %v946, 0.0
  %v1384 = vadd.f32 %v1382, %v1383
  %v1385 = vsel %vm1249, %v951, 0.0
  %v1386 = vadd.f32 %v1384, %v1385
  %v1387 = vsel %vm1249, %v956, 0.0
  %v1388 = vadd.f32 %v1386, %v1387
  %v1389 = vsel %vm1249, %v961, 0.0
  %v1390 = vadd.f32 %v1388, %v1389
  %v1391 = vsel %vm1249, %v966, 0.0
  %v1392 = vadd.f32 %v1390, %v1391
  %v1393 = vsel %vm1249, %v971, 0.0
  %v1394 = vadd.f32 %v1392, %v1393
  %v1395 = vsel %vm1249, %v976, 0.0
  %v1396 = vadd.f32 %v1394, %v1395
  %v1397 = vsel %vm1249, %v981, 0.0
  %v1398 = vadd.f32 %v1396, %v1397
  %v1399 = vsel %vm1249, %v986, 0.0
  %v1400 = vadd.f32 %v1398, %v1399
  %v1401 = vsel %vm1249, %v991, 0.0
  %v1402 = vadd.f32 %v1400, %v1401
  %v1403 = vsel %vm1249, %v996, 0.0
  %v1404 = vadd.f32 %v1402, %v1403
  %v1405 = vsel %vm1249, %v1001, 0.0
  %v1406 = vadd.f32 %v1404, %v1405
  %v1407 = vsel %vm1249, %v1006, 0.0
  %v1408 = vadd.f32 %v1406, %v1407
  %v1409 = vsel %vm1249, %v1011, 0.0
  %v1410 = vadd.f32 %v1408, %v1409
  %v1411 = vsel %vm1249, %v1016, 0.0
  %v1412 = vadd.f32 %v1410, %v1411
  %v1413 = vsel %vm1249, %v1021, 0.0
  %v1414 = vadd.f32 %v1412, %v1413
  %v1415 = vsel %vm1249, %v1026, 0.0
  %v1416 = vadd.f32 %v1414, %v1415
  %v1417 = vsel %vm1249, %v1031, 0.0
  %v1418 = vadd.f32 %v1416, %v1417
  %v1419 = vsel %vm1249, %v1036, 0.0
  %v1420 = vadd.f32 %v1418, %v1419
  %v1421 = vsel %vm1249, %v1041, 0.0
  %v1422 = vadd.f32 %v1420, %v1421
  %v1423 = vsel %vm1249, %v1046, 0.0
  %v1424 = vadd.f32 %v1422, %v1423
  %v1425 = vsel %vm1249, %v1051, 0.0
  %v1426 = vadd.f32 %v1424, %v1425
  %v1427 = vsel %vm1249, %v1056, 0.0
  %v1428 = vadd.f32 %v1426, %v1427
  %v1429 = vsel %vm1249, %v1061, 0.0
  %v1430 = vadd.f32 %v1428, %v1429
  %v1431 = vsel %vm1249, %v1066, 0.0
  %v1432 = vadd.f32 %v1430, %v1431
  %v1433 = vsel %vm1249, %v1071, 0.0
  %v1434 = vadd.f32 %v1432, %v1433
  %v1435 = vsel %vm1249, %v1076, 0.0
  %v1436 = vadd.f32 %v1434, %v1435
  %v1437 = vsel %vm1249, %v1081, 0.0
  %v1438 = vadd.f32 %v1436, %v1437
  %v1439 = vsel %vm1249, %v1086, 0.0
  %v1440 = vadd.f32 %v1438, %v1439
  %v1441 = vsel %vm1249, %v1091, 0.0
  %v1442 = vadd.f32 %v1440, %v1441
  %v1443 = vsel %vm1249, %v1096, 0.0
  %v1444 = vadd.f32 %v1442, %v1443
  %v1445 = vsel %vm1249, %v1101, 0.0
  %v1446 = vadd.f32 %v1444, %v1445
  %v1447 = vsel %vm1249, %v1106, 0.0
  %v1448 = vadd.f32 %v1446, %v1447
  %v1449 = vsel %vm1249, %v1111, 0.0
  %v1450 = vadd.f32 %v1448, %v1449
  %v1451 = vsel %vm1249, %v1116, 0.0
  %v1452 = vadd.f32 %v1450, %v1451
  %v1453 = vsel %vm1249, %v1121, 0.0
  %v1454 = vadd.f32 %v1452, %v1453
  %v1455 = vsel %vm1249, %v1126, 0.0
  %v1456 = vadd.f32 %v1454, %v1455
  %v1457 = vsel %vm1249, %v1131, 0.0
  %v1458 = vadd.f32 %v1456, %v1457
  %v1459 = vsel %vm1249, %v1136, 0.0
  %v1460 = vadd.f32 %v1458, %v1459
  %v1461 = vsel %vm1249, %v1141, 0.0
  %v1462 = vadd.f32 %v1460, %v1461
  %v1463 = vsel %vm1249, %v1146, 0.0
  %v1464 = vadd.f32 %v1462, %v1463
  %v1465 = vsel %vm1249, %v1151, 0.0
  %v1466 = vadd.f32 %v1464, %v1465
  %v1467 = vsel %vm1249, %v1156, 0.0
  %v1468 = vadd.f32 %v1466, %v1467
  %v1469 = vsel %vm1249, %v1161, 0.0
  %v1470 = vadd.f32 %v1468, %v1469
  %v1471 = vsel %vm1249, %v1166, 0.0
  %v1472 = vadd.f32 %v1470, %v1471
  %v1473 = vsel %vm1249, %v1171, 0.0
  %v1474 = vadd.f32 %v1472, %v1473
  %v1475 = vsel %vm1249, %v1176, 0.0
  %v1476 = vadd.f32 %v1474, %v1475
  %v1477 = vsel %vm1249, %v1181, 0.0
  %v1478 = vadd.f32 %v1476, %v1477
  %v1479 = vsel %vm1249, %v1186, 0.0
  %v1480 = vadd.f32 %v1478, %v1479
  %v1481 = vsel %vm1249, %v1191, 0.0
  %v1482 = vadd.f32 %v1480, %v1481
  %v1483 = vsel %vm1249, %v1196, 0.0
  %v1484 = vadd.f32 %v1482, %v1483
  %v1485 = vsel %vm1249, %v1201, 0.0
  %v1486 = vadd.f32 %v1484, %v1485
  %v1487 = vsel %vm1249, %v1206, 0.0
  %v1488 = vadd.f32 %v1486, %v1487
  %v1489 = vsel %vm1249, %v1211, 0.0
  %v1490 = vadd.f32 %v1488, %v1489
  %v1491 = vsel %vm1249, %v1216, 0.0
  %v1492 = vadd.f32 %v1490, %v1491
  %v1493 = vsel %vm1249, %v1221, 0.0
  %v1494 = vadd.f32 %v1492, %v1493
  %v1495 = vsel %vm1249, %v1226, 0.0
  %v1496 = vadd.f32 %v1494, %v1495
  %v1497 = vsel %vm1249, %v1231, 0.0
  %v1498 = vadd.f32 %v1496, %v1497
  %v1499 = vsel %vm1249, %v1236, 0.0
  %v1500 = vadd.f32 %v1498, %v1499
  %v1501 = vsel %vm1249, %v1241, 0.0
  %v1502 = vadd.f32 %v1500, %v1501
  %v1503 = vsel %vm1249, %v1246, 0.0
  %v1504 = vadd.f32 %v1502, %v1503
  %v1505 = vrot.slane %v1504, 4
  %v1506 = vadd.f32 %v1504, %v1505
  %v1507 = vrot.slane %v1506, 2
  %v1508 = vadd.f32 %v1506, %v1507
  %v1509 = vrot.slane %v1508, 1
  %v1510 = vadd.f32 %v1508, %v1509
  %v1511 = vrcp.pop 1024.0
  %v1512 = vmul.f32 %v1510, %v1511
  %v1513 = vsub.f32 %v611, %v1512
  %v1514 = vsub.f32 %v616, %v1512
  %v1515 = vsub.f32 %v621, %v1512
  %v1516 = vsub.f32 %v626, %v1512
  %v1517 = vsub.f32 %v631, %v1512
  %v1518 = vsub.f32 %v636, %v1512
  %v1519 = vsub.f32 %v641, %v1512
  %v1520 = vsub.f32 %v646, %v1512
  %v1521 = vsub.f32 %v651, %v1512
  %v1522 = vsub.f32 %v656, %v1512
  %v1523 = vsub.f32 %v661, %v1512
  %v1524 = vsub.f32 %v666, %v1512
  %v1525 = vsub.f32 %v671, %v1512
  %v1526 = vsub.f32 %v676, %v1512
  %v1527 = vsub.f32 %v681, %v1512
  %v1528 = vsub.f32 %v686, %v1512
  %v1529 = vsub.f32 %v691, %v1512
  %v1530 = vsub.f32 %v696, %v1512
  %v1531 = vsub.f32 %v701, %v1512
  %v1532 = vsub.f32 %v706, %v1512
  %v1533 = vsub.f32 %v711, %v1512
  %v1534 = vsub.f32 %v716, %v1512
  %v1535 = vsub.f32 %v721, %v1512
  %v1536 = vsub.f32 %v726, %v1512
  %v1537 = vsub.f32 %v731, %v1512
  %v1538 = vsub.f32 %v736, %v1512
  %v1539 = vsub.f32 %v741, %v1512
  %v1540 = vsub.f32 %v746, %v1512
  %v1541 = vsub.f32 %v751, %v1512
  %v1542 = vsub.f32 %v756, %v1512
  %v1543 = vsub.f32 %v761, %v1512
  %v1544 = vsub.f32 %v766, %v1512
  %v1545 = vsub.f32 %v771, %v1512
  %v1546 = vsub.f32 %v776, %v1512
  %v1547 = vsub.f32 %v781, %v1512
  %v1548 = vsub.f32 %v786, %v1512
  %v1549 = vsub.f32 %v791, %v1512
  %v1550 = vsub.f32 %v796, %v1512
  %v1551 = vsub.f32 %v801, %v1512
  %v1552 = vsub.f32 %v806, %v1512
  %v1553 = vsub.f32 %v811, %v1512
  %v1554 = vsub.f32 %v816, %v1512
  %v1555 = vsub.f32 %v821, %v1512
  %v1556 = vsub.f32 %v826, %v1512
  %v1557 = vsub.f32 %v831, %v1512
  %v1558 = vsub.f32 %v836, %v1512
  %v1559 = vsub.f32 %v841, %v1512
  %v1560 = vsub.f32 %v846, %v1512
  %v1561 = vsub.f32 %v851, %v1512
  %v1562 = vsub.f32 %v856, %v1512
  %v1563 = vsub.f32 %v861, %v1512
  %v1564 = vsub.f32 %v866, %v1512
  %v1565 = vsub.f32 %v871, %v1512
  %v1566 = vsub.f32 %v876, %v1512
  %v1567 = vsub.f32 %v881, %v1512
  %v1568 = vsub.f32 %v886, %v1512
  %v1569 = vsub.f32 %v891, %v1512
  %v1570 = vsub.f32 %v896, %v1512
  %v1571 = vsub.f32 %v901, %v1512
  %v1572 = vsub.f32 %v906, %v1512
  %v1573 = vsub.f32 %v911, %v1512
  %v1574 = vsub.f32 %v916, %v1512
  %v1575 = vsub.f32 %v921, %v1512
  %v1576 = vsub.f32 %v926, %v1512
  %v1577 = vsub.f32 %v931, %v1512
  %v1578 = vsub.f32 %v936, %v1512
  %v1579 = vsub.f32 %v941, %v1512
  %v1580 = vsub.f32 %v946, %v1512
  %v1581 = vsub.f32 %v951, %v1512
  %v1582 = vsub.f32 %v956, %v1512
  %v1583 = vsub.f32 %v961, %v1512
  %v1584 = vsub.f32 %v966, %v1512
  %v1585 = vsub.f32 %v971, %v1512
  %v1586 = vsub.f32 %v976, %v1512
  %v1587 = vsub.f32 %v981, %v1512
  %v1588 = vsub.f32 %v986, %v1512
  %v1589 = vsub.f32 %v991, %v1512
  %v1590 = vsub.f32 %v996, %v1512
  %v1591 = vsub.f32 %v1001, %v1512
  %v1592 = vsub.f32 %v1006, %v1512
  %v1593 = vsub.f32 %v1011, %v1512
  %v1594 = vsub.f32 %v1016, %v1512
  %v1595 = vsub.f32 %v1021, %v1512
  %v1596 = vsub.f32 %v1026, %v1512
  %v1597 = vsub.f32 %v1031, %v1512
  %v1598 = vsub.f32 %v1036, %v1512
  %v1599 = vsub.f32 %v1041, %v1512
  %v1600 = vsub.f32 %v1046, %v1512
  %v1601 = vsub.f32 %v1051, %v1512
  %v1602 = vsub.f32 %v1056, %v1512
  %v1603 = vsub.f32 %v1061, %v1512
  %v1604 = vsub.f32 %v1066, %v1512
  %v1605 = vsub.f32 %v1071, %v1512
  %v1606 = vsub.f32 %v1076, %v1512
  %v1607 = vsub.f32 %v1081, %v1512
  %v1608 = vsub.f32 %v1086, %v1512
  %v1609 = vsub.f32 %v1091, %v1512
  %v1610 = vsub.f32 %v1096, %v1512
  %v1611 = vsub.f32 %v1101, %v1512
  %v1612 = vsub.f32 %v1106, %v1512
  %v1613 = vsub.f32 %v1111, %v1512
  %v1614 = vsub.f32 %v1116, %v1512
  %v1615 = vsub.f32 %v1121, %v1512
  %v1616 = vsub.f32 %v1126, %v1512
  %v1617 = vsub.f32 %v1131, %v1512
  %v1618 = vsub.f32 %v1136, %v1512
  %v1619 = vsub.f32 %v1141, %v1512
  %v1620 = vsub.f32 %v1146, %v1512
  %v1621 = vsub.f32 %v1151, %v1512
  %v1622 = vsub.f32 %v1156, %v1512
  %v1623 = vsub.f32 %v1161, %v1512
  %v1624 = vsub.f32 %v1166, %v1512
  %v1625 = vsub.f32 %v1171, %v1512
  %v1626 = vsub.f32 %v1176, %v1512
  %v1627 = vsub.f32 %v1181, %v1512
  %v1628 = vsub.f32 %v1186, %v1512
  %v1629 = vsub.f32 %v1191, %v1512
  %v1630 = vsub.f32 %v1196, %v1512
  %v1631 = vsub.f32 %v1201, %v1512
  %v1632 = vsub.f32 %v1206, %v1512
  %v1633 = vsub.f32 %v1211, %v1512
  %v1634 = vsub.f32 %v1216, %v1512
  %v1635 = vsub.f32 %v1221, %v1512
  %v1636 = vsub.f32 %v1226, %v1512
  %v1637 = vsub.f32 %v1231, %v1512
  %v1638 = vsub.f32 %v1236, %v1512
  %v1639 = vsub.f32 %v1241, %v1512
  %v1640 = vsub.f32 %v1246, %v1512
  %v1641 = vmul.f32 %v1513, %v1513
  %v1642 = vmul.f32 %v1514, %v1514
  %v1643 = vmul.f32 %v1515, %v1515
  %v1644 = vmul.f32 %v1516, %v1516
  %v1645 = vmul.f32 %v1517, %v1517
  %v1646 = vmul.f32 %v1518, %v1518
  %v1647 = vmul.f32 %v1519, %v1519
  %v1648 = vmul.f32 %v1520, %v1520
  %v1649 = vmul.f32 %v1521, %v1521
  %v1650 = vmul.f32 %v1522, %v1522
  %v1651 = vmul.f32 %v1523, %v1523
  %v1652 = vmul.f32 %v1524, %v1524
  %v1653 = vmul.f32 %v1525, %v1525
  %v1654 = vmul.f32 %v1526, %v1526
  %v1655 = vmul.f32 %v1527, %v1527
  %v1656 = vmul.f32 %v1528, %v1528
  %v1657 = vmul.f32 %v1529, %v1529
  %v1658 = vmul.f32 %v1530, %v1530
  %v1659 = vmul.f32 %v1531, %v1531
  %v1660 = vmul.f32 %v1532, %v1532
  %v1661 = vmul.f32 %v1533, %v1533
  %v1662 = vmul.f32 %v1534, %v1534
  %v1663 = vmul.f32 %v1535, %v1535
  %v1664 = vmul.f32 %v1536, %v1536
  %v1665 = vmul.f32 %v1537, %v1537
  %v1666 = vmul.f32 %v1538, %v1538
  %v1667 = vmul.f32 %v1539, %v1539
  %v1668 = vmul.f32 %v1540, %v1540
  %v1669 = vmul.f32 %v1541, %v1541
  %v1670 = vmul.f32 %v1542, %v1542
  %v1671 = vmul.f32 %v1543, %v1543
  %v1672 = vmul.f32 %v1544, %v1544
  %v1673 = vmul.f32 %v1545, %v1545
  %v1674 = vmul.f32 %v1546, %v1546
  %v1675 = vmul.f32 %v1547, %v1547
  %v1676 = vmul.f32 %v1548, %v1548
  %v1677 = vmul.f32 %v1549, %v1549
  %v1678 = vmul.f32 %v1550, %v1550
  %v1679 = vmul.f32 %v1551, %v1551
  %v1680 = vmul.f32 %v1552, %v1552
  %v1681 = vmul.f32 %v1553, %v1553
  %v1682 = vmul.f32 %v1554, %v1554
  %v1683 = vmul.f32 %v1555, %v1555
  %v1684 = vmul.f32 %v1556, %v1556
  %v1685 = vmul.f32 %v1557, %v1557
  %v1686 = vmul.f32 %v1558, %v1558
  %v1687 = vmul.f32 %v1559, %v1559
  %v1688 = vmul.f32 %v1560, %v1560
  %v1689 = vmul.f32 %v1561, %v1561
  %v1690 = vmul.f32 %v1562, %v1562
  %v1691 = vmul.f32 %v1563, %v1563
  %v1692 = vmul.f32 %v1564, %v1564
  %v1693 = vmul.f32 %v1565, %v1565
  %v1694 = vmul.f32 %v1566, %v1566
  %v1695 = vmul.f32 %v1567, %v1567
  %v1696 = vmul.f32 %v1568, %v1568
  %v1697 = vmul.f32 %v1569, %v1569
  %v1698 = vmul.f32 %v1570, %v1570
  %v1699 = vmul.f32 %v1571, %v1571
  %v1700 = vmul.f32 %v1572, %v1572
  %v1701 = vmul.f32 %v1573, %v1573
  %v1702 = vmul.f32 %v1574, %v1574
  %v1703 = vmul.f32 %v1575, %v1575
  %v1704 = vmul.f32 %v1576, %v1576
  %v1705 = vmul.f32 %v1577, %v1577
  %v1706 = vmul.f32 %v1578, %v1578
  %v1707 = vmul.f32 %v1579, %v1579
  %v1708 = vmul.f32 %v1580, %v1580
  %v1709 = vmul.f32 %v1581, %v1581
  %v1710 = vmul.f32 %v1582, %v1582
  %v1711 = vmul.f32 %v1583, %v1583
  %v1712 = vmul.f32 %v1584, %v1584
  %v1713 = vmul.f32 %v1585, %v1585
  %v1714 = vmul.f32 %v1586, %v1586
  %v1715 = vmul.f32 %v1587, %v1587
  %v1716 = vmul.f32 %v1588, %v1588
  %v1717 = vmul.f32 %v1589, %v1589
  %v1718 = vmul.f32 %v1590, %v1590
  %v1719 = vmul.f32 %v1591, %v1591
  %v1720 = vmul.f32 %v1592, %v1592
  %v1721 = vmul.f32 %v1593, %v1593
  %v1722 = vmul.f32 %v1594, %v1594
  %v1723 = vmul.f32 %v1595, %v1595
  %v1724 = vmul.f32 %v1596, %v1596
  %v1725 = vmul.f32 %v1597, %v1597
  %v1726 = vmul.f32 %v1598, %v1598
  %v1727 = vmul.f32 %v1599, %v1599
  %v1728 = vmul.f32 %v1600, %v1600
  %v1729 = vmul.f32 %v1601, %v1601
  %v1730 = vmul.f32 %v1602, %v1602
  %v1731 = vmul.f32 %v1603, %v1603
  %v1732 = vmul.f32 %v1604, %v1604
  %v1733 = vmul.f32 %v1605, %v1605
  %v1734 = vmul.f32 %v1606, %v1606
  %v1735 = vmul.f32 %v1607, %v1607
  %v1736 = vmul.f32 %v1608, %v1608
  %v1737 = vmul.f32 %v1609, %v1609
  %v1738 = vmul.f32 %v1610, %v1610
  %v1739 = vmul.f32 %v1611, %v1611
  %v1740 = vmul.f32 %v1612, %v1612
  %v1741 = vmul.f32 %v1613, %v1613
  %v1742 = vmul.f32 %v1614, %v1614
  %v1743 = vmul.f32 %v1615, %v1615
  %v1744 = vmul.f32 %v1616, %v1616
  %v1745 = vmul.f32 %v1617, %v1617
  %v1746 = vmul.f32 %v1618, %v1618
  %v1747 = vmul.f32 %v1619, %v1619
  %v1748 = vmul.f32 %v1620, %v1620
  %v1749 = vmul.f32 %v1621, %v1621
  %v1750 = vmul.f32 %v1622, %v1622
  %v1751 = vmul.f32 %v1623, %v1623
  %v1752 = vmul.f32 %v1624, %v1624
  %v1753 = vmul.f32 %v1625, %v1625
  %v1754 = vmul.f32 %v1626, %v1626
  %v1755 = vmul.f32 %v1627, %v1627
  %v1756 = vmul.f32 %v1628, %v1628
  %v1757 = vmul.f32 %v1629, %v1629
  %v1758 = vmul.f32 %v1630, %v1630
  %v1759 = vmul.f32 %v1631, %v1631
  %v1760 = vmul.f32 %v1632, %v1632
  %v1761 = vmul.f32 %v1633, %v1633
  %v1762 = vmul.f32 %v1634, %v1634
  %v1763 = vmul.f32 %v1635, %v1635
  %v1764 = vmul.f32 %v1636, %v1636
  %v1765 = vmul.f32 %v1637, %v1637
  %v1766 = vmul.f32 %v1638, %v1638
  %v1767 = vmul.f32 %v1639, %v1639
  %v1768 = vmul.f32 %v1640, %v1640
  %v1769 = vsel %vm1249, %v1641, 0.0
  %v1770 = vsel %vm1249, %v1642, 0.0
  %v1771 = vadd.f32 %v1769, %v1770
  %v1772 = vsel %vm1249, %v1643, 0.0
  %v1773 = vadd.f32 %v1771, %v1772
  %v1774 = vsel %vm1249, %v1644, 0.0
  %v1775 = vadd.f32 %v1773, %v1774
  %v1776 = vsel %vm1249, %v1645, 0.0
  %v1777 = vadd.f32 %v1775, %v1776
  %v1778 = vsel %vm1249, %v1646, 0.0
  %v1779 = vadd.f32 %v1777, %v1778
  %v1780 = vsel %vm1249, %v1647, 0.0
  %v1781 = vadd.f32 %v1779, %v1780
  %v1782 = vsel %vm1249, %v1648, 0.0
  %v1783 = vadd.f32 %v1781, %v1782
  %v1784 = vsel %vm1249, %v1649, 0.0
  %v1785 = vadd.f32 %v1783, %v1784
  %v1786 = vsel %vm1249, %v1650, 0.0
  %v1787 = vadd.f32 %v1785, %v1786
  %v1788 = vsel %vm1249, %v1651, 0.0
  %v1789 = vadd.f32 %v1787, %v1788
  %v1790 = vsel %vm1249, %v1652, 0.0
  %v1791 = vadd.f32 %v1789, %v1790
  %v1792 = vsel %vm1249, %v1653, 0.0
  %v1793 = vadd.f32 %v1791, %v1792
  %v1794 = vsel %vm1249, %v1654, 0.0
  %v1795 = vadd.f32 %v1793, %v1794
  %v1796 = vsel %vm1249, %v1655, 0.0
  %v1797 = vadd.f32 %v1795, %v1796
  %v1798 = vsel %vm1249, %v1656, 0.0
  %v1799 = vadd.f32 %v1797, %v1798
  %v1800 = vsel %vm1249, %v1657, 0.0
  %v1801 = vadd.f32 %v1799, %v1800
  %v1802 = vsel %vm1249, %v1658, 0.0
  %v1803 = vadd.f32 %v1801, %v1802
  %v1804 = vsel %vm1249, %v1659, 0.0
  %v1805 = vadd.f32 %v1803, %v1804
  %v1806 = vsel %vm1249, %v1660, 0.0
  %v1807 = vadd.f32 %v1805, %v1806
  %v1808 = vsel %vm1249, %v1661, 0.0
  %v1809 = vadd.f32 %v1807, %v1808
  %v1810 = vsel %vm1249, %v1662, 0.0
  %v1811 = vadd.f32 %v1809, %v1810
  %v1812 = vsel %vm1249, %v1663, 0.0
  %v1813 = vadd.f32 %v1811, %v1812
  %v1814 = vsel %vm1249, %v1664, 0.0
  %v1815 = vadd.f32 %v1813, %v1814
  %v1816 = vsel %vm1249, %v1665, 0.0
  %v1817 = vadd.f32 %v1815, %v1816
  %v1818 = vsel %vm1249, %v1666, 0.0
  %v1819 = vadd.f32 %v1817, %v1818
  %v1820 = vsel %vm1249, %v1667, 0.0
  %v1821 = vadd.f32 %v1819, %v1820
  %v1822 = vsel %vm1249, %v1668, 0.0
  %v1823 = vadd.f32 %v1821, %v1822
  %v1824 = vsel %vm1249, %v1669, 0.0
  %v1825 = vadd.f32 %v1823, %v1824
  %v1826 = vsel %vm1249, %v1670, 0.0
  %v1827 = vadd.f32 %v1825, %v1826
  %v1828 = vsel %vm1249, %v1671, 0.0
  %v1829 = vadd.f32 %v1827, %v1828
  %v1830 = vsel %vm1249, %v1672, 0.0
  %v1831 = vadd.f32 %v1829, %v1830
  %v1832 = vsel %vm1249, %v1673, 0.0
  %v1833 = vadd.f32 %v1831, %v1832
  %v1834 = vsel %vm1249, %v1674, 0.0
  %v1835 = vadd.f32 %v1833, %v1834
  %v1836 = vsel %vm1249, %v1675, 0.0
  %v1837 = vadd.f32 %v1835, %v1836
  %v1838 = vsel %vm1249, %v1676, 0.0
  %v1839 = vadd.f32 %v1837, %v1838
  %v1840 = vsel %vm1249, %v1677, 0.0
  %v1841 = vadd.f32 %v1839, %v1840
  %v1842 = vsel %vm1249, %v1678, 0.0
  %v1843 = vadd.f32 %v1841, %v1842
  %v1844 = vsel %vm1249, %v1679, 0.0
  %v1845 = vadd.f32 %v1843, %v1844
  %v1846 = vsel %vm1249, %v1680, 0.0
  %v1847 = vadd.f32 %v1845, %v1846
  %v1848 = vsel %vm1249, %v1681, 0.0
  %v1849 = vadd.f32 %v1847, %v1848
  %v1850 = vsel %vm1249, %v1682, 0.0
  %v1851 = vadd.f32 %v1849, %v1850
  %v1852 = vsel %vm1249, %v1683, 0.0
  %v1853 = vadd.f32 %v1851, %v1852
  %v1854 = vsel %vm1249, %v1684, 0.0
  %v1855 = vadd.f32 %v1853, %v1854
  %v1856 = vsel %vm1249, %v1685, 0.0
  %v1857 = vadd.f32 %v1855, %v1856
  %v1858 = vsel %vm1249, %v1686, 0.0
  %v1859 = vadd.f32 %v1857, %v1858
  %v1860 = vsel %vm1249, %v1687, 0.0
  %v1861 = vadd.f32 %v1859, %v1860
  %v1862 = vsel %vm1249, %v1688, 0.0
  %v1863 = vadd.f32 %v1861, %v1862
  %v1864 = vsel %vm1249, %v1689, 0.0
  %v1865 = vadd.f32 %v1863, %v1864
  %v1866 = vsel %vm1249, %v1690, 0.0
  %v1867 = vadd.f32 %v1865, %v1866
  %v1868 = vsel %vm1249, %v1691, 0.0
  %v1869 = vadd.f32 %v1867, %v1868
  %v1870 = vsel %vm1249, %v1692, 0.0
  %v1871 = vadd.f32 %v1869, %v1870
  %v1872 = vsel %vm1249, %v1693, 0.0
  %v1873 = vadd.f32 %v1871, %v1872
  %v1874 = vsel %vm1249, %v1694, 0.0
  %v1875 = vadd.f32 %v1873, %v1874
  %v1876 = vsel %vm1249, %v1695, 0.0
  %v1877 = vadd.f32 %v1875, %v1876
  %v1878 = vsel %vm1249, %v1696, 0.0
  %v1879 = vadd.f32 %v1877, %v1878
  %v1880 = vsel %vm1249, %v1697, 0.0
  %v1881 = vadd.f32 %v1879, %v1880
  %v1882 = vsel %vm1249, %v1698, 0.0
  %v1883 = vadd.f32 %v1881, %v1882
  %v1884 = vsel %vm1249, %v1699, 0.0
  %v1885 = vadd.f32 %v1883, %v1884
  %v1886 = vsel %vm1249, %v1700, 0.0
  %v1887 = vadd.f32 %v1885, %v1886
  %v1888 = vsel %vm1249, %v1701, 0.0
  %v1889 = vadd.f32 %v1887, %v1888
  %v1890 = vsel %vm1249, %v1702, 0.0
  %v1891 = vadd.f32 %v1889, %v1890
  %v1892 = vsel %vm1249, %v1703, 0.0
  %v1893 = vadd.f32 %v1891, %v1892
  %v1894 = vsel %vm1249, %v1704, 0.0
  %v1895 = vadd.f32 %v1893, %v1894
  %v1896 = vsel %vm1249, %v1705, 0.0
  %v1897 = vadd.f32 %v1895, %v1896
  %v1898 = vsel %vm1249, %v1706, 0.0
  %v1899 = vadd.f32 %v1897, %v1898
  %v1900 = vsel %vm1249, %v1707, 0.0
  %v1901 = vadd.f32 %v1899, %v1900
  %v1902 = vsel %vm1249, %v1708, 0.0
  %v1903 = vadd.f32 %v1901, %v1902
  %v1904 = vsel %vm1249, %v1709, 0.0
  %v1905 = vadd.f32 %v1903, %v1904
  %v1906 = vsel %vm1249, %v1710, 0.0
  %v1907 = vadd.f32 %v1905, %v1906
  %v1908 = vsel %vm1249, %v1711, 0.0
  %v1909 = vadd.f32 %v1907, %v1908
  %v1910 = vsel %vm1249, %v1712, 0.0
  %v1911 = vadd.f32 %v1909, %v1910
  %v1912 = vsel %vm1249, %v1713, 0.0
  %v1913 = vadd.f32 %v1911, %v1912
  %v1914 = vsel %vm1249, %v1714, 0.0
  %v1915 = vadd.f32 %v1913, %v1914
  %v1916 = vsel %vm1249, %v1715, 0.0
  %v1917 = vadd.f32 %v1915, %v1916
  %v1918 = vsel %vm1249, %v1716, 0.0
  %v1919 = vadd.f32 %v1917, %v1918
  %v1920 = vsel %vm1249, %v1717, 0.0
  %v1921 = vadd.f32 %v1919, %v1920
  %v1922 = vsel %vm1249, %v1718, 0.0
  %v1923 = vadd.f32 %v1921, %v1922
  %v1924 = vsel %vm1249, %v1719, 0.0
  %v1925 = vadd.f32 %v1923, %v1924
  %v1926 = vsel %vm1249, %v1720, 0.0
  %v1927 = vadd.f32 %v1925, %v1926
  %v1928 = vsel %vm1249, %v1721, 0.0
  %v1929 = vadd.f32 %v1927, %v1928
  %v1930 = vsel %vm1249, %v1722, 0.0
  %v1931 = vadd.f32 %v1929, %v1930
  %v1932 = vsel %vm1249, %v1723, 0.0
  %v1933 = vadd.f32 %v1931, %v1932
  %v1934 = vsel %vm1249, %v1724, 0.0
  %v1935 = vadd.f32 %v1933, %v1934
  %v1936 = vsel %vm1249, %v1725, 0.0
  %v1937 = vadd.f32 %v1935, %v1936
  %v1938 = vsel %vm1249, %v1726, 0.0
  %v1939 = vadd.f32 %v1937, %v1938
  %v1940 = vsel %vm1249, %v1727, 0.0
  %v1941 = vadd.f32 %v1939, %v1940
  %v1942 = vsel %vm1249, %v1728, 0.0
  %v1943 = vadd.f32 %v1941, %v1942
  %v1944 = vsel %vm1249, %v1729, 0.0
  %v1945 = vadd.f32 %v1943, %v1944
  %v1946 = vsel %vm1249, %v1730, 0.0
  %v1947 = vadd.f32 %v1945, %v1946
  %v1948 = vsel %vm1249, %v1731, 0.0
  %v1949 = vadd.f32 %v1947, %v1948
  %v1950 = vsel %vm1249, %v1732, 0.0
  %v1951 = vadd.f32 %v1949, %v1950
  %v1952 = vsel %vm1249, %v1733, 0.0
  %v1953 = vadd.f32 %v1951, %v1952
  %v1954 = vsel %vm1249, %v1734, 0.0
  %v1955 = vadd.f32 %v1953, %v1954
  %v1956 = vsel %vm1249, %v1735, 0.0
  %v1957 = vadd.f32 %v1955, %v1956
  %v1958 = vsel %vm1249, %v1736, 0.0
  %v1959 = vadd.f32 %v1957, %v1958
  %v1960 = vsel %vm1249, %v1737, 0.0
  %v1961 = vadd.f32 %v1959, %v1960
  %v1962 = vsel %vm1249, %v1738, 0.0
  %v1963 = vadd.f32 %v1961, %v1962
  %v1964 = vsel %vm1249, %v1739, 0.0
  %v1965 = vadd.f32 %v1963, %v1964
  %v1966 = vsel %vm1249, %v1740, 0.0
  %v1967 = vadd.f32 %v1965, %v1966
  %v1968 = vsel %vm1249, %v1741, 0.0
  %v1969 = vadd.f32 %v1967, %v1968
  %v1970 = vsel %vm1249, %v1742, 0.0
  %v1971 = vadd.f32 %v1969, %v1970
  %v1972 = vsel %vm1249, %v1743, 0.0
  %v1973 = vadd.f32 %v1971, %v1972
  %v1974 = vsel %vm1249, %v1744, 0.0
  %v1975 = vadd.f32 %v1973, %v1974
  %v1976 = vsel %vm1249, %v1745, 0.0
  %v1977 = vadd.f32 %v1975, %v1976
  %v1978 = vsel %vm1249, %v1746, 0.0
  %v1979 = vadd.f32 %v1977, %v1978
  %v1980 = vsel %vm1249, %v1747, 0.0
  %v1981 = vadd.f32 %v1979, %v1980
  %v1982 = vsel %vm1249, %v1748, 0.0
  %v1983 = vadd.f32 %v1981, %v1982
  %v1984 = vsel %vm1249, %v1749, 0.0
  %v1985 = vadd.f32 %v1983, %v1984
  %v1986 = vsel %vm1249, %v1750, 0.0
  %v1987 = vadd.f32 %v1985, %v1986
  %v1988 = vsel %vm1249, %v1751, 0.0
  %v1989 = vadd.f32 %v1987, %v1988
  %v1990 = vsel %vm1249, %v1752, 0.0
  %v1991 = vadd.f32 %v1989, %v1990
  %v1992 = vsel %vm1249, %v1753, 0.0
  %v1993 = vadd.f32 %v1991, %v1992
  %v1994 = vsel %vm1249, %v1754, 0.0
  %v1995 = vadd.f32 %v1993, %v1994
  %v1996 = vsel %vm1249, %v1755, 0.0
  %v1997 = vadd.f32 %v1995, %v1996
  %v1998 = vsel %vm1249, %v1756, 0.0
  %v1999 = vadd.f32 %v1997, %v1998
  %v2000 = vsel %vm1249, %v1757, 0.0
  %v2001 = vadd.f32 %v1999, %v2000
  %v2002 = vsel %vm1249, %v1758, 0.0
  %v2003 = vadd.f32 %v2001, %v2002
  %v2004 = vsel %vm1249, %v1759, 0.0
  %v2005 = vadd.f32 %v2003, %v2004
  %v2006 = vsel %vm1249, %v1760, 0.0
  %v2007 = vadd.f32 %v2005, %v2006
  %v2008 = vsel %vm1249, %v1761, 0.0
  %v2009 = vadd.f32 %v2007, %v2008
  %v2010 = vsel %vm1249, %v1762, 0.0
  %v2011 = vadd.f32 %v2009, %v2010
  %v2012 = vsel %vm1249, %v1763, 0.0
  %v2013 = vadd.f32 %v2011, %v2012
  %v2014 = vsel %vm1249, %v1764, 0.0
  %v2015 = vadd.f32 %v2013, %v2014
  %v2016 = vsel %vm1249, %v1765, 0.0
  %v2017 = vadd.f32 %v2015, %v2016
  %v2018 = vsel %vm1249, %v1766, 0.0
  %v2019 = vadd.f32 %v2017, %v2018
  %v2020 = vsel %vm1249, %v1767, 0.0
  %v2021 = vadd.f32 %v2019, %v2020
  %v2022 = vsel %vm1249, %v1768, 0.0
  %v2023 = vadd.f32 %v2021, %v2022
  %v2024 = vrot.slane %v2023, 4
  %v2025 = vadd.f32 %v2023, %v2024
  %v2026 = vrot.slane %v2025, 2
  %v2027 = vadd.f32 %v2025, %v2026
  %v2028 = vrot.slane %v2027, 1
  %v2029 = vadd.f32 %v2027, %v2028
  %v2030 = vmul.f32 %v2029, %v1511
  %v2031 = vadd.f32 %v2030, 1e-05
  %v2032 = vrsqrt.pop %v2031
  %v2033 = vmul.f32 %v1513, %v2032
  %v2034 = vmul.f32 %v1514, %v2032
  %v2035 = vmul.f32 %v1515, %v2032
  %v2036 = vmul.f32 %v1516, %v2032
  %v2037 = vmul.f32 %v1517, %v2032
  %v2038 = vmul.f32 %v1518, %v2032
  %v2039 = vmul.f32 %v1519, %v2032
  %v2040 = vmul.f32 %v1520, %v2032
  %v2041 = vmul.f32 %v1521, %v2032
  %v2042 = vmul.f32 %v1522, %v2032
  %v2043 = vmul.f32 %v1523, %v2032
  %v2044 = vmul.f32 %v1524, %v2032
  %v2045 = vmul.f32 %v1525, %v2032
  %v2046 = vmul.f32 %v1526, %v2032
  %v2047 = vmul.f32 %v1527, %v2032
  %v2048 = vmul.f32 %v1528, %v2032
  %v2049 = vmul.f32 %v1529, %v2032
  %v2050 = vmul.f32 %v1530, %v2032
  %v2051 = vmul.f32 %v1531, %v2032
  %v2052 = vmul.f32 %v1532, %v2032
  %v2053 = vmul.f32 %v1533, %v2032
  %v2054 = vmul.f32 %v1534, %v2032
  %v2055 = vmul.f32 %v1535, %v2032
  %v2056 = vmul.f32 %v1536, %v2032
  %v2057 = vmul.f32 %v1537, %v2032
  %v2058 = vmul.f32 %v1538, %v2032
  %v2059 = vmul.f32 %v1539, %v2032
  %v2060 = vmul.f32 %v1540, %v2032
  %v2061 = vmul.f32 %v1541, %v2032
  %v2062 = vmul.f32 %v1542, %v2032
  %v2063 = vmul.f32 %v1543, %v2032
  %v2064 = vmul.f32 %v1544, %v2032
  %v2065 = vmul.f32 %v1545, %v2032
  %v2066 = vmul.f32 %v1546, %v2032
  %v2067 = vmul.f32 %v1547, %v2032
  %v2068 = vmul.f32 %v1548, %v2032
  %v2069 = vmul.f32 %v1549, %v2032
  %v2070 = vmul.f32 %v1550, %v2032
  %v2071 = vmul.f32 %v1551, %v2032
  %v2072 = vmul.f32 %v1552, %v2032
  %v2073 = vmul.f32 %v1553, %v2032
  %v2074 = vmul.f32 %v1554, %v2032
  %v2075 = vmul.f32 %v1555, %v2032
  %v2076 = vmul.f32 %v1556, %v2032
  %v2077 = vmul.f32 %v1557, %v2032
  %v2078 = vmul.f32 %v1558, %v2032
  %v2079 = vmul.f32 %v1559, %v2032
  %v2080 = vmul.f32 %v1560, %v2032
  %v2081 = vmul.f32 %v1561, %v2032
  %v2082 = vmul.f32 %v1562, %v2032
  %v2083 = vmul.f32 %v1563, %v2032
  %v2084 = vmul.f32 %v1564, %v2032
  %v2085 = vmul.f32 %v1565, %v2032
  %v2086 = vmul.f32 %v1566, %v2032
  %v2087 = vmul.f32 %v1567, %v2032
  %v2088 = vmul.f32 %v1568, %v2032
  %v2089 = vmul.f32 %v1569, %v2032
  %v2090 = vmul.f32 %v1570, %v2032
  %v2091 = vmul.f32 %v1571, %v2032
  %v2092 = vmul.f32 %v1572, %v2032
  %v2093 = vmul.f32 %v1573, %v2032
  %v2094 = vmul.f32 %v1574, %v2032
  %v2095 = vmul.f32 %v1575, %v2032
  %v2096 = vmul.f32 %v1576, %v2032
  %v2097 = vmul.f32 %v1577, %v2032
  %v2098 = vmul.f32 %v1578, %v2032
  %v2099 = vmul.f32 %v1579, %v2032
  %v2100 = vmul.f32 %v1580, %v2032
  %v2101 = vmul.f32 %v1581, %v2032
  %v2102 = vmul.f32 %v1582, %v2032
  %v2103 = vmul.f32 %v1583, %v2032
  %v2104 = vmul.f32 %v1584, %v2032
  %v2105 = vmul.f32 %v1585, %v2032
  %v2106 = vmul.f32 %v1586, %v2032
  %v2107 = vmul.f32 %v1587, %v2032
  %v2108 = vmul.f32 %v1588, %v2032
  %v2109 = vmul.f32 %v1589, %v2032
  %v2110 = vmul.f32 %v1590, %v2032
  %v2111 = vmul.f32 %v1591, %v2032
  %v2112 = vmul.f32 %v1592, %v2032
  %v2113 = vmul.f32 %v1593, %v2032
  %v2114 = vmul.f32 %v1594, %v2032
  %v2115 = vmul.f32 %v1595, %v2032
  %v2116 = vmul.f32 %v1596, %v2032
  %v2117 = vmul.f32 %v1597, %v2032
  %v2118 = vmul.f32 %v1598, %v2032
  %v2119 = vmul.f32 %v1599, %v2032
  %v2120 = vmul.f32 %v1600, %v2032
  %v2121 = vmul.f32 %v1601, %v2032
  %v2122 = vmul.f32 %v1602, %v2032
  %v2123 = vmul.f32 %v1603, %v2032
  %v2124 = vmul.f32 %v1604, %v2032
  %v2125 = vmul.f32 %v1605, %v2032
  %v2126 = vmul.f32 %v1606, %v2032
  %v2127 = vmul.f32 %v1607, %v2032
  %v2128 = vmul.f32 %v1608, %v2032
  %v2129 = vmul.f32 %v1609, %v2032
  %v2130 = vmul.f32 %v1610, %v2032
  %v2131 = vmul.f32 %v1611, %v2032
  %v2132 = vmul.f32 %v1612, %v2032
  %v2133 = vmul.f32 %v1613, %v2032
  %v2134 = vmul.f32 %v1614, %v2032
  %v2135 = vmul.f32 %v1615, %v2032
  %v2136 = vmul.f32 %v1616, %v2032
  %v2137 = vmul.f32 %v1617, %v2032
  %v2138 = vmul.f32 %v1618, %v2032
  %v2139 = vmul.f32 %v1619, %v2032
  %v2140 = vmul.f32 %v1620, %v2032
  %v2141 = vmul.f32 %v1621, %v2032
  %v2142 = vmul.f32 %v1622, %v2032
  %v2143 = vmul.f32 %v1623, %v2032
  %v2144 = vmul.f32 %v1624, %v2032
  %v2145 = vmul.f32 %v1625, %v2032
  %v2146 = vmul.f32 %v1626, %v2032
  %v2147 = vmul.f32 %v1627, %v2032
  %v2148 = vmul.f32 %v1628, %v2032
  %v2149 = vmul.f32 %v1629, %v2032
  %v2150 = vmul.f32 %v1630, %v2032
  %v2151 = vmul.f32 %v1631, %v2032
  %v2152 = vmul.f32 %v1632, %v2032
  %v2153 = vmul.f32 %v1633, %v2032
  %v2154 = vmul.f32 %v1634, %v2032
  %v2155 = vmul.f32 %v1635, %v2032
  %v2156 = vmul.f32 %v1636, %v2032
  %v2157 = vmul.f32 %v1637, %v2032
  %v2158 = vmul.f32 %v1638, %v2032
  %v2159 = vmul.f32 %v1639, %v2032
  %v2160 = vmul.f32 %v1640, %v2032
  %v2161 = vld [vmem:[%s2] sm:$0x1]
  %v2163 = vlaneseq
  %v2164 = vshrl.u32 %v2163, 7
  %v2165 = vsub.s32 0, %v2164
  %v2166 = vrot.slane %v2161, %v2165
  %v2168 = vmul.f32 %v2033, %v2166
  %v2169 = vmul.f32 %v2034, %v2166
  %v2170 = vmul.f32 %v2035, %v2166
  %v2171 = vmul.f32 %v2036, %v2166
  %v2172 = vmul.f32 %v2037, %v2166
  %v2173 = vmul.f32 %v2038, %v2166
  %v2174 = vmul.f32 %v2039, %v2166
  %v2175 = vmul.f32 %v2040, %v2166
  %v2176 = vmul.f32 %v2041, %v2166
  %v2177 = vmul.f32 %v2042, %v2166
  %v2178 = vmul.f32 %v2043, %v2166
  %v2179 = vmul.f32 %v2044, %v2166
  %v2180 = vmul.f32 %v2045, %v2166
  %v2181 = vmul.f32 %v2046, %v2166
  %v2182 = vmul.f32 %v2047, %v2166
  %v2183 = vmul.f32 %v2048, %v2166
  %v2184 = vmul.f32 %v2049, %v2166
  %v2185 = vmul.f32 %v2050, %v2166
  %v2186 = vmul.f32 %v2051, %v2166
  %v2187 = vmul.f32 %v2052, %v2166
  %v2188 = vmul.f32 %v2053, %v2166
  %v2189 = vmul.f32 %v2054, %v2166
  %v2190 = vmul.f32 %v2055, %v2166
  %v2191 = vmul.f32 %v2056, %v2166
  %v2192 = vmul.f32 %v2057, %v2166
  %v2193 = vmul.f32 %v2058, %v2166
  %v2194 = vmul.f32 %v2059, %v2166
  %v2195 = vmul.f32 %v2060, %v2166
  %v2196 = vmul.f32 %v2061, %v2166
  %v2197 = vmul.f32 %v2062, %v2166
  %v2198 = vmul.f32 %v2063, %v2166
  %v2199 = vmul.f32 %v2064, %v2166
  %v2200 = vmul.f32 %v2065, %v2166
  %v2201 = vmul.f32 %v2066, %v2166
  %v2202 = vmul.f32 %v2067, %v2166
  %v2203 = vmul.f32 %v2068, %v2166
  %v2204 = vmul.f32 %v2069, %v2166
  %v2205 = vmul.f32 %v2070, %v2166
  %v2206 = vmul.f32 %v2071, %v2166
  %v2207 = vmul.f32 %v2072, %v2166
  %v2208 = vmul.f32 %v2073, %v2166
  %v2209 = vmul.f32 %v2074, %v2166
  %v2210 = vmul.f32 %v2075, %v2166
  %v2211 = vmul.f32 %v2076, %v2166
  %v2212 = vmul.f32 %v2077, %v2166
  %v2213 = vmul.f32 %v2078, %v2166
  %v2214 = vmul.f32 %v2079, %v2166
  %v2215 = vmul.f32 %v2080, %v2166
  %v2216 = vmul.f32 %v2081, %v2166
  %v2217 = vmul.f32 %v2082, %v2166
  %v2218 = vmul.f32 %v2083, %v2166
  %v2219 = vmul.f32 %v2084, %v2166
  %v2220 = vmul.f32 %v2085, %v2166
  %v2221 = vmul.f32 %v2086, %v2166
  %v2222 = vmul.f32 %v2087, %v2166
  %v2223 = vmul.f32 %v2088, %v2166
  %v2224 = vmul.f32 %v2089, %v2166
  %v2225 = vmul.f32 %v2090, %v2166
  %v2226 = vmul.f32 %v2091, %v2166
  %v2227 = vmul.f32 %v2092, %v2166
  %v2228 = vmul.f32 %v2093, %v2166
  %v2229 = vmul.f32 %v2094, %v2166
  %v2230 = vmul.f32 %v2095, %v2166
  %v2231 = vmul.f32 %v2096, %v2166
  %v2232 = vmul.f32 %v2097, %v2166
  %v2233 = vmul.f32 %v2098, %v2166
  %v2234 = vmul.f32 %v2099, %v2166
  %v2235 = vmul.f32 %v2100, %v2166
  %v2236 = vmul.f32 %v2101, %v2166
  %v2237 = vmul.f32 %v2102, %v2166
  %v2238 = vmul.f32 %v2103, %v2166
  %v2239 = vmul.f32 %v2104, %v2166
  %v2240 = vmul.f32 %v2105, %v2166
  %v2241 = vmul.f32 %v2106, %v2166
  %v2242 = vmul.f32 %v2107, %v2166
  %v2243 = vmul.f32 %v2108, %v2166
  %v2244 = vmul.f32 %v2109, %v2166
  %v2245 = vmul.f32 %v2110, %v2166
  %v2246 = vmul.f32 %v2111, %v2166
  %v2247 = vmul.f32 %v2112, %v2166
  %v2248 = vmul.f32 %v2113, %v2166
  %v2249 = vmul.f32 %v2114, %v2166
  %v2250 = vmul.f32 %v2115, %v2166
  %v2251 = vmul.f32 %v2116, %v2166
  %v2252 = vmul.f32 %v2117, %v2166
  %v2253 = vmul.f32 %v2118, %v2166
  %v2254 = vmul.f32 %v2119, %v2166
  %v2255 = vmul.f32 %v2120, %v2166
  %v2256 = vmul.f32 %v2121, %v2166
  %v2257 = vmul.f32 %v2122, %v2166
  %v2258 = vmul.f32 %v2123, %v2166
  %v2259 = vmul.f32 %v2124, %v2166
  %v2260 = vmul.f32 %v2125, %v2166
  %v2261 = vmul.f32 %v2126, %v2166
  %v2262 = vmul.f32 %v2127, %v2166
  %v2263 = vmul.f32 %v2128, %v2166
  %v2264 = vmul.f32 %v2129, %v2166
  %v2265 = vmul.f32 %v2130, %v2166
  %v2266 = vmul.f32 %v2131, %v2166
  %v2267 = vmul.f32 %v2132, %v2166
  %v2268 = vmul.f32 %v2133, %v2166
  %v2269 = vmul.f32 %v2134, %v2166
  %v2270 = vmul.f32 %v2135, %v2166
  %v2271 = vmul.f32 %v2136, %v2166
  %v2272 = vmul.f32 %v2137, %v2166
  %v2273 = vmul.f32 %v2138, %v2166
  %v2274 = vmul.f32 %v2139, %v2166
  %v2275 = vmul.f32 %v2140, %v2166
  %v2276 = vmul.f32 %v2141, %v2166
  %v2277 = vmul.f32 %v2142, %v2166
  %v2278 = vmul.f32 %v2143, %v2166
  %v2279 = vmul.f32 %v2144, %v2166
  %v2280 = vmul.f32 %v2145, %v2166
  %v2281 = vmul.f32 %v2146, %v2166
  %v2282 = vmul.f32 %v2147, %v2166
  %v2283 = vmul.f32 %v2148, %v2166
  %v2284 = vmul.f32 %v2149, %v2166
  %v2285 = vmul.f32 %v2150, %v2166
  %v2286 = vmul.f32 %v2151, %v2166
  %v2287 = vmul.f32 %v2152, %v2166
  %v2288 = vmul.f32 %v2153, %v2166
  %v2289 = vmul.f32 %v2154, %v2166
  %v2290 = vmul.f32 %v2155, %v2166
  %v2291 = vmul.f32 %v2156, %v2166
  %v2292 = vmul.f32 %v2157, %v2166
  %v2293 = vmul.f32 %v2158, %v2166
  %v2294 = vmul.f32 %v2159, %v2166
  %v2295 = vmul.f32 %v2160, %v2166
  %v2296 = vld [vmem:[%s3] sm:$0x1]
  %v2298 = vlaneseq
  %v2299 = vshrl.u32 %v2298, 7
  %v2300 = vsub.s32 0, %v2299
  %v2301 = vrot.slane %v2296, %v2300
  %v2303 = vadd.f32 %v2168, %v2301
  %v2304 = vadd.f32 %v2169, %v2301
  %v2305 = vadd.f32 %v2170, %v2301
  %v2306 = vadd.f32 %v2171, %v2301
  %v2307 = vadd.f32 %v2172, %v2301
  %v2308 = vadd.f32 %v2173, %v2301
  %v2309 = vadd.f32 %v2174, %v2301
  %v2310 = vadd.f32 %v2175, %v2301
  %v2311 = vadd.f32 %v2176, %v2301
  %v2312 = vadd.f32 %v2177, %v2301
  %v2313 = vadd.f32 %v2178, %v2301
  %v2314 = vadd.f32 %v2179, %v2301
  %v2315 = vadd.f32 %v2180, %v2301
  %v2316 = vadd.f32 %v2181, %v2301
  %v2317 = vadd.f32 %v2182, %v2301
  %v2318 = vadd.f32 %v2183, %v2301
  %v2319 = vadd.f32 %v2184, %v2301
  %v2320 = vadd.f32 %v2185, %v2301
  %v2321 = vadd.f32 %v2186, %v2301
  %v2322 = vadd.f32 %v2187, %v2301
  %v2323 = vadd.f32 %v2188, %v2301
  %v2324 = vadd.f32 %v2189, %v2301
  %v2325 = vadd.f32 %v2190, %v2301
  %v2326 = vadd.f32 %v2191, %v2301
  %v2327 = vadd.f32 %v2192, %v2301
  %v2328 = vadd.f32 %v2193, %v2301
  %v2329 = vadd.f32 %v2194, %v2301
  %v2330 = vadd.f32 %v2195, %v2301
  %v2331 = vadd.f32 %v2196, %v2301
  %v2332 = vadd.f32 %v2197, %v2301
  %v2333 = vadd.f32 %v2198, %v2301
  %v2334 = vadd.f32 %v2199, %v2301
  %v2335 = vadd.f32 %v2200, %v2301
  %v2336 = vadd.f32 %v2201, %v2301
  %v2337 = vadd.f32 %v2202, %v2301
  %v2338 = vadd.f32 %v2203, %v2301
  %v2339 = vadd.f32 %v2204, %v2301
  %v2340 = vadd.f32 %v2205, %v2301
  %v2341 = vadd.f32 %v2206, %v2301
  %v2342 = vadd.f32 %v2207, %v2301
  %v2343 = vadd.f32 %v2208, %v2301
  %v2344 = vadd.f32 %v2209, %v2301
  %v2345 = vadd.f32 %v2210, %v2301
  %v2346 = vadd.f32 %v2211, %v2301
  %v2347 = vadd.f32 %v2212, %v2301
  %v2348 = vadd.f32 %v2213, %v2301
  %v2349 = vadd.f32 %v2214, %v2301
  %v2350 = vadd.f32 %v2215, %v2301
  %v2351 = vadd.f32 %v2216, %v2301
  %v2352 = vadd.f32 %v2217, %v2301
  %v2353 = vadd.f32 %v2218, %v2301
  %v2354 = vadd.f32 %v2219, %v2301
  %v2355 = vadd.f32 %v2220, %v2301
  %v2356 = vadd.f32 %v2221, %v2301
  %v2357 = vadd.f32 %v2222, %v2301
  %v2358 = vadd.f32 %v2223, %v2301
  %v2359 = vadd.f32 %v2224, %v2301
  %v2360 = vadd.f32 %v2225, %v2301
  %v2361 = vadd.f32 %v2226, %v2301
  %v2362 = vadd.f32 %v2227, %v2301
  %v2363 = vadd.f32 %v2228, %v2301
  %v2364 = vadd.f32 %v2229, %v2301
  %v2365 = vadd.f32 %v2230, %v2301
  %v2366 = vadd.f32 %v2231, %v2301
  %v2367 = vadd.f32 %v2232, %v2301
  %v2368 = vadd.f32 %v2233, %v2301
  %v2369 = vadd.f32 %v2234, %v2301
  %v2370 = vadd.f32 %v2235, %v2301
  %v2371 = vadd.f32 %v2236, %v2301
  %v2372 = vadd.f32 %v2237, %v2301
  %v2373 = vadd.f32 %v2238, %v2301
  %v2374 = vadd.f32 %v2239, %v2301
  %v2375 = vadd.f32 %v2240, %v2301
  %v2376 = vadd.f32 %v2241, %v2301
  %v2377 = vadd.f32 %v2242, %v2301
  %v2378 = vadd.f32 %v2243, %v2301
  %v2379 = vadd.f32 %v2244, %v2301
  %v2380 = vadd.f32 %v2245, %v2301
  %v2381 = vadd.f32 %v2246, %v2301
  %v2382 = vadd.f32 %v2247, %v2301
  %v2383 = vadd.f32 %v2248, %v2301
  %v2384 = vadd.f32 %v2249, %v2301
  %v2385 = vadd.f32 %v2250, %v2301
  %v2386 = vadd.f32 %v2251, %v2301
  %v2387 = vadd.f32 %v2252, %v2301
  %v2388 = vadd.f32 %v2253, %v2301
  %v2389 = vadd.f32 %v2254, %v2301
  %v2390 = vadd.f32 %v2255, %v2301
  %v2391 = vadd.f32 %v2256, %v2301
  %v2392 = vadd.f32 %v2257, %v2301
  %v2393 = vadd.f32 %v2258, %v2301
  %v2394 = vadd.f32 %v2259, %v2301
  %v2395 = vadd.f32 %v2260, %v2301
  %v2396 = vadd.f32 %v2261, %v2301
  %v2397 = vadd.f32 %v2262, %v2301
  %v2398 = vadd.f32 %v2263, %v2301
  %v2399 = vadd.f32 %v2264, %v2301
  %v2400 = vadd.f32 %v2265, %v2301
  %v2401 = vadd.f32 %v2266, %v2301
  %v2402 = vadd.f32 %v2267, %v2301
  %v2403 = vadd.f32 %v2268, %v2301
  %v2404 = vadd.f32 %v2269, %v2301
  %v2405 = vadd.f32 %v2270, %v2301
  %v2406 = vadd.f32 %v2271, %v2301
  %v2407 = vadd.f32 %v2272, %v2301
  %v2408 = vadd.f32 %v2273, %v2301
  %v2409 = vadd.f32 %v2274, %v2301
  %v2410 = vadd.f32 %v2275, %v2301
  %v2411 = vadd.f32 %v2276, %v2301
  %v2412 = vadd.f32 %v2277, %v2301
  %v2413 = vadd.f32 %v2278, %v2301
  %v2414 = vadd.f32 %v2279, %v2301
  %v2415 = vadd.f32 %v2280, %v2301
  %v2416 = vadd.f32 %v2281, %v2301
  %v2417 = vadd.f32 %v2282, %v2301
  %v2418 = vadd.f32 %v2283, %v2301
  %v2419 = vadd.f32 %v2284, %v2301
  %v2420 = vadd.f32 %v2285, %v2301
  %v2421 = vadd.f32 %v2286, %v2301
  %v2422 = vadd.f32 %v2287, %v2301
  %v2423 = vadd.f32 %v2288, %v2301
  %v2424 = vadd.f32 %v2289, %v2301
  %v2425 = vadd.f32 %v2290, %v2301
  %v2426 = vadd.f32 %v2291, %v2301
  %v2427 = vadd.f32 %v2292, %v2301
  %v2428 = vadd.f32 %v2293, %v2301
  %v2429 = vadd.f32 %v2294, %v2301
  %v2430 = vadd.f32 %v2295, %v2301
  %v2431 = vmax.f32 %v2303, 0.0
  %v2432 = vmax.f32 %v2304, 0.0
  %v2433 = vmax.f32 %v2305, 0.0
  %v2434 = vmax.f32 %v2306, 0.0
  %v2435 = vmax.f32 %v2307, 0.0
  %v2436 = vmax.f32 %v2308, 0.0
  %v2437 = vmax.f32 %v2309, 0.0
  %v2438 = vmax.f32 %v2310, 0.0
  %v2439 = vmax.f32 %v2311, 0.0
  %v2440 = vmax.f32 %v2312, 0.0
  %v2441 = vmax.f32 %v2313, 0.0
  %v2442 = vmax.f32 %v2314, 0.0
  %v2443 = vmax.f32 %v2315, 0.0
  %v2444 = vmax.f32 %v2316, 0.0
  %v2445 = vmax.f32 %v2317, 0.0
  %v2446 = vmax.f32 %v2318, 0.0
  %v2447 = vmax.f32 %v2319, 0.0
  %v2448 = vmax.f32 %v2320, 0.0
  %v2449 = vmax.f32 %v2321, 0.0
  %v2450 = vmax.f32 %v2322, 0.0
  %v2451 = vmax.f32 %v2323, 0.0
  %v2452 = vmax.f32 %v2324, 0.0
  %v2453 = vmax.f32 %v2325, 0.0
  %v2454 = vmax.f32 %v2326, 0.0
  %v2455 = vmax.f32 %v2327, 0.0
  %v2456 = vmax.f32 %v2328, 0.0
  %v2457 = vmax.f32 %v2329, 0.0
  %v2458 = vmax.f32 %v2330, 0.0
  %v2459 = vmax.f32 %v2331, 0.0
  %v2460 = vmax.f32 %v2332, 0.0
  %v2461 = vmax.f32 %v2333, 0.0
  %v2462 = vmax.f32 %v2334, 0.0
  %v2463 = vmax.f32 %v2335, 0.0
  %v2464 = vmax.f32 %v2336, 0.0
  %v2465 = vmax.f32 %v2337, 0.0
  %v2466 = vmax.f32 %v2338, 0.0
  %v2467 = vmax.f32 %v2339, 0.0
  %v2468 = vmax.f32 %v2340, 0.0
  %v2469 = vmax.f32 %v2341, 0.0
  %v2470 = vmax.f32 %v2342, 0.0
  %v2471 = vmax.f32 %v2343, 0.0
  %v2472 = vmax.f32 %v2344, 0.0
  %v2473 = vmax.f32 %v2345, 0.0
  %v2474 = vmax.f32 %v2346, 0.0
  %v2475 = vmax.f32 %v2347, 0.0
  %v2476 = vmax.f32 %v2348, 0.0
  %v2477 = vmax.f32 %v2349, 0.0
  %v2478 = vmax.f32 %v2350, 0.0
  %v2479 = vmax.f32 %v2351, 0.0
  %v2480 = vmax.f32 %v2352, 0.0
  %v2481 = vmax.f32 %v2353, 0.0
  %v2482 = vmax.f32 %v2354, 0.0
  %v2483 = vmax.f32 %v2355, 0.0
  %v2484 = vmax.f32 %v2356, 0.0
  %v2485 = vmax.f32 %v2357, 0.0
  %v2486 = vmax.f32 %v2358, 0.0
  %v2487 = vmax.f32 %v2359, 0.0
  %v2488 = vmax.f32 %v2360, 0.0
  %v2489 = vmax.f32 %v2361, 0.0
  %v2490 = vmax.f32 %v2362, 0.0
  %v2491 = vmax.f32 %v2363, 0.0
  %v2492 = vmax.f32 %v2364, 0.0
  %v2493 = vmax.f32 %v2365, 0.0
  %v2494 = vmax.f32 %v2366, 0.0
  %v2495 = vmax.f32 %v2367, 0.0
  %v2496 = vmax.f32 %v2368, 0.0
  %v2497 = vmax.f32 %v2369, 0.0
  %v2498 = vmax.f32 %v2370, 0.0
  %v2499 = vmax.f32 %v2371, 0.0
  %v2500 = vmax.f32 %v2372, 0.0
  %v2501 = vmax.f32 %v2373, 0.0
  %v2502 = vmax.f32 %v2374, 0.0
  %v2503 = vmax.f32 %v2375, 0.0
  %v2504 = vmax.f32 %v2376, 0.0
  %v2505 = vmax.f32 %v2377, 0.0
  %v2506 = vmax.f32 %v2378, 0.0
  %v2507 = vmax.f32 %v2379, 0.0
  %v2508 = vmax.f32 %v2380, 0.0
  %v2509 = vmax.f32 %v2381, 0.0
  %v2510 = vmax.f32 %v2382, 0.0
  %v2511 = vmax.f32 %v2383, 0.0
  %v2512 = vmax.f32 %v2384, 0.0
  %v2513 = vmax.f32 %v2385, 0.0
  %v2514 = vmax.f32 %v2386, 0.0
  %v2515 = vmax.f32 %v2387, 0.0
  %v2516 = vmax.f32 %v2388, 0.0
  %v2517 = vmax.f32 %v2389, 0.0
  %v2518 = vmax.f32 %v2390, 0.0
  %v2519 = vmax.f32 %v2391, 0.0
  %v2520 = vmax.f32 %v2392, 0.0
  %v2521 = vmax.f32 %v2393, 0.0
  %v2522 = vmax.f32 %v2394, 0.0
  %v2523 = vmax.f32 %v2395, 0.0
  %v2524 = vmax.f32 %v2396, 0.0
  %v2525 = vmax.f32 %v2397, 0.0
  %v2526 = vmax.f32 %v2398, 0.0
  %v2527 = vmax.f32 %v2399, 0.0
  %v2528 = vmax.f32 %v2400, 0.0
  %v2529 = vmax.f32 %v2401, 0.0
  %v2530 = vmax.f32 %v2402, 0.0
  %v2531 = vmax.f32 %v2403, 0.0
  %v2532 = vmax.f32 %v2404, 0.0
  %v2533 = vmax.f32 %v2405, 0.0
  %v2534 = vmax.f32 %v2406, 0.0
  %v2535 = vmax.f32 %v2407, 0.0
  %v2536 = vmax.f32 %v2408, 0.0
  %v2537 = vmax.f32 %v2409, 0.0
  %v2538 = vmax.f32 %v2410, 0.0
  %v2539 = vmax.f32 %v2411, 0.0
  %v2540 = vmax.f32 %v2412, 0.0
  %v2541 = vmax.f32 %v2413, 0.0
  %v2542 = vmax.f32 %v2414, 0.0
  %v2543 = vmax.f32 %v2415, 0.0
  %v2544 = vmax.f32 %v2416, 0.0
  %v2545 = vmax.f32 %v2417, 0.0
  %v2546 = vmax.f32 %v2418, 0.0
  %v2547 = vmax.f32 %v2419, 0.0
  %v2548 = vmax.f32 %v2420, 0.0
  %v2549 = vmax.f32 %v2421, 0.0
  %v2550 = vmax.f32 %v2422, 0.0
  %v2551 = vmax.f32 %v2423, 0.0
  %v2552 = vmax.f32 %v2424, 0.0
  %v2553 = vmax.f32 %v2425, 0.0
  %v2554 = vmax.f32 %v2426, 0.0
  %v2555 = vmax.f32 %v2427, 0.0
  %v2556 = vmax.f32 %v2428, 0.0
  %v2557 = vmax.f32 %v2429, 0.0
  %v2558 = vmax.f32 %v2430, 0.0
  %v2559 = vld [vmem:[%s4] sm:$0xff]
  %v2560 = vld [vmem:[%s4 + $0x8] sm:$0xff]
  %v2561 = vld [vmem:[%s4 + $0x10] sm:$0xff]
  %v2562 = vld [vmem:[%s4 + $0x18] sm:$0xff]
  %v2563 = vld [vmem:[%s5] sm:$0x1]
  %v2565 = vlaneseq
  %v2566 = vshrl.u32 %v2565, 7
  %v2567 = vsub.s32 0, %v2566
  %v2568 = vrot.slane %v2563, %v2567
  %v2571 = vsel %vm1249, %v2431, 0
  %v2574 = vsel %vm1249, %v2432, 0
  %v2577 = vsel %vm1249, %v2433, 0
  %v2580 = vsel %vm1249, %v2434, 0
  %v2583 = vsel %vm1249, %v2435, 0
  %v2586 = vsel %vm1249, %v2436, 0
  %v2589 = vsel %vm1249, %v2437, 0
  %v2592 = vsel %vm1249, %v2438, 0
  %v2595 = vsel %vm1249, %v2439, 0
  %v2598 = vsel %vm1249, %v2440, 0
  %v2601 = vsel %vm1249, %v2441, 0
  %v2604 = vsel %vm1249, %v2442, 0
  %v2607 = vsel %vm1249, %v2443, 0
  %v2610 = vsel %vm1249, %v2444, 0
  %v2613 = vsel %vm1249, %v2445, 0
  %v2616 = vsel %vm1249, %v2446, 0
  %v2619 = vsel %vm1249, %v2447, 0
  %v2622 = vsel %vm1249, %v2448, 0
  %v2625 = vsel %vm1249, %v2449, 0
  %v2628 = vsel %vm1249, %v2450, 0
  %v2631 = vsel %vm1249, %v2451, 0
  %v2634 = vsel %vm1249, %v2452, 0
  %v2637 = vsel %vm1249, %v2453, 0
  %v2640 = vsel %vm1249, %v2454, 0
  %v2643 = vsel %vm1249, %v2455, 0
  %v2646 = vsel %vm1249, %v2456, 0
  %v2649 = vsel %vm1249, %v2457, 0
  %v2652 = vsel %vm1249, %v2458, 0
  %v2655 = vsel %vm1249, %v2459, 0
  %v2658 = vsel %vm1249, %v2460, 0
  %v2661 = vsel %vm1249, %v2461, 0
  %v2664 = vsel %vm1249, %v2462, 0
  %v2667 = vsel %vm1249, %v2463, 0
  %v2670 = vsel %vm1249, %v2464, 0
  %v2673 = vsel %vm1249, %v2465, 0
  %v2676 = vsel %vm1249, %v2466, 0
  %v2679 = vsel %vm1249, %v2467, 0
  %v2682 = vsel %vm1249, %v2468, 0
  %v2685 = vsel %vm1249, %v2469, 0
  %v2688 = vsel %vm1249, %v2470, 0
  %v2691 = vsel %vm1249, %v2471, 0
  %v2694 = vsel %vm1249, %v2472, 0
  %v2697 = vsel %vm1249, %v2473, 0
  %v2700 = vsel %vm1249, %v2474, 0
  %v2703 = vsel %vm1249, %v2475, 0
  %v2706 = vsel %vm1249, %v2476, 0
  %v2709 = vsel %vm1249, %v2477, 0
  %v2712 = vsel %vm1249, %v2478, 0
  %v2715 = vsel %vm1249, %v2479, 0
  %v2718 = vsel %vm1249, %v2480, 0
  %v2721 = vsel %vm1249, %v2481, 0
  %v2724 = vsel %vm1249, %v2482, 0
  %v2727 = vsel %vm1249, %v2483, 0
  %v2730 = vsel %vm1249, %v2484, 0
  %v2733 = vsel %vm1249, %v2485, 0
  %v2736 = vsel %vm1249, %v2486, 0
  %v2739 = vsel %vm1249, %v2487, 0
  %v2742 = vsel %vm1249, %v2488, 0
  %v2745 = vsel %vm1249, %v2489, 0
  %v2748 = vsel %vm1249, %v2490, 0
  %v2751 = vsel %vm1249, %v2491, 0
  %v2754 = vsel %vm1249, %v2492, 0
  %v2757 = vsel %vm1249, %v2493, 0
  %v2760 = vsel %vm1249, %v2494, 0
  %v2763 = vsel %vm1249, %v2495, 0
  %v2766 = vsel %vm1249, %v2496, 0
  %v2769 = vsel %vm1249, %v2497, 0
  %v2772 = vsel %vm1249, %v2498, 0
  %v2775 = vsel %vm1249, %v2499, 0
  %v2778 = vsel %vm1249, %v2500, 0
  %v2781 = vsel %vm1249, %v2501, 0
  %v2784 = vsel %vm1249, %v2502, 0
  %v2787 = vsel %vm1249, %v2503, 0
  %v2790 = vsel %vm1249, %v2504, 0
  %v2793 = vsel %vm1249, %v2505, 0
  %v2796 = vsel %vm1249, %v2506, 0
  %v2799 = vsel %vm1249, %v2507, 0
  %v2802 = vsel %vm1249, %v2508, 0
  %v2805 = vsel %vm1249, %v2509, 0
  %v2808 = vsel %vm1249, %v2510, 0
  %v2811 = vsel %vm1249, %v2511, 0
  %v2814 = vsel %vm1249, %v2512, 0
  %v2817 = vsel %vm1249, %v2513, 0
  %v2820 = vsel %vm1249, %v2514, 0
  %v2823 = vsel %vm1249, %v2515, 0
  %v2826 = vsel %vm1249, %v2516, 0
  %v2829 = vsel %vm1249, %v2517, 0
  %v2832 = vsel %vm1249, %v2518, 0
  %v2835 = vsel %vm1249, %v2519, 0
  %v2838 = vsel %vm1249, %v2520, 0
  %v2841 = vsel %vm1249, %v2521, 0
  %v2844 = vsel %vm1249, %v2522, 0
  %v2847 = vsel %vm1249, %v2523, 0
  %v2850 = vsel %vm1249, %v2524, 0
  %v2853 = vsel %vm1249, %v2525, 0
  %v2856 = vsel %vm1249, %v2526, 0
  %v2859 = vsel %vm1249, %v2527, 0
  %v2862 = vsel %vm1249, %v2528, 0
  %v2865 = vsel %vm1249, %v2529, 0
  %v2868 = vsel %vm1249, %v2530, 0
  %v2871 = vsel %vm1249, %v2531, 0
  %v2874 = vsel %vm1249, %v2532, 0
  %v2877 = vsel %vm1249, %v2533, 0
  %v2880 = vsel %vm1249, %v2534, 0
  %v2883 = vsel %vm1249, %v2535, 0
  %v2886 = vsel %vm1249, %v2536, 0
  %v2889 = vsel %vm1249, %v2537, 0
  %v2892 = vsel %vm1249, %v2538, 0
  %v2895 = vsel %vm1249, %v2539, 0
  %v2898 = vsel %vm1249, %v2540, 0
  %v2901 = vsel %vm1249, %v2541, 0
  %v2904 = vsel %vm1249, %v2542, 0
  %v2907 = vsel %vm1249, %v2543, 0
  %v2910 = vsel %vm1249, %v2544, 0
  %v2913 = vsel %vm1249, %v2545, 0
  %v2916 = vsel %vm1249, %v2546, 0
  %v2919 = vsel %vm1249, %v2547, 0
  %v2922 = vsel %vm1249, %v2548, 0
  %v2925 = vsel %vm1249, %v2549, 0
  %v2928 = vsel %vm1249, %v2550, 0
  %v2931 = vsel %vm1249, %v2551, 0
  %v2934 = vsel %vm1249, %v2552, 0
  %v2937 = vsel %vm1249, %v2553, 0
  %v2940 = vsel %vm1249, %v2554, 0
  %v2943 = vsel %vm1249, %v2555, 0
  %v2946 = vsel %vm1249, %v2556, 0
  %v2949 = vsel %vm1249, %v2557, 0
  %v2952 = vsel %vm1249, %v2558, 0
  %2954 = vmatprep.subr.mxu0 0.0
  %2955 = vmatpush1.msra.mxu0 0.0
  %2956 = vmatprep.subr.mxu0 0.0
  %2957 = vmatpush1.msra.mxu0 0.0
  %2958 = vmatprep.subr.mxu0 0.0
  %2959 = vmatpush1.msra.mxu0 0.0
  %2960 = vmatprep.subr.mxu0 0.0
  %2961 = vmatpush1.msra.mxu0 0.0
  %2962 = vmatprep.subr.mxu0 0.0
  %2963 = vmatpush1.msra.mxu0 0.0
  %2964 = vmatprep.subr.mxu0 0.0
  %2965 = vmatpush1.msra.mxu0 0.0
  %2966 = vmatprep.subr.mxu0 0.0
  %2967 = vmatpush1.msra.mxu0 0.0
  %2968 = vmatprep.subr.mxu0 0.0
  %2969 = vmatpush1.msra.mxu0 0.0
  %2970 = vmatprep.subr.mxu0 0.0
  %2971 = vmatpush1.msra.mxu0 0.0
  %2972 = vmatprep.subr.mxu0 0.0
  %2973 = vmatpush1.msra.mxu0 0.0
  %2974 = vmatprep.subr.mxu0 0.0
  %2975 = vmatpush1.msra.mxu0 0.0
  %2976 = vmatprep.subr.mxu0 0.0
  %2977 = vmatpush1.msra.mxu0 0.0
  %2978 = vmatprep.subr.mxu0 0.0
  %2979 = vmatpush1.msra.mxu0 %v2562
  %2980 = vmatprep.subr.mxu0 0.0
  %2981 = vmatpush1.msra.mxu0 %v2561
  %2982 = vmatprep.subr.mxu0 0.0
  %2983 = vmatpush1.msra.mxu0 %v2560
  %2984 = vmatprep.subr.mxu0 0.0
  %2985 = vmatpush1.msra.mxu0 %v2559
  %2986 = vmatprep.subr.mxu0 0.0
  %2987 = vmatpush2.msra.mxu0 0.0
  %2988 = vmatprep.subr.mxu0 0.0
  %2989 = vmatpush2.msra.mxu0 0.0
  %2990 = vmatprep.subr.mxu0 0.0
  %2991 = vmatpush2.msra.mxu0 0.0
  %2992 = vmatprep.subr.mxu0 0.0
  %2993 = vmatpush2.msra.mxu0 0.0
  %2994 = vmatprep.subr.mxu0 0.0
  %2995 = vmatpush2.msra.mxu0 0.0
  %2996 = vmatprep.subr.mxu0 0.0
  %2997 = vmatpush2.msra.mxu0 0.0
  %2998 = vmatprep.subr.mxu0 0.0
  %2999 = vmatpush2.msra.mxu0 0.0
  %3000 = vmatprep.subr.mxu0 0.0
  %3001 = vmatpush2.msra.mxu0 0.0
  %3002 = vmatprep.subr.mxu0 0.0
  %3003 = vmatpush2.msra.mxu0 0.0
  %3004 = vmatprep.subr.mxu0 0.0
  %3005 = vmatpush2.msra.mxu0 0.0
  %3006 = vmatprep.subr.mxu0 0.0
  %3007 = vmatpush2.msra.mxu0 0.0
  %3008 = vmatprep.subr.mxu0 0.0
  %3009 = vmatpush2.msra.mxu0 0.0
  %3010 = vmatprep.subr.mxu0 0.0
  %3011 = vmatpush2.msra.mxu0 0.0
  %3012 = vmatprep.subr.mxu0 0.0
  %3013 = vmatpush2.msra.mxu0 0.0
  %3014 = vmatprep.subr.mxu0 0.0
  %3015 = vmatpush2.msra.mxu0 0.0
  %3016 = vmatprep.subr.mxu0 0.0
  %3017 = vmatpush2.msra.mxu0 0.0
  %3018 = vmatprep.mubr.f32.mxu0 0.0
  %3019 = vmatmul.mubr.f32.gmra.mxu0 %v2571
  %v3020 = vpop.f32.mrf.mxu0
  %v3021 = vadd.f32 %v2568, %v3020
  %v3022 = vpop.f32.mrf.mxu0
  %3023 = vmatprep.mubr.f32.mxu0 0.0
  %3024 = vmatmul.mubr.f32.gmra.mxu0 %v2574
  %v3025 = vpop.f32.mrf.mxu0
  %v3026 = vadd.f32 %v2568, %v3025
  %v3027 = vpop.f32.mrf.mxu0
  %3028 = vmatprep.mubr.f32.mxu0 0.0
  %3029 = vmatmul.mubr.f32.gmra.mxu0 %v2577
  %v3030 = vpop.f32.mrf.mxu0
  %v3031 = vadd.f32 %v2568, %v3030
  %v3032 = vpop.f32.mrf.mxu0
  %3033 = vmatprep.mubr.f32.mxu0 0.0
  %3034 = vmatmul.mubr.f32.gmra.mxu0 %v2580
  %v3035 = vpop.f32.mrf.mxu0
  %v3036 = vadd.f32 %v2568, %v3035
  %v3037 = vpop.f32.mrf.mxu0
  %3038 = vmatprep.mubr.f32.mxu0 0.0
  %3039 = vmatmul.mubr.f32.gmra.mxu0 %v2583
  %v3040 = vpop.f32.mrf.mxu0
  %v3041 = vadd.f32 %v2568, %v3040
  %v3042 = vpop.f32.mrf.mxu0
  %3043 = vmatprep.mubr.f32.mxu0 0.0
  %3044 = vmatmul.mubr.f32.gmra.mxu0 %v2586
  %v3045 = vpop.f32.mrf.mxu0
  %v3046 = vadd.f32 %v2568, %v3045
  %v3047 = vpop.f32.mrf.mxu0
  %3048 = vmatprep.mubr.f32.mxu0 0.0
  %3049 = vmatmul.mubr.f32.gmra.mxu0 %v2589
  %v3050 = vpop.f32.mrf.mxu0
  %v3051 = vadd.f32 %v2568, %v3050
  %v3052 = vpop.f32.mrf.mxu0
  %3053 = vmatprep.mubr.f32.mxu0 0.0
  %3054 = vmatmul.mubr.f32.gmra.mxu0 %v2592
  %v3055 = vpop.f32.mrf.mxu0
  %v3056 = vadd.f32 %v2568, %v3055
  %v3057 = vpop.f32.mrf.mxu0
  %3058 = vmatprep.mubr.f32.mxu0 0.0
  %3059 = vmatmul.mubr.f32.gmra.mxu0 %v2595
  %v3060 = vpop.f32.mrf.mxu0
  %v3061 = vadd.f32 %v2568, %v3060
  %v3062 = vpop.f32.mrf.mxu0
  %3063 = vmatprep.mubr.f32.mxu0 0.0
  %3064 = vmatmul.mubr.f32.gmra.mxu0 %v2598
  %v3065 = vpop.f32.mrf.mxu0
  %v3066 = vadd.f32 %v2568, %v3065
  %v3067 = vpop.f32.mrf.mxu0
  %3068 = vmatprep.mubr.f32.mxu0 0.0
  %3069 = vmatmul.mubr.f32.gmra.mxu0 %v2601
  %v3070 = vpop.f32.mrf.mxu0
  %v3071 = vadd.f32 %v2568, %v3070
  %v3072 = vpop.f32.mrf.mxu0
  %3073 = vmatprep.mubr.f32.mxu0 0.0
  %3074 = vmatmul.mubr.f32.gmra.mxu0 %v2604
  %v3075 = vpop.f32.mrf.mxu0
  %v3076 = vadd.f32 %v2568, %v3075
  %v3077 = vpop.f32.mrf.mxu0
  %3078 = vmatprep.mubr.f32.mxu0 0.0
  %3079 = vmatmul.mubr.f32.gmra.mxu0 %v2607
  %v3080 = vpop.f32.mrf.mxu0
  %v3081 = vadd.f32 %v2568, %v3080
  %v3082 = vpop.f32.mrf.mxu0
  %3083 = vmatprep.mubr.f32.mxu0 0.0
  %3084 = vmatmul.mubr.f32.gmra.mxu0 %v2610
  %v3085 = vpop.f32.mrf.mxu0
  %v3086 = vadd.f32 %v2568, %v3085
  %v3087 = vpop.f32.mrf.mxu0
  %3088 = vmatprep.mubr.f32.mxu0 0.0
  %3089 = vmatmul.mubr.f32.gmra.mxu0 %v2613
  %v3090 = vpop.f32.mrf.mxu0
  %v3091 = vadd.f32 %v2568, %v3090
  %v3092 = vpop.f32.mrf.mxu0
  %3093 = vmatprep.mubr.f32.mxu0 0.0
  %3094 = vmatmul.mubr.f32.gmra.mxu0 %v2616
  %v3095 = vpop.f32.mrf.mxu0
  %v3096 = vadd.f32 %v2568, %v3095
  %v3097 = vpop.f32.mrf.mxu0
  %3098 = vmatprep.mubr.f32.mxu0 0.0
  %3099 = vmatmul.mubr.f32.gmra.mxu0 %v2619
  %v3100 = vpop.f32.mrf.mxu0
  %v3101 = vadd.f32 %v2568, %v3100
  %v3102 = vpop.f32.mrf.mxu0
  %3103 = vmatprep.mubr.f32.mxu0 0.0
  %3104 = vmatmul.mubr.f32.gmra.mxu0 %v2622
  %v3105 = vpop.f32.mrf.mxu0
  %v3106 = vadd.f32 %v2568, %v3105
  %v3107 = vpop.f32.mrf.mxu0
  %3108 = vmatprep.mubr.f32.mxu0 0.0
  %3109 = vmatmul.mubr.f32.gmra.mxu0 %v2625
  %v3110 = vpop.f32.mrf.mxu0
  %v3111 = vadd.f32 %v2568, %v3110
  %v3112 = vpop.f32.mrf.mxu0
  %3113 = vmatprep.mubr.f32.mxu0 0.0
  %3114 = vmatmul.mubr.f32.gmra.mxu0 %v2628
  %v3115 = vpop.f32.mrf.mxu0
  %v3116 = vadd.f32 %v2568, %v3115
  %v3117 = vpop.f32.mrf.mxu0
  %3118 = vmatprep.mubr.f32.mxu0 0.0
  %3119 = vmatmul.mubr.f32.gmra.mxu0 %v2631
  %v3120 = vpop.f32.mrf.mxu0
  %v3121 = vadd.f32 %v2568, %v3120
  %v3122 = vpop.f32.mrf.mxu0
  %3123 = vmatprep.mubr.f32.mxu0 0.0
  %3124 = vmatmul.mubr.f32.gmra.mxu0 %v2634
  %v3125 = vpop.f32.mrf.mxu0
  %v3126 = vadd.f32 %v2568, %v3125
  %v3127 = vpop.f32.mrf.mxu0
  %3128 = vmatprep.mubr.f32.mxu0 0.0
  %3129 = vmatmul.mubr.f32.gmra.mxu0 %v2637
  %v3130 = vpop.f32.mrf.mxu0
  %v3131 = vadd.f32 %v2568, %v3130
  %v3132 = vpop.f32.mrf.mxu0
  %3133 = vmatprep.mubr.f32.mxu0 0.0
  %3134 = vmatmul.mubr.f32.gmra.mxu0 %v2640
  %v3135 = vpop.f32.mrf.mxu0
  %v3136 = vadd.f32 %v2568, %v3135
  %v3137 = vpop.f32.mrf.mxu0
  %3138 = vmatprep.mubr.f32.mxu0 0.0
  %3139 = vmatmul.mubr.f32.gmra.mxu0 %v2643
  %v3140 = vpop.f32.mrf.mxu0
  %v3141 = vadd.f32 %v2568, %v3140
  %v3142 = vpop.f32.mrf.mxu0
  %3143 = vmatprep.mubr.f32.mxu0 0.0
  %3144 = vmatmul.mubr.f32.gmra.mxu0 %v2646
  %v3145 = vpop.f32.mrf.mxu0
  %v3146 = vadd.f32 %v2568, %v3145
  %v3147 = vpop.f32.mrf.mxu0
  %3148 = vmatprep.mubr.f32.mxu0 0.0
  %3149 = vmatmul.mubr.f32.gmra.mxu0 %v2649
  %v3150 = vpop.f32.mrf.mxu0
  %v3151 = vadd.f32 %v2568, %v3150
  %v3152 = vpop.f32.mrf.mxu0
  %3153 = vmatprep.mubr.f32.mxu0 0.0
  %3154 = vmatmul.mubr.f32.gmra.mxu0 %v2652
  %v3155 = vpop.f32.mrf.mxu0
  %v3156 = vadd.f32 %v2568, %v3155
  %v3157 = vpop.f32.mrf.mxu0
  %3158 = vmatprep.mubr.f32.mxu0 0.0
  %3159 = vmatmul.mubr.f32.gmra.mxu0 %v2655
  %v3160 = vpop.f32.mrf.mxu0
  %v3161 = vadd.f32 %v2568, %v3160
  %v3162 = vpop.f32.mrf.mxu0
  %3163 = vmatprep.mubr.f32.mxu0 0.0
  %3164 = vmatmul.mubr.f32.gmra.mxu0 %v2658
  %v3165 = vpop.f32.mrf.mxu0
  %v3166 = vadd.f32 %v2568, %v3165
  %v3167 = vpop.f32.mrf.mxu0
  %3168 = vmatprep.mubr.f32.mxu0 0.0
  %3169 = vmatmul.mubr.f32.gmra.mxu0 %v2661
  %v3170 = vpop.f32.mrf.mxu0
  %v3171 = vadd.f32 %v2568, %v3170
  %v3172 = vpop.f32.mrf.mxu0
  %3173 = vmatprep.mubr.f32.mxu0 0.0
  %3174 = vmatmul.mubr.f32.gmra.mxu0 %v2664
  %v3175 = vpop.f32.mrf.mxu0
  %v3176 = vadd.f32 %v2568, %v3175
  %v3177 = vpop.f32.mrf.mxu0
  %3178 = vmatprep.mubr.f32.mxu0 0.0
  %3179 = vmatmul.mubr.f32.gmra.mxu0 %v2667
  %v3180 = vpop.f32.mrf.mxu0
  %v3181 = vadd.f32 %v2568, %v3180
  %v3182 = vpop.f32.mrf.mxu0
  %3183 = vmatprep.mubr.f32.mxu0 0.0
  %3184 = vmatmul.mubr.f32.gmra.mxu0 %v2670
  %v3185 = vpop.f32.mrf.mxu0
  %v3186 = vadd.f32 %v2568, %v3185
  %v3187 = vpop.f32.mrf.mxu0
  %3188 = vmatprep.mubr.f32.mxu0 0.0
  %3189 = vmatmul.mubr.f32.gmra.mxu0 %v2673
  %v3190 = vpop.f32.mrf.mxu0
  %v3191 = vadd.f32 %v2568, %v3190
  %v3192 = vpop.f32.mrf.mxu0
  %3193 = vmatprep.mubr.f32.mxu0 0.0
  %3194 = vmatmul.mubr.f32.gmra.mxu0 %v2676
  %v3195 = vpop.f32.mrf.mxu0
  %v3196 = vadd.f32 %v2568, %v3195
  %v3197 = vpop.f32.mrf.mxu0
  %3198 = vmatprep.mubr.f32.mxu0 0.0
  %3199 = vmatmul.mubr.f32.gmra.mxu0 %v2679
  %v3200 = vpop.f32.mrf.mxu0
  %v3201 = vadd.f32 %v2568, %v3200
  %v3202 = vpop.f32.mrf.mxu0
  %3203 = vmatprep.mubr.f32.mxu0 0.0
  %3204 = vmatmul.mubr.f32.gmra.mxu0 %v2682
  %v3205 = vpop.f32.mrf.mxu0
  %v3206 = vadd.f32 %v2568, %v3205
  %v3207 = vpop.f32.mrf.mxu0
  %3208 = vmatprep.mubr.f32.mxu0 0.0
  %3209 = vmatmul.mubr.f32.gmra.mxu0 %v2685
  %v3210 = vpop.f32.mrf.mxu0
  %v3211 = vadd.f32 %v2568, %v3210
  %v3212 = vpop.f32.mrf.mxu0
  %3213 = vmatprep.mubr.f32.mxu0 0.0
  %3214 = vmatmul.mubr.f32.gmra.mxu0 %v2688
  %v3215 = vpop.f32.mrf.mxu0
  %v3216 = vadd.f32 %v2568, %v3215
  %v3217 = vpop.f32.mrf.mxu0
  %3218 = vmatprep.mubr.f32.mxu0 0.0
  %3219 = vmatmul.mubr.f32.gmra.mxu0 %v2691
  %v3220 = vpop.f32.mrf.mxu0
  %v3221 = vadd.f32 %v2568, %v3220
  %v3222 = vpop.f32.mrf.mxu0
  %3223 = vmatprep.mubr.f32.mxu0 0.0
  %3224 = vmatmul.mubr.f32.gmra.mxu0 %v2694
  %v3225 = vpop.f32.mrf.mxu0
  %v3226 = vadd.f32 %v2568, %v3225
  %v3227 = vpop.f32.mrf.mxu0
  %3228 = vmatprep.mubr.f32.mxu0 0.0
  %3229 = vmatmul.mubr.f32.gmra.mxu0 %v2697
  %v3230 = vpop.f32.mrf.mxu0
  %v3231 = vadd.f32 %v2568, %v3230
  %v3232 = vpop.f32.mrf.mxu0
  %3233 = vmatprep.mubr.f32.mxu0 0.0
  %3234 = vmatmul.mubr.f32.gmra.mxu0 %v2700
  %v3235 = vpop.f32.mrf.mxu0
  %v3236 = vadd.f32 %v2568, %v3235
  %v3237 = vpop.f32.mrf.mxu0
  %3238 = vmatprep.mubr.f32.mxu0 0.0
  %3239 = vmatmul.mubr.f32.gmra.mxu0 %v2703
  %v3240 = vpop.f32.mrf.mxu0
  %v3241 = vadd.f32 %v2568, %v3240
  %v3242 = vpop.f32.mrf.mxu0
  %3243 = vmatprep.mubr.f32.mxu0 0.0
  %3244 = vmatmul.mubr.f32.gmra.mxu0 %v2706
  %v3245 = vpop.f32.mrf.mxu0
  %v3246 = vadd.f32 %v2568, %v3245
  %v3247 = vpop.f32.mrf.mxu0
  %3248 = vmatprep.mubr.f32.mxu0 0.0
  %3249 = vmatmul.mubr.f32.gmra.mxu0 %v2709
  %v3250 = vpop.f32.mrf.mxu0
  %v3251 = vadd.f32 %v2568, %v3250
  %v3252 = vpop.f32.mrf.mxu0
  %3253 = vmatprep.mubr.f32.mxu0 0.0
  %3254 = vmatmul.mubr.f32.gmra.mxu0 %v2712
  %v3255 = vpop.f32.mrf.mxu0
  %v3256 = vadd.f32 %v2568, %v3255
  %v3257 = vpop.f32.mrf.mxu0
  %3258 = vmatprep.mubr.f32.mxu0 0.0
  %3259 = vmatmul.mubr.f32.gmra.mxu0 %v2715
  %v3260 = vpop.f32.mrf.mxu0
  %v3261 = vadd.f32 %v2568, %v3260
  %v3262 = vpop.f32.mrf.mxu0
  %3263 = vmatprep.mubr.f32.mxu0 0.0
  %3264 = vmatmul.mubr.f32.gmra.mxu0 %v2718
  %v3265 = vpop.f32.mrf.mxu0
  %v3266 = vadd.f32 %v2568, %v3265
  %v3267 = vpop.f32.mrf.mxu0
  %3268 = vmatprep.mubr.f32.mxu0 0.0
  %3269 = vmatmul.mubr.f32.gmra.mxu0 %v2721
  %v3270 = vpop.f32.mrf.mxu0
  %v3271 = vadd.f32 %v2568, %v3270
  %v3272 = vpop.f32.mrf.mxu0
  %3273 = vmatprep.mubr.f32.mxu0 0.0
  %3274 = vmatmul.mubr.f32.gmra.mxu0 %v2724
  %v3275 = vpop.f32.mrf.mxu0
  %v3276 = vadd.f32 %v2568, %v3275
  %v3277 = vpop.f32.mrf.mxu0
  %3278 = vmatprep.mubr.f32.mxu0 0.0
  %3279 = vmatmul.mubr.f32.gmra.mxu0 %v2727
  %v3280 = vpop.f32.mrf.mxu0
  %v3281 = vadd.f32 %v2568, %v3280
  %v3282 = vpop.f32.mrf.mxu0
  %3283 = vmatprep.mubr.f32.mxu0 0.0
  %3284 = vmatmul.mubr.f32.gmra.mxu0 %v2730
  %v3285 = vpop.f32.mrf.mxu0
  %v3286 = vadd.f32 %v2568, %v3285
  %v3287 = vpop.f32.mrf.mxu0
  %3288 = vmatprep.mubr.f32.mxu0 0.0
  %3289 = vmatmul.mubr.f32.gmra.mxu0 %v2733
  %v3290 = vpop.f32.mrf.mxu0
  %v3291 = vadd.f32 %v2568, %v3290
  %v3292 = vpop.f32.mrf.mxu0
  %3293 = vmatprep.mubr.f32.mxu0 0.0
  %3294 = vmatmul.mubr.f32.gmra.mxu0 %v2736
  %v3295 = vpop.f32.mrf.mxu0
  %v3296 = vadd.f32 %v2568, %v3295
  %v3297 = vpop.f32.mrf.mxu0
  %3298 = vmatprep.mubr.f32.mxu0 0.0
  %3299 = vmatmul.mubr.f32.gmra.mxu0 %v2739
  %v3300 = vpop.f32.mrf.mxu0
  %v3301 = vadd.f32 %v2568, %v3300
  %v3302 = vpop.f32.mrf.mxu0
  %3303 = vmatprep.mubr.f32.mxu0 0.0
  %3304 = vmatmul.mubr.f32.gmra.mxu0 %v2742
  %v3305 = vpop.f32.mrf.mxu0
  %v3306 = vadd.f32 %v2568, %v3305
  %v3307 = vpop.f32.mrf.mxu0
  %3308 = vmatprep.mubr.f32.mxu0 0.0
  %3309 = vmatmul.mubr.f32.gmra.mxu0 %v2745
  %v3310 = vpop.f32.mrf.mxu0
  %v3311 = vadd.f32 %v2568, %v3310
  %v3312 = vpop.f32.mrf.mxu0
  %3313 = vmatprep.mubr.f32.mxu0 0.0
  %3314 = vmatmul.mubr.f32.gmra.mxu0 %v2748
  %v3315 = vpop.f32.mrf.mxu0
  %v3316 = vadd.f32 %v2568, %v3315
  %v3317 = vpop.f32.mrf.mxu0
  %3318 = vmatprep.mubr.f32.mxu0 0.0
  %3319 = vmatmul.mubr.f32.gmra.mxu0 %v2751
  %v3320 = vpop.f32.mrf.mxu0
  %v3321 = vadd.f32 %v2568, %v3320
  %v3322 = vpop.f32.mrf.mxu0
  %3323 = vmatprep.mubr.f32.mxu0 0.0
  %3324 = vmatmul.mubr.f32.gmra.mxu0 %v2754
  %v3325 = vpop.f32.mrf.mxu0
  %v3326 = vadd.f32 %v2568, %v3325
  %v3327 = vpop.f32.mrf.mxu0
  %3328 = vmatprep.mubr.f32.mxu0 0.0
  %3329 = vmatmul.mubr.f32.gmra.mxu0 %v2757
  %v3330 = vpop.f32.mrf.mxu0
  %v3331 = vadd.f32 %v2568, %v3330
  %v3332 = vpop.f32.mrf.mxu0
  %3333 = vmatprep.mubr.f32.mxu0 0.0
  %3334 = vmatmul.mubr.f32.gmra.mxu0 %v2760
  %v3335 = vpop.f32.mrf.mxu0
  %v3336 = vadd.f32 %v2568, %v3335
  %v3337 = vpop.f32.mrf.mxu0
  %3338 = vmatprep.mubr.f32.mxu0 0.0
  %3339 = vmatmul.mubr.f32.gmra.mxu0 %v2763
  %v3340 = vpop.f32.mrf.mxu0
  %v3341 = vadd.f32 %v2568, %v3340
  %v3342 = vpop.f32.mrf.mxu0
  %3343 = vmatprep.mubr.f32.mxu0 0.0
  %3344 = vmatmul.mubr.f32.gmra.mxu0 %v2766
  %v3345 = vpop.f32.mrf.mxu0
  %v3346 = vadd.f32 %v2568, %v3345
  %v3347 = vpop.f32.mrf.mxu0
  %3348 = vmatprep.mubr.f32.mxu0 0.0
  %3349 = vmatmul.mubr.f32.gmra.mxu0 %v2769
  %v3350 = vpop.f32.mrf.mxu0
  %v3351 = vadd.f32 %v2568, %v3350
  %v3352 = vpop.f32.mrf.mxu0
  %3353 = vmatprep.mubr.f32.mxu0 0.0
  %3354 = vmatmul.mubr.f32.gmra.mxu0 %v2772
  %v3355 = vpop.f32.mrf.mxu0
  %v3356 = vadd.f32 %v2568, %v3355
  %v3357 = vpop.f32.mrf.mxu0
  %3358 = vmatprep.mubr.f32.mxu0 0.0
  %3359 = vmatmul.mubr.f32.gmra.mxu0 %v2775
  %v3360 = vpop.f32.mrf.mxu0
  %v3361 = vadd.f32 %v2568, %v3360
  %v3362 = vpop.f32.mrf.mxu0
  %3363 = vmatprep.mubr.f32.mxu0 0.0
  %3364 = vmatmul.mubr.f32.gmra.mxu0 %v2778
  %v3365 = vpop.f32.mrf.mxu0
  %v3366 = vadd.f32 %v2568, %v3365
  %v3367 = vpop.f32.mrf.mxu0
  %3368 = vmatprep.mubr.f32.mxu0 0.0
  %3369 = vmatmul.mubr.f32.gmra.mxu0 %v2781
  %v3370 = vpop.f32.mrf.mxu0
  %v3371 = vadd.f32 %v2568, %v3370
  %v3372 = vpop.f32.mrf.mxu0
  %3373 = vmatprep.mubr.f32.mxu0 0.0
  %3374 = vmatmul.mubr.f32.gmra.mxu0 %v2784
  %v3375 = vpop.f32.mrf.mxu0
  %v3376 = vadd.f32 %v2568, %v3375
  %v3377 = vpop.f32.mrf.mxu0
  %3378 = vmatprep.mubr.f32.mxu0 0.0
  %3379 = vmatmul.mubr.f32.gmra.mxu0 %v2787
  %v3380 = vpop.f32.mrf.mxu0
  %v3381 = vadd.f32 %v2568, %v3380
  %v3382 = vpop.f32.mrf.mxu0
  %3383 = vmatprep.mubr.f32.mxu0 0.0
  %3384 = vmatmul.mubr.f32.gmra.mxu0 %v2790
  %v3385 = vpop.f32.mrf.mxu0
  %v3386 = vadd.f32 %v2568, %v3385
  %v3387 = vpop.f32.mrf.mxu0
  %3388 = vmatprep.mubr.f32.mxu0 0.0
  %3389 = vmatmul.mubr.f32.gmra.mxu0 %v2793
  %v3390 = vpop.f32.mrf.mxu0
  %v3391 = vadd.f32 %v2568, %v3390
  %v3392 = vpop.f32.mrf.mxu0
  %3393 = vmatprep.mubr.f32.mxu0 0.0
  %3394 = vmatmul.mubr.f32.gmra.mxu0 %v2796
  %v3395 = vpop.f32.mrf.mxu0
  %v3396 = vadd.f32 %v2568, %v3395
  %v3397 = vpop.f32.mrf.mxu0
  %3398 = vmatprep.mubr.f32.mxu0 0.0
  %3399 = vmatmul.mubr.f32.gmra.mxu0 %v2799
  %v3400 = vpop.f32.mrf.mxu0
  %v3401 = vadd.f32 %v2568, %v3400
  %v3402 = vpop.f32.mrf.mxu0
  %3403 = vmatprep.mubr.f32.mxu0 0.0
  %3404 = vmatmul.mubr.f32.gmra.mxu0 %v2802
  %v3405 = vpop.f32.mrf.mxu0
  %v3406 = vadd.f32 %v2568, %v3405
  %v3407 = vpop.f32.mrf.mxu0
  %3408 = vmatprep.mubr.f32.mxu0 0.0
  %3409 = vmatmul.mubr.f32.gmra.mxu0 %v2805
  %v3410 = vpop.f32.mrf.mxu0
  %v3411 = vadd.f32 %v2568, %v3410
  %v3412 = vpop.f32.mrf.mxu0
  %3413 = vmatprep.mubr.f32.mxu0 0.0
  %3414 = vmatmul.mubr.f32.gmra.mxu0 %v2808
  %v3415 = vpop.f32.mrf.mxu0
  %v3416 = vadd.f32 %v2568, %v3415
  %v3417 = vpop.f32.mrf.mxu0
  %3418 = vmatprep.mubr.f32.mxu0 0.0
  %3419 = vmatmul.mubr.f32.gmra.mxu0 %v2811
  %v3420 = vpop.f32.mrf.mxu0
  %v3421 = vadd.f32 %v2568, %v3420
  %v3422 = vpop.f32.mrf.mxu0
  %3423 = vmatprep.mubr.f32.mxu0 0.0
  %3424 = vmatmul.mubr.f32.gmra.mxu0 %v2814
  %v3425 = vpop.f32.mrf.mxu0
  %v3426 = vadd.f32 %v2568, %v3425
  %v3427 = vpop.f32.mrf.mxu0
  %3428 = vmatprep.mubr.f32.mxu0 0.0
  %3429 = vmatmul.mubr.f32.gmra.mxu0 %v2817
  %v3430 = vpop.f32.mrf.mxu0
  %v3431 = vadd.f32 %v2568, %v3430
  %v3432 = vpop.f32.mrf.mxu0
  %3433 = vmatprep.mubr.f32.mxu0 0.0
  %3434 = vmatmul.mubr.f32.gmra.mxu0 %v2820
  %v3435 = vpop.f32.mrf.mxu0
  %v3436 = vadd.f32 %v2568, %v3435
  %v3437 = vpop.f32.mrf.mxu0
  %3438 = vmatprep.mubr.f32.mxu0 0.0
  %3439 = vmatmul.mubr.f32.gmra.mxu0 %v2823
  %v3440 = vpop.f32.mrf.mxu0
  %v3441 = vadd.f32 %v2568, %v3440
  %v3442 = vpop.f32.mrf.mxu0
  %3443 = vmatprep.mubr.f32.mxu0 0.0
  %3444 = vmatmul.mubr.f32.gmra.mxu0 %v2826
  %v3445 = vpop.f32.mrf.mxu0
  %v3446 = vadd.f32 %v2568, %v3445
  %v3447 = vpop.f32.mrf.mxu0
  %3448 = vmatprep.mubr.f32.mxu0 0.0
  %3449 = vmatmul.mubr.f32.gmra.mxu0 %v2829
  %v3450 = vpop.f32.mrf.mxu0
  %v3451 = vadd.f32 %v2568, %v3450
  %v3452 = vpop.f32.mrf.mxu0
  %3453 = vmatprep.mubr.f32.mxu0 0.0
  %3454 = vmatmul.mubr.f32.gmra.mxu0 %v2832
  %v3455 = vpop.f32.mrf.mxu0
  %v3456 = vadd.f32 %v2568, %v3455
  %v3457 = vpop.f32.mrf.mxu0
  %3458 = vmatprep.mubr.f32.mxu0 0.0
  %3459 = vmatmul.mubr.f32.gmra.mxu0 %v2835
  %v3460 = vpop.f32.mrf.mxu0
  %v3461 = vadd.f32 %v2568, %v3460
  %v3462 = vpop.f32.mrf.mxu0
  %3463 = vmatprep.mubr.f32.mxu0 0.0
  %3464 = vmatmul.mubr.f32.gmra.mxu0 %v2838
  %v3465 = vpop.f32.mrf.mxu0
  %v3466 = vadd.f32 %v2568, %v3465
  %v3467 = vpop.f32.mrf.mxu0
  %3468 = vmatprep.mubr.f32.mxu0 0.0
  %3469 = vmatmul.mubr.f32.gmra.mxu0 %v2841
  %v3470 = vpop.f32.mrf.mxu0
  %v3471 = vadd.f32 %v2568, %v3470
  %v3472 = vpop.f32.mrf.mxu0
  %3473 = vmatprep.mubr.f32.mxu0 0.0
  %3474 = vmatmul.mubr.f32.gmra.mxu0 %v2844
  %v3475 = vpop.f32.mrf.mxu0
  %v3476 = vadd.f32 %v2568, %v3475
  %v3477 = vpop.f32.mrf.mxu0
  %3478 = vmatprep.mubr.f32.mxu0 0.0
  %3479 = vmatmul.mubr.f32.gmra.mxu0 %v2847
  %v3480 = vpop.f32.mrf.mxu0
  %v3481 = vadd.f32 %v2568, %v3480
  %v3482 = vpop.f32.mrf.mxu0
  %3483 = vmatprep.mubr.f32.mxu0 0.0
  %3484 = vmatmul.mubr.f32.gmra.mxu0 %v2850
  %v3485 = vpop.f32.mrf.mxu0
  %v3486 = vadd.f32 %v2568, %v3485
  %v3487 = vpop.f32.mrf.mxu0
  %3488 = vmatprep.mubr.f32.mxu0 0.0
  %3489 = vmatmul.mubr.f32.gmra.mxu0 %v2853
  %v3490 = vpop.f32.mrf.mxu0
  %v3491 = vadd.f32 %v2568, %v3490
  %v3492 = vpop.f32.mrf.mxu0
  %3493 = vmatprep.mubr.f32.mxu0 0.0
  %3494 = vmatmul.mubr.f32.gmra.mxu0 %v2856
  %v3495 = vpop.f32.mrf.mxu0
  %v3496 = vadd.f32 %v2568, %v3495
  %v3497 = vpop.f32.mrf.mxu0
  %3498 = vmatprep.mubr.f32.mxu0 0.0
  %3499 = vmatmul.mubr.f32.gmra.mxu0 %v2859
  %v3500 = vpop.f32.mrf.mxu0
  %v3501 = vadd.f32 %v2568, %v3500
  %v3502 = vpop.f32.mrf.mxu0
  %3503 = vmatprep.mubr.f32.mxu0 0.0
  %3504 = vmatmul.mubr.f32.gmra.mxu0 %v2862
  %v3505 = vpop.f32.mrf.mxu0
  %v3506 = vadd.f32 %v2568, %v3505
  %v3507 = vpop.f32.mrf.mxu0
  %3508 = vmatprep.mubr.f32.mxu0 0.0
  %3509 = vmatmul.mubr.f32.gmra.mxu0 %v2865
  %v3510 = vpop.f32.mrf.mxu0
  %v3511 = vadd.f32 %v2568, %v3510
  %v3512 = vpop.f32.mrf.mxu0
  %3513 = vmatprep.mubr.f32.mxu0 0.0
  %3514 = vmatmul.mubr.f32.gmra.mxu0 %v2868
  %v3515 = vpop.f32.mrf.mxu0
  %v3516 = vadd.f32 %v2568, %v3515
  %v3517 = vpop.f32.mrf.mxu0
  %3518 = vmatprep.mubr.f32.mxu0 0.0
  %3519 = vmatmul.mubr.f32.gmra.mxu0 %v2871
  %v3520 = vpop.f32.mrf.mxu0
  %v3521 = vadd.f32 %v2568, %v3520
  %v3522 = vpop.f32.mrf.mxu0
  %3523 = vmatprep.mubr.f32.mxu0 0.0
  %3524 = vmatmul.mubr.f32.gmra.mxu0 %v2874
  %v3525 = vpop.f32.mrf.mxu0
  %v3526 = vadd.f32 %v2568, %v3525
  %v3527 = vpop.f32.mrf.mxu0
  %3528 = vmatprep.mubr.f32.mxu0 0.0
  %3529 = vmatmul.mubr.f32.gmra.mxu0 %v2877
  %v3530 = vpop.f32.mrf.mxu0
  %v3531 = vadd.f32 %v2568, %v3530
  %v3532 = vpop.f32.mrf.mxu0
  %3533 = vmatprep.mubr.f32.mxu0 0.0
  %3534 = vmatmul.mubr.f32.gmra.mxu0 %v2880
  %v3535 = vpop.f32.mrf.mxu0
  %v3536 = vadd.f32 %v2568, %v3535
  %v3537 = vpop.f32.mrf.mxu0
  %3538 = vmatprep.mubr.f32.mxu0 0.0
  %3539 = vmatmul.mubr.f32.gmra.mxu0 %v2883
  %v3540 = vpop.f32.mrf.mxu0
  %v3541 = vadd.f32 %v2568, %v3540
  %v3542 = vpop.f32.mrf.mxu0
  %3543 = vmatprep.mubr.f32.mxu0 0.0
  %3544 = vmatmul.mubr.f32.gmra.mxu0 %v2886
  %v3545 = vpop.f32.mrf.mxu0
  %v3546 = vadd.f32 %v2568, %v3545
  %v3547 = vpop.f32.mrf.mxu0
  %3548 = vmatprep.mubr.f32.mxu0 0.0
  %3549 = vmatmul.mubr.f32.gmra.mxu0 %v2889
  %v3550 = vpop.f32.mrf.mxu0
  %v3551 = vadd.f32 %v2568, %v3550
  %v3552 = vpop.f32.mrf.mxu0
  %3553 = vmatprep.mubr.f32.mxu0 0.0
  %3554 = vmatmul.mubr.f32.gmra.mxu0 %v2892
  %v3555 = vpop.f32.mrf.mxu0
  %v3556 = vadd.f32 %v2568, %v3555
  %v3557 = vpop.f32.mrf.mxu0
  %3558 = vmatprep.mubr.f32.mxu0 0.0
  %3559 = vmatmul.mubr.f32.gmra.mxu0 %v2895
  %v3560 = vpop.f32.mrf.mxu0
  %v3561 = vadd.f32 %v2568, %v3560
  %v3562 = vpop.f32.mrf.mxu0
  %3563 = vmatprep.mubr.f32.mxu0 0.0
  %3564 = vmatmul.mubr.f32.gmra.mxu0 %v2898
  %v3565 = vpop.f32.mrf.mxu0
  %v3566 = vadd.f32 %v2568, %v3565
  %v3567 = vpop.f32.mrf.mxu0
  %3568 = vmatprep.mubr.f32.mxu0 0.0
  %3569 = vmatmul.mubr.f32.gmra.mxu0 %v2901
  %v3570 = vpop.f32.mrf.mxu0
  %v3571 = vadd.f32 %v2568, %v3570
  %v3572 = vpop.f32.mrf.mxu0
  %3573 = vmatprep.mubr.f32.mxu0 0.0
  %3574 = vmatmul.mubr.f32.gmra.mxu0 %v2904
  %v3575 = vpop.f32.mrf.mxu0
  %v3576 = vadd.f32 %v2568, %v3575
  %v3577 = vpop.f32.mrf.mxu0
  %3578 = vmatprep.mubr.f32.mxu0 0.0
  %3579 = vmatmul.mubr.f32.gmra.mxu0 %v2907
  %v3580 = vpop.f32.mrf.mxu0
  %v3581 = vadd.f32 %v2568, %v3580
  %v3582 = vpop.f32.mrf.mxu0
  %3583 = vmatprep.mubr.f32.mxu0 0.0
  %3584 = vmatmul.mubr.f32.gmra.mxu0 %v2910
  %v3585 = vpop.f32.mrf.mxu0
  %v3586 = vadd.f32 %v2568, %v3585
  %v3587 = vpop.f32.mrf.mxu0
  %3588 = vmatprep.mubr.f32.mxu0 0.0
  %3589 = vmatmul.mubr.f32.gmra.mxu0 %v2913
  %v3590 = vpop.f32.mrf.mxu0
  %v3591 = vadd.f32 %v2568, %v3590
  %v3592 = vpop.f32.mrf.mxu0
  %3593 = vmatprep.mubr.f32.mxu0 0.0
  %3594 = vmatmul.mubr.f32.gmra.mxu0 %v2916
  %v3595 = vpop.f32.mrf.mxu0
  %v3596 = vadd.f32 %v2568, %v3595
  %v3597 = vpop.f32.mrf.mxu0
  %3598 = vmatprep.mubr.f32.mxu0 0.0
  %3599 = vmatmul.mubr.f32.gmra.mxu0 %v2919
  %v3600 = vpop.f32.mrf.mxu0
  %v3601 = vadd.f32 %v2568, %v3600
  %v3602 = vpop.f32.mrf.mxu0
  %3603 = vmatprep.mubr.f32.mxu0 0.0
  %3604 = vmatmul.mubr.f32.gmra.mxu0 %v2922
  %v3605 = vpop.f32.mrf.mxu0
  %v3606 = vadd.f32 %v2568, %v3605
  %v3607 = vpop.f32.mrf.mxu0
  %3608 = vmatprep.mubr.f32.mxu0 0.0
  %3609 = vmatmul.mubr.f32.gmra.mxu0 %v2925
  %v3610 = vpop.f32.mrf.mxu0
  %v3611 = vadd.f32 %v2568, %v3610
  %v3612 = vpop.f32.mrf.mxu0
  %3613 = vmatprep.mubr.f32.mxu0 0.0
  %3614 = vmatmul.mubr.f32.gmra.mxu0 %v2928
  %v3615 = vpop.f32.mrf.mxu0
  %v3616 = vadd.f32 %v2568, %v3615
  %v3617 = vpop.f32.mrf.mxu0
  %3618 = vmatprep.mubr.f32.mxu0 0.0
  %3619 = vmatmul.mubr.f32.gmra.mxu0 %v2931
  %v3620 = vpop.f32.mrf.mxu0
  %v3621 = vadd.f32 %v2568, %v3620
  %v3622 = vpop.f32.mrf.mxu0
  %3623 = vmatprep.mubr.f32.mxu0 0.0
  %3624 = vmatmul.mubr.f32.gmra.mxu0 %v2934
  %v3625 = vpop.f32.mrf.mxu0
  %v3626 = vadd.f32 %v2568, %v3625
  %v3627 = vpop.f32.mrf.mxu0
  %3628 = vmatprep.mubr.f32.mxu0 0.0
  %3629 = vmatmul.mubr.f32.gmra.mxu0 %v2937
  %v3630 = vpop.f32.mrf.mxu0
  %v3631 = vadd.f32 %v2568, %v3630
  %v3632 = vpop.f32.mrf.mxu0
  %3633 = vmatprep.mubr.f32.mxu0 0.0
  %3634 = vmatmul.mubr.f32.gmra.mxu0 %v2940
  %v3635 = vpop.f32.mrf.mxu0
  %v3636 = vadd.f32 %v2568, %v3635
  %v3637 = vpop.f32.mrf.mxu0
  %3638 = vmatprep.mubr.f32.mxu0 0.0
  %3639 = vmatmul.mubr.f32.gmra.mxu0 %v2943
  %v3640 = vpop.f32.mrf.mxu0
  %v3641 = vadd.f32 %v2568, %v3640
  %v3642 = vpop.f32.mrf.mxu0
  %3643 = vmatprep.mubr.f32.mxu0 0.0
  %3644 = vmatmul.mubr.f32.gmra.mxu0 %v2946
  %v3645 = vpop.f32.mrf.mxu0
  %v3646 = vadd.f32 %v2568, %v3645
  %v3647 = vpop.f32.mrf.mxu0
  %3648 = vmatprep.mubr.f32.mxu0 0.0
  %3649 = vmatmul.mubr.f32.gmra.mxu0 %v2949
  %v3650 = vpop.f32.mrf.mxu0
  %v3651 = vadd.f32 %v2568, %v3650
  %v3652 = vpop.f32.mrf.mxu0
  %3653 = vmatprep.mubr.f32.mxu0 0.0
  %3654 = vmatmul.mubr.f32.gmra.mxu0 %v2952
  %v3655 = vpop.f32.mrf.mxu0
  %v3656 = vadd.f32 %v2568, %v3655
  %v3657 = vpop.f32.mrf.mxu0
  %3658 = vdwg.mxu0
  %3659 = vst.msk [vmem:[%s6] sm:$0xff] %vm1249, %v3021
  %3660 = vst.msk [vmem:[%s6 + $0x8] sm:$0xff] %vm1249, %v3026
  %3661 = vst.msk [vmem:[%s6 + $0x10] sm:$0xff] %vm1249, %v3031
  %3662 = vst.msk [vmem:[%s6 + $0x18] sm:$0xff] %vm1249, %v3036
  %3663 = vst.msk [vmem:[%s6 + $0x20] sm:$0xff] %vm1249, %v3041
  %3664 = vst.msk [vmem:[%s6 + $0x28] sm:$0xff] %vm1249, %v3046
  %3665 = vst.msk [vmem:[%s6 + $0x30] sm:$0xff] %vm1249, %v3051
  %3666 = vst.msk [vmem:[%s6 + $0x38] sm:$0xff] %vm1249, %v3056
  %3667 = vst.msk [vmem:[%s6 + $0x40] sm:$0xff] %vm1249, %v3061
  %3668 = vst.msk [vmem:[%s6 + $0x48] sm:$0xff] %vm1249, %v3066
  %3669 = vst.msk [vmem:[%s6 + $0x50] sm:$0xff] %vm1249, %v3071
  %3670 = vst.msk [vmem:[%s6 + $0x58] sm:$0xff] %vm1249, %v3076
  %3671 = vst.msk [vmem:[%s6 + $0x60] sm:$0xff] %vm1249, %v3081
  %3672 = vst.msk [vmem:[%s6 + $0x68] sm:$0xff] %vm1249, %v3086
  %3673 = vst.msk [vmem:[%s6 + $0x70] sm:$0xff] %vm1249, %v3091
  %3674 = vst.msk [vmem:[%s6 + $0x78] sm:$0xff] %vm1249, %v3096
  %3675 = vst.msk [vmem:[%s6 + $0x80] sm:$0xff] %vm1249, %v3101
  %3676 = vst.msk [vmem:[%s6 + $0x88] sm:$0xff] %vm1249, %v3106
  %3677 = vst.msk [vmem:[%s6 + $0x90] sm:$0xff] %vm1249, %v3111
  %3678 = vst.msk [vmem:[%s6 + $0x98] sm:$0xff] %vm1249, %v3116
  %3679 = vst.msk [vmem:[%s6 + $0xa0] sm:$0xff] %vm1249, %v3121
  %3680 = vst.msk [vmem:[%s6 + $0xa8] sm:$0xff] %vm1249, %v3126
  %3681 = vst.msk [vmem:[%s6 + $0xb0] sm:$0xff] %vm1249, %v3131
  %3682 = vst.msk [vmem:[%s6 + $0xb8] sm:$0xff] %vm1249, %v3136
  %3683 = vst.msk [vmem:[%s6 + $0xc0] sm:$0xff] %vm1249, %v3141
  %3684 = vst.msk [vmem:[%s6 + $0xc8] sm:$0xff] %vm1249, %v3146
  %3685 = vst.msk [vmem:[%s6 + $0xd0] sm:$0xff] %vm1249, %v3151
  %3686 = vst.msk [vmem:[%s6 + $0xd8] sm:$0xff] %vm1249, %v3156
  %3687 = vst.msk [vmem:[%s6 + $0xe0] sm:$0xff] %vm1249, %v3161
  %3688 = vst.msk [vmem:[%s6 + $0xe8] sm:$0xff] %vm1249, %v3166
  %3689 = vst.msk [vmem:[%s6 + $0xf0] sm:$0xff] %vm1249, %v3171
  %3690 = vst.msk [vmem:[%s6 + $0xf8] sm:$0xff] %vm1249, %v3176
  %3691 = vst.msk [vmem:[%s6 + $0x100] sm:$0xff] %vm1249, %v3181
  %3692 = vst.msk [vmem:[%s6 + $0x108] sm:$0xff] %vm1249, %v3186
  %3693 = vst.msk [vmem:[%s6 + $0x110] sm:$0xff] %vm1249, %v3191
  %3694 = vst.msk [vmem:[%s6 + $0x118] sm:$0xff] %vm1249, %v3196
  %3695 = vst.msk [vmem:[%s6 + $0x120] sm:$0xff] %vm1249, %v3201
  %3696 = vst.msk [vmem:[%s6 + $0x128] sm:$0xff] %vm1249, %v3206
  %3697 = vst.msk [vmem:[%s6 + $0x130] sm:$0xff] %vm1249, %v3211
  %3698 = vst.msk [vmem:[%s6 + $0x138] sm:$0xff] %vm1249, %v3216
  %3699 = vst.msk [vmem:[%s6 + $0x140] sm:$0xff] %vm1249, %v3221
  %3700 = vst.msk [vmem:[%s6 + $0x148] sm:$0xff] %vm1249, %v3226
  %3701 = vst.msk [vmem:[%s6 + $0x150] sm:$0xff] %vm1249, %v3231
  %3702 = vst.msk [vmem:[%s6 + $0x158] sm:$0xff] %vm1249, %v3236
  %3703 = vst.msk [vmem:[%s6 + $0x160] sm:$0xff] %vm1249, %v3241
  %3704 = vst.msk [vmem:[%s6 + $0x168] sm:$0xff] %vm1249, %v3246
  %3705 = vst.msk [vmem:[%s6 + $0x170] sm:$0xff] %vm1249, %v3251
  %3706 = vst.msk [vmem:[%s6 + $0x178] sm:$0xff] %vm1249, %v3256
  %3707 = vst.msk [vmem:[%s6 + $0x180] sm:$0xff] %vm1249, %v3261
  %3708 = vst.msk [vmem:[%s6 + $0x188] sm:$0xff] %vm1249, %v3266
  %3709 = vst.msk [vmem:[%s6 + $0x190] sm:$0xff] %vm1249, %v3271
  %3710 = vst.msk [vmem:[%s6 + $0x198] sm:$0xff] %vm1249, %v3276
  %3711 = vst.msk [vmem:[%s6 + $0x1a0] sm:$0xff] %vm1249, %v3281
  %3712 = vst.msk [vmem:[%s6 + $0x1a8] sm:$0xff] %vm1249, %v3286
  %3713 = vst.msk [vmem:[%s6 + $0x1b0] sm:$0xff] %vm1249, %v3291
  %3714 = vst.msk [vmem:[%s6 + $0x1b8] sm:$0xff] %vm1249, %v3296
  %3715 = vst.msk [vmem:[%s6 + $0x1c0] sm:$0xff] %vm1249, %v3301
  %3716 = vst.msk [vmem:[%s6 + $0x1c8] sm:$0xff] %vm1249, %v3306
  %3717 = vst.msk [vmem:[%s6 + $0x1d0] sm:$0xff] %vm1249, %v3311
  %3718 = vst.msk [vmem:[%s6 + $0x1d8] sm:$0xff] %vm1249, %v3316
  %3719 = vst.msk [vmem:[%s6 + $0x1e0] sm:$0xff] %vm1249, %v3321
  %3720 = vst.msk [vmem:[%s6 + $0x1e8] sm:$0xff] %vm1249, %v3326
  %3721 = vst.msk [vmem:[%s6 + $0x1f0] sm:$0xff] %vm1249, %v3331
  %3722 = vst.msk [vmem:[%s6 + $0x1f8] sm:$0xff] %vm1249, %v3336
  %3723 = vst.msk [vmem:[%s6 + $0x200] sm:$0xff] %vm1249, %v3341
  %3724 = vst.msk [vmem:[%s6 + $0x208] sm:$0xff] %vm1249, %v3346
  %3725 = vst.msk [vmem:[%s6 + $0x210] sm:$0xff] %vm1249, %v3351
  %3726 = vst.msk [vmem:[%s6 + $0x218] sm:$0xff] %vm1249, %v3356
  %3727 = vst.msk [vmem:[%s6 + $0x220] sm:$0xff] %vm1249, %v3361
  %3728 = vst.msk [vmem:[%s6 + $0x228] sm:$0xff] %vm1249, %v3366
  %3729 = vst.msk [vmem:[%s6 + $0x230] sm:$0xff] %vm1249, %v3371
  %3730 = vst.msk [vmem:[%s6 + $0x238] sm:$0xff] %vm1249, %v3376
  %3731 = vst.msk [vmem:[%s6 + $0x240] sm:$0xff] %vm1249, %v3381
  %3732 = vst.msk [vmem:[%s6 + $0x248] sm:$0xff] %vm1249, %v3386
  %3733 = vst.msk [vmem:[%s6 + $0x250] sm:$0xff] %vm1249, %v3391
  %3734 = vst.msk [vmem:[%s6 + $0x258] sm:$0xff] %vm1249, %v3396
  %3735 = vst.msk [vmem:[%s6 + $0x260] sm:$0xff] %vm1249, %v3401
  %3736 = vst.msk [vmem:[%s6 + $0x268] sm:$0xff] %vm1249, %v3406
  %3737 = vst.msk [vmem:[%s6 + $0x270] sm:$0xff] %vm1249, %v3411
  %3738 = vst.msk [vmem:[%s6 + $0x278] sm:$0xff] %vm1249, %v3416
  %3739 = vst.msk [vmem:[%s6 + $0x280] sm:$0xff] %vm1249, %v3421
  %3740 = vst.msk [vmem:[%s6 + $0x288] sm:$0xff] %vm1249, %v3426
  %3741 = vst.msk [vmem:[%s6 + $0x290] sm:$0xff] %vm1249, %v3431
  %3742 = vst.msk [vmem:[%s6 + $0x298] sm:$0xff] %vm1249, %v3436
  %3743 = vst.msk [vmem:[%s6 + $0x2a0] sm:$0xff] %vm1249, %v3441
  %3744 = vst.msk [vmem:[%s6 + $0x2a8] sm:$0xff] %vm1249, %v3446
  %3745 = vst.msk [vmem:[%s6 + $0x2b0] sm:$0xff] %vm1249, %v3451
  %3746 = vst.msk [vmem:[%s6 + $0x2b8] sm:$0xff] %vm1249, %v3456
  %3747 = vst.msk [vmem:[%s6 + $0x2c0] sm:$0xff] %vm1249, %v3461
  %3748 = vst.msk [vmem:[%s6 + $0x2c8] sm:$0xff] %vm1249, %v3466
  %3749 = vst.msk [vmem:[%s6 + $0x2d0] sm:$0xff] %vm1249, %v3471
  %3750 = vst.msk [vmem:[%s6 + $0x2d8] sm:$0xff] %vm1249, %v3476
  %3751 = vst.msk [vmem:[%s6 + $0x2e0] sm:$0xff] %vm1249, %v3481
  %3752 = vst.msk [vmem:[%s6 + $0x2e8] sm:$0xff] %vm1249, %v3486
  %3753 = vst.msk [vmem:[%s6 + $0x2f0] sm:$0xff] %vm1249, %v3491
  %3754 = vst.msk [vmem:[%s6 + $0x2f8] sm:$0xff] %vm1249, %v3496
  %3755 = vst.msk [vmem:[%s6 + $0x300] sm:$0xff] %vm1249, %v3501
  %3756 = vst.msk [vmem:[%s6 + $0x308] sm:$0xff] %vm1249, %v3506
  %3757 = vst.msk [vmem:[%s6 + $0x310] sm:$0xff] %vm1249, %v3511
  %3758 = vst.msk [vmem:[%s6 + $0x318] sm:$0xff] %vm1249, %v3516
  %3759 = vst.msk [vmem:[%s6 + $0x320] sm:$0xff] %vm1249, %v3521
  %3760 = vst.msk [vmem:[%s6 + $0x328] sm:$0xff] %vm1249, %v3526
  %3761 = vst.msk [vmem:[%s6 + $0x330] sm:$0xff] %vm1249, %v3531
  %3762 = vst.msk [vmem:[%s6 + $0x338] sm:$0xff] %vm1249, %v3536
  %3763 = vst.msk [vmem:[%s6 + $0x340] sm:$0xff] %vm1249, %v3541
  %3764 = vst.msk [vmem:[%s6 + $0x348] sm:$0xff] %vm1249, %v3546
  %3765 = vst.msk [vmem:[%s6 + $0x350] sm:$0xff] %vm1249, %v3551
  %3766 = vst.msk [vmem:[%s6 + $0x358] sm:$0xff] %vm1249, %v3556
  %3767 = vst.msk [vmem:[%s6 + $0x360] sm:$0xff] %vm1249, %v3561
  %3768 = vst.msk [vmem:[%s6 + $0x368] sm:$0xff] %vm1249, %v3566
  %3769 = vst.msk [vmem:[%s6 + $0x370] sm:$0xff] %vm1249, %v3571
  %3770 = vst.msk [vmem:[%s6 + $0x378] sm:$0xff] %vm1249, %v3576
  %3771 = vst.msk [vmem:[%s6 + $0x380] sm:$0xff] %vm1249, %v3581
  %3772 = vst.msk [vmem:[%s6 + $0x388] sm:$0xff] %vm1249, %v3586
  %3773 = vst.msk [vmem:[%s6 + $0x390] sm:$0xff] %vm1249, %v3591
  %3774 = vst.msk [vmem:[%s6 + $0x398] sm:$0xff] %vm1249, %v3596
  %3775 = vst.msk [vmem:[%s6 + $0x3a0] sm:$0xff] %vm1249, %v3601
  %3776 = vst.msk [vmem:[%s6 + $0x3a8] sm:$0xff] %vm1249, %v3606
  %3777 = vst.msk [vmem:[%s6 + $0x3b0] sm:$0xff] %vm1249, %v3611
  %3778 = vst.msk [vmem:[%s6 + $0x3b8] sm:$0xff] %vm1249, %v3616
  %3779 = vst.msk [vmem:[%s6 + $0x3c0] sm:$0xff] %vm1249, %v3621
  %3780 = vst.msk [vmem:[%s6 + $0x3c8] sm:$0xff] %vm1249, %v3626
  %3781 = vst.msk [vmem:[%s6 + $0x3d0] sm:$0xff] %vm1249, %v3631
  %3782 = vst.msk [vmem:[%s6 + $0x3d8] sm:$0xff] %vm1249, %v3636
  %3783 = vst.msk [vmem:[%s6 + $0x3e0] sm:$0xff] %vm1249, %v3641
  %3784 = vst.msk [vmem:[%s6 + $0x3e8] sm:$0xff] %vm1249, %v3646
  %3785 = vst.msk [vmem:[%s6 + $0x3f0] sm:$0xff] %vm1249, %v3651
  %3786 = vst.msk [vmem:[%s6 + $0x3f8] sm:$0xff] %vm1249, %v3656
  // Predicated region
  $region26: #{model_forward.3} parent=0 // pred_check
    _
  $region27: #{model_forward.3} parent=0 // pred_check_branch
    %3788 = sbr.rel (0) target = $region29
  $region28: #{model_forward.3} parent=0 // pred_region
    _
  $region29: #{model_forward.3} parent=0 // pred_fallthru
    _
  // Predicated region
  $region30: #{model_forward.3} parent=0 // pred_check
    _
  $region31: #{model_forward.3} parent=0 // pred_check_branch
    %3790 = sbr.rel (0) target = $region33
  $region32: #{model_forward.3} parent=0 // pred_region
    _
  $region33: #{model_forward.3} parent=0 // pred_fallthru
    _

// kernel: model_forward.5
$region0: #{model_forward.5}
  #allocation0 [shape = 'u32[]', space=smem, size = 0x4, offset = 0x4, fixed_abs, tag = 'smem constant byte address 0x4 - core index']
  #allocation1 [shape = 'u32[144,128]{1,0:T(1,128)}', space=vmem, size = 0x12000, scoped, tag = 'internal scratch']
  %s0 = inlined_call_operand.vmem [shape: f32[49,288], index: 0, kind: input, shape index: {}]
  %s1 = inlined_call_operand.vmem [shape: f32[288,64], index: 1, kind: input, shape index: {}]
  %s2 = inlined_call_operand.vmem [shape: f32[1,64], index: 2, kind: input, shape index: {}]
  %s3 = inlined_call_operand.vmem [shape: f32[1,64], index: 3, kind: input, shape index: {}]
  %s4 = inlined_call_operand.vmem [shape: f32[49,64], index: 4, kind: output, shape index: {}]
  %s5 = sld [smem:[#allocation0]]
  $region26: #{model_forward.5} parent=0
    _
  %s7 = ssub.s32 1, %s5
  %s8 = scalar_select 0, %s7, %s5
  // Predicated region
  $region2: #{model_forward.5} parent=0 // pred_check
    _
  $region3: #{model_forward.5} parent=0 // pred_check_branch
    %10 = sbr.rel (0) target = $region5
  $region4: #{model_forward.5} parent=0 // pred_region
    _
  $region5: #{model_forward.5} parent=0 // pred_fallthru
    _
  // Predicated region
  $region6: #{model_forward.5} parent=0 // pred_check
    _
  $region7: #{model_forward.5} parent=0 // pred_check_branch
    %12 = sbr.rel (0) target = $region9
  $region8: #{model_forward.5} parent=0 // pred_region
    _
  $region9: #{model_forward.5} parent=0 // pred_fallthru
    _
  // Predicated region
  $region10: #{model_forward.5} parent=0 // pred_check
    _
  $region11: #{model_forward.5} parent=0 // pred_check_branch
    %14 = sbr.rel (0) target = $region13
  $region12: #{model_forward.5} parent=0 // pred_region
    _
  $region13: #{model_forward.5} parent=0 // pred_fallthru
    _
  // Predicated region
  $region14: #{model_forward.5} parent=0 // pred_check
    _
  $region15: #{model_forward.5} parent=0 // pred_check_branch
    %16 = sbr.rel (0) target = $region17
  $region16: #{model_forward.5} parent=0 // pred_region
    _
  $region17: #{model_forward.5} parent=0 // pred_fallthru
    _
  %v17 = vld [vmem:[%s0] sm:$0xff]
  %v18 = vld [vmem:[%s0 + $0x8] sm:$0xff]
  %v19 = vld [vmem:[%s0 + $0x10] sm:$0xff]
  %v20 = vld [vmem:[%s0 + $0x18] sm:$0xff]
  %v21 = vld [vmem:[%s0 + $0x20] sm:$0xff]
  %v22 = vld [vmem:[%s0 + $0x28] sm:$0xff]
  %v23 = vld [vmem:[%s0 + $0x30] sm:$0xff]
  %v24 = vld [vmem:[%s0 + $0x38] sm:$0xff]
  %v25 = vld [vmem:[%s0 + $0x40] sm:$0xff]
  %v26 = vld [vmem:[%s0 + $0x48] sm:$0xff]
  %v27 = vld [vmem:[%s0 + $0x50] sm:$0xff]
  %v28 = vld [vmem:[%s0 + $0x58] sm:$0xff]
  %v29 = vld [vmem:[%s0 + $0x60] sm:$0xff]
  %v30 = vld [vmem:[%s0 + $0x68] sm:$0xff]
  %v31 = vld [vmem:[%s0 + $0x70] sm:$0xff]
  %v32 = vld [vmem:[%s0 + $0x78] sm:$0xff]
  %v33 = vld [vmem:[%s0 + $0x80] sm:$0xff]
  %v34 = vld [vmem:[%s0 + $0x88] sm:$0xff]
  %v35 = vld [vmem:[%s0 + $0x90] sm:$0x1]
  %v36 = vld [vmem:[%s0 + $0x98] sm:$0x1]
  %v37 = vld [vmem:[%s0 + $0xa0] sm:$0x1]
  %v38 = vld [vmem:[%s1] sm:$0xff]
  %v39 = vld [vmem:[%s1 + $0x8] sm:$0xff]
  %v40 = vld [vmem:[%s1 + $0x10] sm:$0xff]
  %v41 = vld [vmem:[%s1 + $0x18] sm:$0xff]
  %v42 = vld [vmem:[%s1 + $0x20] sm:$0xff]
  %v43 = vld [vmem:[%s1 + $0x28] sm:$0xff]
  %v44 = vld [vmem:[%s1 + $0x30] sm:$0xff]
  %v45 = vld [vmem:[%s1 + $0x38] sm:$0xff]
  %v46 = vld [vmem:[%s1 + $0x40] sm:$0xff]
  %v47 = vld [vmem:[%s1 + $0x48] sm:$0xff]
  %v48 = vld [vmem:[%s1 + $0x50] sm:$0xff]
  %v49 = vld [vmem:[%s1 + $0x58] sm:$0xff]
  %v50 = vld [vmem:[%s1 + $0x60] sm:$0xff]
  %v51 = vld [vmem:[%s1 + $0x68] sm:$0xff]
  %v52 = vld [vmem:[%s1 + $0x70] sm:$0xff]
  %v53 = vld [vmem:[%s1 + $0x78] sm:$0xff]
  %v54 = vld [vmem:[%s1 + $0x80] sm:$0xff]
  %v55 = vld [vmem:[%s1 + $0x88] sm:$0xff]
  %v56 = vld [vmem:[%s1 + $0x90] sm:$0xff]
  %v57 = vld [vmem:[%s1 + $0x98] sm:$0xff]
  %v58 = vld [vmem:[%s1 + $0xa0] sm:$0xff]
  %v59 = vld [vmem:[%s1 + $0xa8] sm:$0xff]
  %v60 = vld [vmem:[%s1 + $0xb0] sm:$0xff]
  %v61 = vld [vmem:[%s1 + $0xb8] sm:$0xff]
  %v62 = vld [vmem:[%s1 + $0xc0] sm:$0xff]
  %v63 = vld [vmem:[%s1 + $0xc8] sm:$0xff]
  %v64 = vld [vmem:[%s1 + $0xd0] sm:$0xff]
  %v65 = vld [vmem:[%s1 + $0xd8] sm:$0xff]
  %v66 = vld [vmem:[%s1 + $0xe0] sm:$0xff]
  %v67 = vld [vmem:[%s1 + $0xe8] sm:$0xff]
  %v68 = vld [vmem:[%s1 + $0xf0] sm:$0xff]
  %v69 = vld [vmem:[%s1 + $0xf8] sm:$0xff]
  %v70 = vld [vmem:[%s1 + $0x100] sm:$0xff]
  %v71 = vld [vmem:[%s1 + $0x108] sm:$0xff]
  %v72 = vld [vmem:[%s1 + $0x110] sm:$0xff]
  %v73 = vld [vmem:[%s1 + $0x118] sm:$0xff]
  %vm74 = vcmask 261120
  %v76 = vsel %vm74, %v19, 0
  %v79 = vsel %vm74, %v22, 0
  %v82 = vsel %vm74, %v25, 0
  %v85 = vsel %vm74, %v28, 0
  %v88 = vsel %vm74, %v31, 0
  %v91 = vsel %vm74, %v34, 0
  %v94 = vsel %vm74, %v37, 0
  %96 = vmatprep.subr.mxu0 0.0
  %97 = vmatpush1.msra.mxu0 %v53
  %98 = vmatprep.subr.mxu0 0.0
  %99 = vmatpush1.msra.mxu0 %v52
  %100 = vmatprep.subr.mxu0 0.0
  %101 = vmatpush1.msra.mxu0 %v51
  %102 = vmatprep.subr.mxu0 0.0
  %103 = vmatpush1.msra.mxu0 %v50
  %104 = vmatprep.subr.mxu0 0.0
  %105 = vmatpush1.msra.mxu0 %v49
  %106 = vmatprep.subr.mxu0 0.0
  %107 = vmatpush1.msra.mxu0 %v48
  %108 = vmatprep.subr.mxu0 0.0
  %109 = vmatpush1.msra.mxu0 %v47
  %110 = vmatprep.subr.mxu0 0.0
  %111 = vmatpush1.msra.mxu0 %v46
  %112 = vmatprep.subr.mxu0 0.0
  %113 = vmatpush1.msra.mxu0 %v45
  %114 = vmatprep.subr.mxu0 0.0
  %115 = vmatpush1.msra.mxu0 %v44
  %116 = vmatprep.subr.mxu0 0.0
  %117 = vmatpush1.msra.mxu0 %v43
  %118 = vmatprep.subr.mxu0 0.0
  %119 = vmatpush1.msra.mxu0 %v42
  %120 = vmatprep.subr.mxu0 0.0
  %121 = vmatpush1.msra.mxu0 %v41
  %122 = vmatprep.subr.mxu0 0.0
  %123 = vmatpush1.msra.mxu0 %v40
  %124 = vmatprep.subr.mxu0 0.0
  %125 = vmatpush1.msra.mxu0 %v39
  %126 = vmatprep.subr.mxu0 0.0
  %127 = vmatpush1.msra.mxu0 %v38
  %128 = vmatprep.subr.mxu0 0.0
  %129 = vmatpush2.msra.mxu0 %v69
  %130 = vmatprep.subr.mxu0 0.0
  %131 = vmatpush2.msra.mxu0 %v68
  %132 = vmatprep.subr.mxu0 0.0
  %133 = vmatpush2.msra.mxu0 %v67
  %134 = vmatprep.subr.mxu0 0.0
  %135 = vmatpush2.msra.mxu0 %v66
  %136 = vmatprep.subr.mxu0 0.0
  %137 = vmatpush2.msra.mxu0 %v65
  %138 = vmatprep.subr.mxu0 0.0
  %139 = vmatpush2.msra.mxu0 %v64
  %140 = vmatprep.subr.mxu0 0.0
  %141 = vmatpush2.msra.mxu0 %v63
  %142 = vmatprep.subr.mxu0 0.0
  %143 = vmatpush2.msra.mxu0 %v62
  %144 = vmatprep.subr.mxu0 0.0
  %145 = vmatpush2.msra.mxu0 %v61
  %146 = vmatprep.subr.mxu0 0.0
  %147 = vmatpush2.msra.mxu0 %v60
  %148 = vmatprep.subr.mxu0 0.0
  %149 = vmatpush2.msra.mxu0 %v59
  %150 = vmatprep.subr.mxu0 0.0
  %151 = vmatpush2.msra.mxu0 %v58
  %152 = vmatprep.subr.mxu0 0.0
  %153 = vmatpush2.msra.mxu0 %v57
  %154 = vmatprep.subr.mxu0 0.0
  %155 = vmatpush2.msra.mxu0 %v56
  %156 = vmatprep.subr.mxu0 0.0
  %157 = vmatpush2.msra.mxu0 %v55
  %158 = vmatprep.subr.mxu0 0.0
  %159 = vmatpush2.msra.mxu0 %v54
  %160 = vmatprep.mubr.f32.mxu0 %v18
  %161 = vmatmul.mubr.f32.gmra.mxu0 %v17
  %v162 = vpop.f32.mrf.mxu0
  %v163 = vadd.f32 0.0, %v162
  %v164 = vpop.f32.mrf.mxu0
  %165 = vmatprep.mubr.f32.mxu0 %v21
  %166 = vmatmul.mubr.f32.gmra.mxu0 %v20
  %v167 = vpop.f32.mrf.mxu0
  %v168 = vadd.f32 0.0, %v167
  %v169 = vpop.f32.mrf.mxu0
  %170 = vmatprep.mubr.f32.mxu0 %v24
  %171 = vmatmul.mubr.f32.gmra.mxu0 %v23
  %v172 = vpop.f32.mrf.mxu0
  %v173 = vadd.f32 0.0, %v172
  %v174 = vpop.f32.mrf.mxu0
  %175 = vmatprep.mubr.f32.mxu0 %v27
  %176 = vmatmul.mubr.f32.gmra.mxu0 %v26
  %v177 = vpop.f32.mrf.mxu0
  %v178 = vadd.f32 0.0, %v177
  %v179 = vpop.f32.mrf.mxu0
  %180 = vmatprep.mubr.f32.mxu0 %v30
  %181 = vmatmul.mubr.f32.gmra.mxu0 %v29
  %v182 = vpop.f32.mrf.mxu0
  %v183 = vadd.f32 0.0, %v182
  %v184 = vpop.f32.mrf.mxu0
  %185 = vmatprep.mubr.f32.mxu0 %v33
  %186 = vmatmul.mubr.f32.gmra.mxu0 %v32
  %v187 = vpop.f32.mrf.mxu0
  %v188 = vadd.f32 0.0, %v187
  %v189 = vpop.f32.mrf.mxu0
  %190 = vmatprep.mubr.f32.mxu0 %v36
  %191 = vmatmul.mubr.f32.gmra.mxu0 %v35
  %v192 = vpop.f32.mrf.mxu0
  %v193 = vadd.f32 0.0, %v192
  %v194 = vpop.f32.mrf.mxu0
  %195 = vdwg.mxu0
  %196 = vmatprep.subr.mxu0 0.0
  %197 = vmatpush1.msra.mxu0 0.0
  %198 = vmatprep.subr.mxu0 0.0
  %199 = vmatpush1.msra.mxu0 0.0
  %200 = vmatprep.subr.mxu0 0.0
  %201 = vmatpush1.msra.mxu0 0.0
  %202 = vmatprep.subr.mxu0 0.0
  %203 = vmatpush1.msra.mxu0 0.0
  %204 = vmatprep.subr.mxu0 0.0
  %205 = vmatpush1.msra.mxu0 0.0
  %206 = vmatprep.subr.mxu0 0.0
  %207 = vmatpush1.msra.mxu0 0.0
  %208 = vmatprep.subr.mxu0 0.0
  %209 = vmatpush1.msra.mxu0 0.0
  %210 = vmatprep.subr.mxu0 0.0
  %211 = vmatpush1.msra.mxu0 0.0
  %212 = vmatprep.subr.mxu0 0.0
  %213 = vmatpush1.msra.mxu0 0.0
  %214 = vmatprep.subr.mxu0 0.0
  %215 = vmatpush1.msra.mxu0 0.0
  %216 = vmatprep.subr.mxu0 0.0
  %217 = vmatpush1.msra.mxu0 0.0
  %218 = vmatprep.subr.mxu0 0.0
  %219 = vmatpush1.msra.mxu0 0.0
  %220 = vmatprep.subr.mxu0 0.0
  %221 = vmatpush1.msra.mxu0 %v73
  %222 = vmatprep.subr.mxu0 0.0
  %223 = vmatpush1.msra.mxu0 %v72
  %224 = vmatprep.subr.mxu0 0.0
  %225 = vmatpush1.msra.mxu0 %v71
  %226 = vmatprep.subr.mxu0 0.0
  %227 = vmatpush1.msra.mxu0 %v70
  %228 = vmatprep.subr.mxu0 0.0
  %229 = vmatpush2.msra.mxu0 0.0
  %230 = vmatprep.subr.mxu0 0.0
  %231 = vmatpush2.msra.mxu0 0.0
  %232 = vmatprep.subr.mxu0 0.0
  %233 = vmatpush2.msra.mxu0 0.0
  %234 = vmatprep.subr.mxu0 0.0
  %235 = vmatpush2.msra.mxu0 0.0
  %236 = vmatprep.subr.mxu0 0.0
  %237 = vmatpush2.msra.mxu0 0.0
  %238 = vmatprep.subr.mxu0 0.0
  %239 = vmatpush2.msra.mxu0 0.0
  %240 = vmatprep.subr.mxu0 0.0
  %241 = vmatpush2.msra.mxu0 0.0
  %242 = vmatprep.subr.mxu0 0.0
  %243 = vmatpush2.msra.mxu0 0.0
  %244 = vmatprep.subr.mxu0 0.0
  %245 = vmatpush2.msra.mxu0 0.0
  %246 = vmatprep.subr.mxu0 0.0
  %247 = vmatpush2.msra.mxu0 0.0
  %248 = vmatprep.subr.mxu0 0.0
  %249 = vmatpush2.msra.mxu0 0.0
  %250 = vmatprep.subr.mxu0 0.0
  %251 = vmatpush2.msra.mxu0 0.0
  %252 = vmatprep.subr.mxu0 0.0
  %253 = vmatpush2.msra.mxu0 0.0
  %254 = vmatprep.subr.mxu0 0.0
  %255 = vmatpush2.msra.mxu0 0.0
  %256 = vmatprep.subr.mxu0 0.0
  %257 = vmatpush2.msra.mxu0 0.0
  %258 = vmatprep.subr.mxu0 0.0
  %259 = vmatpush2.msra.mxu0 0.0
  %260 = vmatprep.mubr.f32.mxu0 0.0
  %261 = vmatmul.mubr.f32.gmra.mxu0 %v76
  %v262 = vpop.f32.mrf.mxu0
  %v263 = vadd.f32 %v163, %v262
  %v264 = vpop.f32.mrf.mxu0
  %265 = vmatprep.mubr.f32.mxu0 0.0
  %266 = vmatmul.mubr.f32.gmra.mxu0 %v79
  %v267 = vpop.f32.mrf.mxu0
  %v268 = vadd.f32 %v168, %v267
  %v269 = vpop.f32.mrf.mxu0
  %270 = vmatprep.mubr.f32.mxu0 0.0
  %271 = vmatmul.mubr.f32.gmra.mxu0 %v82
  %v272 = vpop.f32.mrf.mxu0
  %v273 = vadd.f32 %v173, %v272
  %v274 = vpop.f32.mrf.mxu0
  %275 = vmatprep.mubr.f32.mxu0 0.0
  %276 = vmatmul.mubr.f32.gmra.mxu0 %v85
  %v277 = vpop.f32.mrf.mxu0
  %v278 = vadd.f32 %v178, %v277
  %v279 = vpop.f32.mrf.mxu0
  %280 = vmatprep.mubr.f32.mxu0 0.0
  %281 = vmatmul.mubr.f32.gmra.mxu0 %v88
  %v282 = vpop.f32.mrf.mxu0
  %v283 = vadd.f32 %v183, %v282
  %v284 = vpop.f32.mrf.mxu0
  %285 = vmatprep.mubr.f32.mxu0 0.0
  %286 = vmatmul.mubr.f32.gmra.mxu0 %v91
  %v287 = vpop.f32.mrf.mxu0
  %v288 = vadd.f32 %v188, %v287
  %v289 = vpop.f32.mrf.mxu0
  %290 = vmatprep.mubr.f32.mxu0 0.0
  %291 = vmatmul.mubr.f32.gmra.mxu0 %v94
  %v292 = vpop.f32.mrf.mxu0
  %v293 = vadd.f32 %v193, %v292
  %v294 = vpop.f32.mrf.mxu0
  %295 = vdwg.mxu0
  %vm296 = vcmask 523264
  %v297 = vsel %vm296, %v263, 0.0
  %v298 = vsel %vm296, %v268, 0.0
  %v299 = vadd.f32 %v297, %v298
  %v300 = vsel %vm296, %v273, 0.0
  %v301 = vadd.f32 %v299, %v300
  %v302 = vsel %vm296, %v278, 0.0
  %v303 = vadd.f32 %v301, %v302
  %v304 = vsel %vm296, %v283, 0.0
  %v305 = vadd.f32 %v303, %v304
  %v306 = vsel %vm296, %v288, 0.0
  %v307 = vadd.f32 %v305, %v306
  %vm308 = vcmask 516096
  %v309 = vsel %vm308, %v293, 0.0
  %v310 = vadd.f32 %v307, %v309
  %v311 = vrot.slane %v310, 4
  %v312 = vadd.f32 %v310, %v311
  %v313 = vrot.slane %v312, 2
  %v314 = vadd.f32 %v312, %v313
  %v315 = vrot.slane %v314, 1
  %v316 = vadd.f32 %v314, %v315
  %v317 = vrcp.pop 49.0
  %v318 = vmul.f32 %v316, %v317
  %v319 = vsub.f32 %v263, %v318
  %v320 = vsub.f32 %v268, %v318
  %v321 = vsub.f32 %v273, %v318
  %v322 = vsub.f32 %v278, %v318
  %v323 = vsub.f32 %v283, %v318
  %v324 = vsub.f32 %v288, %v318
  %v325 = vsub.f32 %v293, %v318
  %v326 = vmul.f32 %v319, %v319
  %v327 = vmul.f32 %v320, %v320
  %v328 = vmul.f32 %v321, %v321
  %v329 = vmul.f32 %v322, %v322
  %v330 = vmul.f32 %v323, %v323
  %v331 = vmul.f32 %v324, %v324
  %v332 = vmul.f32 %v325, %v325
  %v333 = vsel %vm296, %v326, 0.0
  %v334 = vsel %vm296, %v327, 0.0
  %v335 = vadd.f32 %v333, %v334
  %v336 = vsel %vm296, %v328, 0.0
  %v337 = vadd.f32 %v335, %v336
  %v338 = vsel %vm296, %v329, 0.0
  %v339 = vadd.f32 %v337, %v338
  %v340 = vsel %vm296, %v330, 0.0
  %v341 = vadd.f32 %v339, %v340
  %v342 = vsel %vm296, %v331, 0.0
  %v343 = vadd.f32 %v341, %v342
  %v344 = vsel %vm308, %v332, 0.0
  %v345 = vadd.f32 %v343, %v344
  %v346 = vrot.slane %v345, 4
  %v347 = vadd.f32 %v345, %v346
  %v348 = vrot.slane %v347, 2
  %v349 = vadd.f32 %v347, %v348
  %v350 = vrot.slane %v349, 1
  %v351 = vadd.f32 %v349, %v350
  %v352 = vmul.f32 %v351, %v317
  %v353 = vadd.f32 %v352, 1e-05
  %v354 = vrsqrt.pop %v353
  %v355 = vmul.f32 %v319, %v354
  %v356 = vmul.f32 %v320, %v354
  %v357 = vmul.f32 %v321, %v354
  %v358 = vmul.f32 %v322, %v354
  %v359 = vmul.f32 %v323, %v354
  %v360 = vmul.f32 %v324, %v354
  %v361 = vmul.f32 %v325, %v354
  %v362 = vld [vmem:[%s2] sm:$0x1]
  %v364 = vlaneseq
  %v365 = vshrl.u32 %v364, 7
  %v366 = vsub.s32 0, %v365
  %v367 = vrot.slane %v362, %v366
  %v369 = vmul.f32 %v355, %v367
  %v370 = vmul.f32 %v356, %v367
  %v371 = vmul.f32 %v357, %v367
  %v372 = vmul.f32 %v358, %v367
  %v373 = vmul.f32 %v359, %v367
  %v374 = vmul.f32 %v360, %v367
  %v375 = vmul.f32 %v361, %v367
  %v376 = vld [vmem:[%s3] sm:$0x1]
  %v378 = vlaneseq
  %v379 = vshrl.u32 %v378, 7
  %v380 = vsub.s32 0, %v379
  %v381 = vrot.slane %v376, %v380
  %v383 = vadd.f32 %v369, %v381
  %v384 = vadd.f32 %v370, %v381
  %v385 = vadd.f32 %v371, %v381
  %v386 = vadd.f32 %v372, %v381
  %v387 = vadd.f32 %v373, %v381
  %v388 = vadd.f32 %v374, %v381
  %v389 = vadd.f32 %v375, %v381
  %v390 = vmax.f32 %v383, 0.0
  %v391 = vmax.f32 %v384, 0.0
  %v392 = vmax.f32 %v385, 0.0
  %v393 = vmax.f32 %v386, 0.0
  %v394 = vmax.f32 %v387, 0.0
  %v395 = vmax.f32 %v388, 0.0
  %v396 = vmax.f32 %v389, 0.0
  %397 = vst.msk [vmem:[%s4] sm:$0xff] %vm296, %v390
  %398 = vst.msk [vmem:[%s4 + $0x8] sm:$0xff] %vm296, %v391
  %399 = vst.msk [vmem:[%s4 + $0x10] sm:$0xff] %vm296, %v392
  %400 = vst.msk [vmem:[%s4 + $0x18] sm:$0xff] %vm296, %v393
  %401 = vst.msk [vmem:[%s4 + $0x20] sm:$0xff] %vm296, %v394
  %402 = vst.msk [vmem:[%s4 + $0x28] sm:$0xff] %vm296, %v395
  %403 = vst.msk [vmem:[%s4 + $0x30] sm:$0x1] %vm308, %v396
  // Predicated region
  $region18: #{model_forward.5} parent=0 // pred_check
    _
  $region19: #{model_forward.5} parent=0 // pred_check_branch
    %405 = sbr.rel (0) target = $region21
  $region20: #{model_forward.5} parent=0 // pred_region
    _
  $region21: #{model_forward.5} parent=0 // pred_fallthru
    _
  // Predicated region
  $region22: #{model_forward.5} parent=0 // pred_check
    _
  $region23: #{model_forward.5} parent=0 // pred_check_branch
    %407 = sbr.rel (0) target = $region25
  $region24: #{model_forward.5} parent=0 // pred_region
    _
  $region25: #{model_forward.5} parent=0 // pred_fallthru
    _

// kernel: model_forward.4
$region0: #{model_forward.4}
  #allocation0 [shape = 'u32[]', space=smem, size = 0x4, offset = 0x4, fixed_abs, tag = 'smem constant byte address 0x4 - core index']
  #allocation1 [shape = 'u32[144,128]{1,0:T(1,128)}', space=vmem, size = 0x12000, scoped, tag = 'internal scratch']
  %s0 = inlined_call_operand.vmem [shape: f32[7,5,7,5,32], index: 0, kind: input, shape index: {}]
  %s1 = inlined_call_operand.vmem [shape: f32[7,7,32], index: 1, kind: output, shape index: {}]
  %s2 = sld [smem:[#allocation0]]
  $region14: #{model_forward.4} parent=0
    _
  %s4 = ssub.s32 1, %s2
  %s5 = scalar_select 0, %s4, %s2
  // Predicated region
  $region2: #{model_forward.4} parent=0 // pred_check
    _
  $region3: #{model_forward.4} parent=0 // pred_check_branch
    %7 = sbr.rel (0) target = $region5
  $region4: #{model_forward.4} parent=0 // pred_region
    _
  $region5: #{model_forward.4} parent=0 // pred_fallthru
    _
  %v8 = vld [vmem:[%s0] sm:$0x1f]
  %v9 = vld [vmem:[%s0 + $0x8] sm:$0x1f]
  %v10 = vld [vmem:[%s0 + $0x10] sm:$0x1f]
  %v11 = vld [vmem:[%s0 + $0x18] sm:$0x1f]
  %v12 = vld [vmem:[%s0 + $0x20] sm:$0x1f]
  %v13 = vld [vmem:[%s0 + $0x28] sm:$0x1f]
  %v14 = vld [vmem:[%s0 + $0x30] sm:$0x1f]
  %v15 = vld [vmem:[%s0 + $0x38] sm:$0x1f]
  %v16 = vld [vmem:[%s0 + $0x40] sm:$0x1f]
  %v17 = vld [vmem:[%s0 + $0x48] sm:$0x1f]
  %v18 = vld [vmem:[%s0 + $0x50] sm:$0x1f]
  %v19 = vld [vmem:[%s0 + $0x58] sm:$0x1f]
  %v20 = vld [vmem:[%s0 + $0x60] sm:$0x1f]
  %v21 = vld [vmem:[%s0 + $0x68] sm:$0x1f]
  %v22 = vld [vmem:[%s0 + $0x70] sm:$0x1f]
  %v23 = vld [vmem:[%s0 + $0x78] sm:$0x1f]
  %v24 = vld [vmem:[%s0 + $0x80] sm:$0x1f]
  %v25 = vld [vmem:[%s0 + $0x88] sm:$0x1f]
  %v26 = vld [vmem:[%s0 + $0x90] sm:$0x1f]
  %v27 = vld [vmem:[%s0 + $0x98] sm:$0x1f]
  %v28 = vld [vmem:[%s0 + $0xa0] sm:$0x1f]
  %v29 = vld [vmem:[%s0 + $0xa8] sm:$0x1f]
  %v30 = vld [vmem:[%s0 + $0xb0] sm:$0x1f]
  %v31 = vld [vmem:[%s0 + $0xb8] sm:$0x1f]
  %v32 = vld [vmem:[%s0 + $0xc0] sm:$0x1f]
  %v33 = vld [vmem:[%s0 + $0xc8] sm:$0x1f]
  %v34 = vld [vmem:[%s0 + $0xd0] sm:$0x1f]
  %v35 = vld [vmem:[%s0 + $0xd8] sm:$0x1f]
  %v36 = vld [vmem:[%s0 + $0xe0] sm:$0x1f]
  %v37 = vld [vmem:[%s0 + $0xe8] sm:$0x1f]
  %v38 = vld [vmem:[%s0 + $0xf0] sm:$0x1f]
  %v39 = vld [vmem:[%s0 + $0xf8] sm:$0x1f]
  %v40 = vld [vmem:[%s0 + $0x100] sm:$0x1f]
  %v41 = vld [vmem:[%s0 + $0x108] sm:$0x1f]
  %v42 = vld [vmem:[%s0 + $0x110] sm:$0x1f]
  %v43 = vld [vmem:[%s0 + $0x118] sm:$0x1f]
  %v44 = vld [vmem:[%s0 + $0x120] sm:$0x1f]
  %v45 = vld [vmem:[%s0 + $0x128] sm:$0x1f]
  %v46 = vld [vmem:[%s0 + $0x130] sm:$0x1f]
  %v47 = vld [vmem:[%s0 + $0x138] sm:$0x1f]
  %v48 = vld [vmem:[%s0 + $0x140] sm:$0x1f]
  %v49 = vld [vmem:[%s0 + $0x148] sm:$0x1f]
  %v50 = vld [vmem:[%s0 + $0x150] sm:$0x1f]
  %v51 = vld [vmem:[%s0 + $0x158] sm:$0x1f]
  %v52 = vld [vmem:[%s0 + $0x160] sm:$0x1f]
  %v53 = vld [vmem:[%s0 + $0x168] sm:$0x1f]
  %v54 = vld [vmem:[%s0 + $0x170] sm:$0x1f]
  %v55 = vld [vmem:[%s0 + $0x178] sm:$0x1f]
  %v56 = vld [vmem:[%s0 + $0x180] sm:$0x1f]
  %v57 = vld [vmem:[%s0 + $0x188] sm:$0x1f]
  %v58 = vld [vmem:[%s0 + $0x190] sm:$0x1f]
  %v59 = vld [vmem:[%s0 + $0x198] sm:$0x1f]
  %v60 = vld [vmem:[%s0 + $0x1a0] sm:$0x1f]
  %v61 = vld [vmem:[%s0 + $0x1a8] sm:$0x1f]
  %v62 = vld [vmem:[%s0 + $0x1b0] sm:$0x1f]
  %v63 = vld [vmem:[%s0 + $0x1b8] sm:$0x1f]
  %v64 = vld [vmem:[%s0 + $0x1c0] sm:$0x1f]
  %v65 = vld [vmem:[%s0 + $0x1c8] sm:$0x1f]
  %v66 = vld [vmem:[%s0 + $0x1d0] sm:$0x1f]
  %v67 = vld [vmem:[%s0 + $0x1d8] sm:$0x1f]
  %v68 = vld [vmem:[%s0 + $0x1e0] sm:$0x1f]
  %v69 = vld [vmem:[%s0 + $0x1e8] sm:$0x1f]
  %v70 = vld [vmem:[%s0 + $0x1f0] sm:$0x1f]
  %v71 = vld [vmem:[%s0 + $0x1f8] sm:$0x1f]
  %v72 = vld [vmem:[%s0 + $0x200] sm:$0x1f]
  %v73 = vld [vmem:[%s0 + $0x208] sm:$0x1f]
  %v74 = vld [vmem:[%s0 + $0x210] sm:$0x1f]
  %v75 = vld [vmem:[%s0 + $0x218] sm:$0x1f]
  %v76 = vld [vmem:[%s0 + $0x220] sm:$0x1f]
  %v77 = vld [vmem:[%s0 + $0x228] sm:$0x1f]
  %v78 = vld [vmem:[%s0 + $0x230] sm:$0x1f]
  %v79 = vld [vmem:[%s0 + $0x238] sm:$0x1f]
  %v80 = vld [vmem:[%s0 + $0x240] sm:$0x1f]
  %v81 = vld [vmem:[%s0 + $0x248] sm:$0x1f]
  %v82 = vld [vmem:[%s0 + $0x250] sm:$0x1f]
  %v83 = vld [vmem:[%s0 + $0x258] sm:$0x1f]
  %v84 = vld [vmem:[%s0 + $0x260] sm:$0x1f]
  %v85 = vld [vmem:[%s0 + $0x268] sm:$0x1f]
  %v86 = vld [vmem:[%s0 + $0x270] sm:$0x1f]
  %v87 = vld [vmem:[%s0 + $0x278] sm:$0x1f]
  %v88 = vld [vmem:[%s0 + $0x280] sm:$0x1f]
  %v89 = vld [vmem:[%s0 + $0x288] sm:$0x1f]
  %v90 = vld [vmem:[%s0 + $0x290] sm:$0x1f]
  %v91 = vld [vmem:[%s0 + $0x298] sm:$0x1f]
  %v92 = vld [vmem:[%s0 + $0x2a0] sm:$0x1f]
  %v93 = vld [vmem:[%s0 + $0x2a8] sm:$0x1f]
  %v94 = vld [vmem:[%s0 + $0x2b0] sm:$0x1f]
  %v95 = vld [vmem:[%s0 + $0x2b8] sm:$0x1f]
  %v96 = vld [vmem:[%s0 + $0x2c0] sm:$0x1f]
  %v97 = vld [vmem:[%s0 + $0x2c8] sm:$0x1f]
  %v98 = vld [vmem:[%s0 + $0x2d0] sm:$0x1f]
  %v99 = vld [vmem:[%s0 + $0x2d8] sm:$0x1f]
  %v100 = vld [vmem:[%s0 + $0x2e0] sm:$0x1f]
  %v101 = vld [vmem:[%s0 + $0x2e8] sm:$0x1f]
  %v102 = vld [vmem:[%s0 + $0x2f0] sm:$0x1f]
  %v103 = vld [vmem:[%s0 + $0x2f8] sm:$0x1f]
  %v104 = vld [vmem:[%s0 + $0x300] sm:$0x1f]
  %v105 = vld [vmem:[%s0 + $0x308] sm:$0x1f]
  %v106 = vld [vmem:[%s0 + $0x310] sm:$0x1f]
  %v107 = vld [vmem:[%s0 + $0x318] sm:$0x1f]
  %v108 = vld [vmem:[%s0 + $0x320] sm:$0x1f]
  %v109 = vld [vmem:[%s0 + $0x328] sm:$0x1f]
  %v110 = vld [vmem:[%s0 + $0x330] sm:$0x1f]
  %v111 = vld [vmem:[%s0 + $0x338] sm:$0x1f]
  %v112 = vld [vmem:[%s0 + $0x340] sm:$0x1f]
  %v113 = vld [vmem:[%s0 + $0x348] sm:$0x1f]
  %v114 = vld [vmem:[%s0 + $0x350] sm:$0x1f]
  %v115 = vld [vmem:[%s0 + $0x358] sm:$0x1f]
  %v116 = vld [vmem:[%s0 + $0x360] sm:$0x1f]
  %v117 = vld [vmem:[%s0 + $0x368] sm:$0x1f]
  %v118 = vld [vmem:[%s0 + $0x370] sm:$0x1f]
  %v119 = vld [vmem:[%s0 + $0x378] sm:$0x1f]
  %v120 = vld [vmem:[%s0 + $0x380] sm:$0x1f]
  %v121 = vld [vmem:[%s0 + $0x388] sm:$0x1f]
  %v122 = vld [vmem:[%s0 + $0x390] sm:$0x1f]
  %v123 = vld [vmem:[%s0 + $0x398] sm:$0x1f]
  %v124 = vld [vmem:[%s0 + $0x3a0] sm:$0x1f]
  %v125 = vld [vmem:[%s0 + $0x3a8] sm:$0x1f]
  %v126 = vld [vmem:[%s0 + $0x3b0] sm:$0x1f]
  %v127 = vld [vmem:[%s0 + $0x3b8] sm:$0x1f]
  %v128 = vld [vmem:[%s0 + $0x3c0] sm:$0x1f]
  %v129 = vld [vmem:[%s0 + $0x3c8] sm:$0x1f]
  %v130 = vld [vmem:[%s0 + $0x3d0] sm:$0x1f]
  %v131 = vld [vmem:[%s0 + $0x3d8] sm:$0x1f]
  %v132 = vld [vmem:[%s0 + $0x3e0] sm:$0x1f]
  %v133 = vld [vmem:[%s0 + $0x3e8] sm:$0x1f]
  %v134 = vld [vmem:[%s0 + $0x3f0] sm:$0x1f]
  %v135 = vld [vmem:[%s0 + $0x3f8] sm:$0x1f]
  %v136 = vld [vmem:[%s0 + $0x400] sm:$0x1f]
  %v137 = vld [vmem:[%s0 + $0x408] sm:$0x1f]
  %v138 = vld [vmem:[%s0 + $0x410] sm:$0x1f]
  %v139 = vld [vmem:[%s0 + $0x418] sm:$0x1f]
  %v140 = vld [vmem:[%s0 + $0x420] sm:$0x1f]
  %v141 = vld [vmem:[%s0 + $0x428] sm:$0x1f]
  %v142 = vld [vmem:[%s0 + $0x430] sm:$0x1f]
  %v143 = vld [vmem:[%s0 + $0x438] sm:$0x1f]
  %v144 = vld [vmem:[%s0 + $0x440] sm:$0x1f]
  %v145 = vld [vmem:[%s0 + $0x448] sm:$0x1f]
  %v146 = vld [vmem:[%s0 + $0x450] sm:$0x1f]
  %v147 = vld [vmem:[%s0 + $0x458] sm:$0x1f]
  %v148 = vld [vmem:[%s0 + $0x460] sm:$0x1f]
  %v149 = vld [vmem:[%s0 + $0x468] sm:$0x1f]
  %v150 = vld [vmem:[%s0 + $0x470] sm:$0x1f]
  %v151 = vld [vmem:[%s0 + $0x478] sm:$0x1f]
  %v152 = vld [vmem:[%s0 + $0x480] sm:$0x1f]
  %v153 = vld [vmem:[%s0 + $0x488] sm:$0x1f]
  %v154 = vld [vmem:[%s0 + $0x490] sm:$0x1f]
  %v155 = vld [vmem:[%s0 + $0x498] sm:$0x1f]
  %v156 = vld [vmem:[%s0 + $0x4a0] sm:$0x1f]
  %v157 = vld [vmem:[%s0 + $0x4a8] sm:$0x1f]
  %v158 = vld [vmem:[%s0 + $0x4b0] sm:$0x1f]
  %v159 = vld [vmem:[%s0 + $0x4b8] sm:$0x1f]
  %v160 = vld [vmem:[%s0 + $0x4c0] sm:$0x1f]
  %v161 = vld [vmem:[%s0 + $0x4c8] sm:$0x1f]
  %v162 = vld [vmem:[%s0 + $0x4d0] sm:$0x1f]
  %v163 = vld [vmem:[%s0 + $0x4d8] sm:$0x1f]
  %v164 = vld [vmem:[%s0 + $0x4e0] sm:$0x1f]
  %v165 = vld [vmem:[%s0 + $0x4e8] sm:$0x1f]
  %v166 = vld [vmem:[%s0 + $0x4f0] sm:$0x1f]
  %v167 = vld [vmem:[%s0 + $0x4f8] sm:$0x1f]
  %v168 = vld [vmem:[%s0 + $0x500] sm:$0x1f]
  %v169 = vld [vmem:[%s0 + $0x508] sm:$0x1f]
  %v170 = vld [vmem:[%s0 + $0x510] sm:$0x1f]
  %v171 = vld [vmem:[%s0 + $0x518] sm:$0x1f]
  %v172 = vld [vmem:[%s0 + $0x520] sm:$0x1f]
  %v173 = vld [vmem:[%s0 + $0x528] sm:$0x1f]
  %v174 = vld [vmem:[%s0 + $0x530] sm:$0x1f]
  %v175 = vld [vmem:[%s0 + $0x538] sm:$0x1f]
  %v176 = vld [vmem:[%s0 + $0x540] sm:$0x1f]
  %v177 = vld [vmem:[%s0 + $0x548] sm:$0x1f]
  %v178 = vld [vmem:[%s0 + $0x550] sm:$0x1f]
  %v179 = vld [vmem:[%s0 + $0x558] sm:$0x1f]
  %v180 = vld [vmem:[%s0 + $0x560] sm:$0x1f]
  %v181 = vld [vmem:[%s0 + $0x568] sm:$0x1f]
  %v182 = vld [vmem:[%s0 + $0x570] sm:$0x1f]
  %v183 = vld [vmem:[%s0 + $0x578] sm:$0x1f]
  %v184 = vld [vmem:[%s0 + $0x580] sm:$0x1f]
  %v185 = vld [vmem:[%s0 + $0x588] sm:$0x1f]
  %v186 = vld [vmem:[%s0 + $0x590] sm:$0x1f]
  %v187 = vld [vmem:[%s0 + $0x598] sm:$0x1f]
  %v188 = vld [vmem:[%s0 + $0x5a0] sm:$0x1f]
  %v189 = vld [vmem:[%s0 + $0x5a8] sm:$0x1f]
  %v190 = vld [vmem:[%s0 + $0x5b0] sm:$0x1f]
  %v191 = vld [vmem:[%s0 + $0x5b8] sm:$0x1f]
  %v192 = vld [vmem:[%s0 + $0x5c0] sm:$0x1f]
  %v193 = vld [vmem:[%s0 + $0x5c8] sm:$0x1f]
  %v194 = vld [vmem:[%s0 + $0x5d0] sm:$0x1f]
  %v195 = vld [vmem:[%s0 + $0x5d8] sm:$0x1f]
  %v196 = vld [vmem:[%s0 + $0x5e0] sm:$0x1f]
  %v197 = vld [vmem:[%s0 + $0x5e8] sm:$0x1f]
  %v198 = vld [vmem:[%s0 + $0x5f0] sm:$0x1f]
  %v199 = vld [vmem:[%s0 + $0x5f8] sm:$0x1f]
  %v200 = vld [vmem:[%s0 + $0x600] sm:$0x1f]
  %v201 = vld [vmem:[%s0 + $0x608] sm:$0x1f]
  %v202 = vld [vmem:[%s0 + $0x610] sm:$0x1f]
  %v203 = vld [vmem:[%s0 + $0x618] sm:$0x1f]
  %v204 = vld [vmem:[%s0 + $0x620] sm:$0x1f]
  %v205 = vld [vmem:[%s0 + $0x628] sm:$0x1f]
  %v206 = vld [vmem:[%s0 + $0x630] sm:$0x1f]
  %v207 = vld [vmem:[%s0 + $0x638] sm:$0x1f]
  %v208 = vld [vmem:[%s0 + $0x640] sm:$0x1f]
  %v209 = vld [vmem:[%s0 + $0x648] sm:$0x1f]
  %v210 = vld [vmem:[%s0 + $0x650] sm:$0x1f]
  %v211 = vld [vmem:[%s0 + $0x658] sm:$0x1f]
  %v212 = vld [vmem:[%s0 + $0x660] sm:$0x1f]
  %v213 = vld [vmem:[%s0 + $0x668] sm:$0x1f]
  %v214 = vld [vmem:[%s0 + $0x670] sm:$0x1f]
  %v215 = vld [vmem:[%s0 + $0x678] sm:$0x1f]
  %v216 = vld [vmem:[%s0 + $0x680] sm:$0x1f]
  %v217 = vld [vmem:[%s0 + $0x688] sm:$0x1f]
  %v218 = vld [vmem:[%s0 + $0x690] sm:$0x1f]
  %v219 = vld [vmem:[%s0 + $0x698] sm:$0x1f]
  %v220 = vld [vmem:[%s0 + $0x6a0] sm:$0x1f]
  %v221 = vld [vmem:[%s0 + $0x6a8] sm:$0x1f]
  %v222 = vld [vmem:[%s0 + $0x6b0] sm:$0x1f]
  %v223 = vld [vmem:[%s0 + $0x6b8] sm:$0x1f]
  %v224 = vld [vmem:[%s0 + $0x6c0] sm:$0x1f]
  %v225 = vld [vmem:[%s0 + $0x6c8] sm:$0x1f]
  %v226 = vld [vmem:[%s0 + $0x6d0] sm:$0x1f]
  %v227 = vld [vmem:[%s0 + $0x6d8] sm:$0x1f]
  %v228 = vld [vmem:[%s0 + $0x6e0] sm:$0x1f]
  %v229 = vld [vmem:[%s0 + $0x6e8] sm:$0x1f]
  %v230 = vld [vmem:[%s0 + $0x6f0] sm:$0x1f]
  %v231 = vld [vmem:[%s0 + $0x6f8] sm:$0x1f]
  %v232 = vld [vmem:[%s0 + $0x700] sm:$0x1f]
  %v233 = vld [vmem:[%s0 + $0x708] sm:$0x1f]
  %v234 = vld [vmem:[%s0 + $0x710] sm:$0x1f]
  %v235 = vld [vmem:[%s0 + $0x718] sm:$0x1f]
  %v236 = vld [vmem:[%s0 + $0x720] sm:$0x1f]
  %v237 = vld [vmem:[%s0 + $0x728] sm:$0x1f]
  %v238 = vld [vmem:[%s0 + $0x730] sm:$0x1f]
  %v239 = vld [vmem:[%s0 + $0x738] sm:$0x1f]
  %v240 = vld [vmem:[%s0 + $0x740] sm:$0x1f]
  %v241 = vld [vmem:[%s0 + $0x748] sm:$0x1f]
  %v242 = vld [vmem:[%s0 + $0x750] sm:$0x1f]
  %v243 = vld [vmem:[%s0 + $0x758] sm:$0x1f]
  %v244 = vld [vmem:[%s0 + $0x760] sm:$0x1f]
  %v245 = vld [vmem:[%s0 + $0x768] sm:$0x1f]
  %v246 = vld [vmem:[%s0 + $0x770] sm:$0x1f]
  %v247 = vld [vmem:[%s0 + $0x778] sm:$0x1f]
  %v248 = vld [vmem:[%s0 + $0x780] sm:$0x1f]
  %v249 = vld [vmem:[%s0 + $0x788] sm:$0x1f]
  %v250 = vld [vmem:[%s0 + $0x790] sm:$0x1f]
  %v251 = vld [vmem:[%s0 + $0x798] sm:$0x1f]
  %v252 = vld [vmem:[%s0 + $0x7a0] sm:$0x1f]
  %vm253 = vcmask 258048
  %v254 = vsel %vm253, %v8, -inf
  %v255 = vrot.slane %v254, 4
  %v256 = vmax.f32 %v254, %v255
  %v257 = vrot.slane %v256, 2
  %v258 = vmax.f32 %v256, %v257
  %v259 = vrot.slane %v258, 1
  %v260 = vmax.f32 %v258, %v259
  %v261 = vsel %vm253, %v9, -inf
  %v262 = vrot.slane %v261, 4
  %v263 = vmax.f32 %v261, %v262
  %v264 = vrot.slane %v263, 2
  %v265 = vmax.f32 %v263, %v264
  %v266 = vrot.slane %v265, 1
  %v267 = vmax.f32 %v265, %v266
  %v268 = vsel %vm253, %v10, -inf
  %v269 = vrot.slane %v268, 4
  %v270 = vmax.f32 %v268, %v269
  %v271 = vrot.slane %v270, 2
  %v272 = vmax.f32 %v270, %v271
  %v273 = vrot.slane %v272, 1
  %v274 = vmax.f32 %v272, %v273
  %v275 = vsel %vm253, %v11, -inf
  %v276 = vrot.slane %v275, 4
  %v277 = vmax.f32 %v275, %v276
  %v278 = vrot.slane %v277, 2
  %v279 = vmax.f32 %v277, %v278
  %v280 = vrot.slane %v279, 1
  %v281 = vmax.f32 %v279, %v280
  %v282 = vsel %vm253, %v12, -inf
  %v283 = vrot.slane %v282, 4
  %v284 = vmax.f32 %v282, %v283
  %v285 = vrot.slane %v284, 2
  %v286 = vmax.f32 %v284, %v285
  %v287 = vrot.slane %v286, 1
  %v288 = vmax.f32 %v286, %v287
  %v289 = vsel %vm253, %v13, -inf
  %v290 = vrot.slane %v289, 4
  %v291 = vmax.f32 %v289, %v290
  %v292 = vrot.slane %v291, 2
  %v293 = vmax.f32 %v291, %v292
  %v294 = vrot.slane %v293, 1
  %v295 = vmax.f32 %v293, %v294
  %v296 = vsel %vm253, %v14, -inf
  %v297 = vrot.slane %v296, 4
  %v298 = vmax.f32 %v296, %v297
  %v299 = vrot.slane %v298, 2
  %v300 = vmax.f32 %v298, %v299
  %v301 = vrot.slane %v300, 1
  %v302 = vmax.f32 %v300, %v301
  %v303 = vsel %vm253, %v15, -inf
  %v304 = vrot.slane %v303, 4
  %v305 = vmax.f32 %v303, %v304
  %v306 = vrot.slane %v305, 2
  %v307 = vmax.f32 %v305, %v306
  %v308 = vrot.slane %v307, 1
  %v309 = vmax.f32 %v307, %v308
  %v310 = vsel %vm253, %v16, -inf
  %v311 = vrot.slane %v310, 4
  %v312 = vmax.f32 %v310, %v311
  %v313 = vrot.slane %v312, 2
  %v314 = vmax.f32 %v312, %v313
  %v315 = vrot.slane %v314, 1
  %v316 = vmax.f32 %v314, %v315
  %v317 = vsel %vm253, %v17, -inf
  %v318 = vrot.slane %v317, 4
  %v319 = vmax.f32 %v317, %v318
  %v320 = vrot.slane %v319, 2
  %v321 = vmax.f32 %v319, %v320
  %v322 = vrot.slane %v321, 1
  %v323 = vmax.f32 %v321, %v322
  %v324 = vsel %vm253, %v18, -inf
  %v325 = vrot.slane %v324, 4
  %v326 = vmax.f32 %v324, %v325
  %v327 = vrot.slane %v326, 2
  %v328 = vmax.f32 %v326, %v327
  %v329 = vrot.slane %v328, 1
  %v330 = vmax.f32 %v328, %v329
  %v331 = vsel %vm253, %v19, -inf
  %v332 = vrot.slane %v331, 4
  %v333 = vmax.f32 %v331, %v332
  %v334 = vrot.slane %v333, 2
  %v335 = vmax.f32 %v333, %v334
  %v336 = vrot.slane %v335, 1
  %v337 = vmax.f32 %v335, %v336
  %v338 = vsel %vm253, %v20, -inf
  %v339 = vrot.slane %v338, 4
  %v340 = vmax.f32 %v338, %v339
  %v341 = vrot.slane %v340, 2
  %v342 = vmax.f32 %v340, %v341
  %v343 = vrot.slane %v342, 1
  %v344 = vmax.f32 %v342, %v343
  %v345 = vsel %vm253, %v21, -inf
  %v346 = vrot.slane %v345, 4
  %v347 = vmax.f32 %v345, %v346
  %v348 = vrot.slane %v347, 2
  %v349 = vmax.f32 %v347, %v348
  %v350 = vrot.slane %v349, 1
  %v351 = vmax.f32 %v349, %v350
  %v352 = vsel %vm253, %v22, -inf
  %v353 = vrot.slane %v352, 4
  %v354 = vmax.f32 %v352, %v353
  %v355 = vrot.slane %v354, 2
  %v356 = vmax.f32 %v354, %v355
  %v357 = vrot.slane %v356, 1
  %v358 = vmax.f32 %v356, %v357
  %v359 = vsel %vm253, %v23, -inf
  %v360 = vrot.slane %v359, 4
  %v361 = vmax.f32 %v359, %v360
  %v362 = vrot.slane %v361, 2
  %v363 = vmax.f32 %v361, %v362
  %v364 = vrot.slane %v363, 1
  %v365 = vmax.f32 %v363, %v364
  %v366 = vsel %vm253, %v24, -inf
  %v367 = vrot.slane %v366, 4
  %v368 = vmax.f32 %v366, %v367
  %v369 = vrot.slane %v368, 2
  %v370 = vmax.f32 %v368, %v369
  %v371 = vrot.slane %v370, 1
  %v372 = vmax.f32 %v370, %v371
  %v373 = vsel %vm253, %v25, -inf
  %v374 = vrot.slane %v373, 4
  %v375 = vmax.f32 %v373, %v374
  %v376 = vrot.slane %v375, 2
  %v377 = vmax.f32 %v375, %v376
  %v378 = vrot.slane %v377, 1
  %v379 = vmax.f32 %v377, %v378
  %v380 = vsel %vm253, %v26, -inf
  %v381 = vrot.slane %v380, 4
  %v382 = vmax.f32 %v380, %v381
  %v383 = vrot.slane %v382, 2
  %v384 = vmax.f32 %v382, %v383
  %v385 = vrot.slane %v384, 1
  %v386 = vmax.f32 %v384, %v385
  %v387 = vsel %vm253, %v27, -inf
  %v388 = vrot.slane %v387, 4
  %v389 = vmax.f32 %v387, %v388
  %v390 = vrot.slane %v389, 2
  %v391 = vmax.f32 %v389, %v390
  %v392 = vrot.slane %v391, 1
  %v393 = vmax.f32 %v391, %v392
  %v394 = vsel %vm253, %v28, -inf
  %v395 = vrot.slane %v394, 4
  %v396 = vmax.f32 %v394, %v395
  %v397 = vrot.slane %v396, 2
  %v398 = vmax.f32 %v396, %v397
  %v399 = vrot.slane %v398, 1
  %v400 = vmax.f32 %v398, %v399
  %v401 = vsel %vm253, %v29, -inf
  %v402 = vrot.slane %v401, 4
  %v403 = vmax.f32 %v401, %v402
  %v404 = vrot.slane %v403, 2
  %v405 = vmax.f32 %v403, %v404
  %v406 = vrot.slane %v405, 1
  %v407 = vmax.f32 %v405, %v406
  %v408 = vsel %vm253, %v30, -inf
  %v409 = vrot.slane %v408, 4
  %v410 = vmax.f32 %v408, %v409
  %v411 = vrot.slane %v410, 2
  %v412 = vmax.f32 %v410, %v411
  %v413 = vrot.slane %v412, 1
  %v414 = vmax.f32 %v412, %v413
  %v415 = vsel %vm253, %v31, -inf
  %v416 = vrot.slane %v415, 4
  %v417 = vmax.f32 %v415, %v416
  %v418 = vrot.slane %v417, 2
  %v419 = vmax.f32 %v417, %v418
  %v420 = vrot.slane %v419, 1
  %v421 = vmax.f32 %v419, %v420
  %v422 = vsel %vm253, %v32, -inf
  %v423 = vrot.slane %v422, 4
  %v424 = vmax.f32 %v422, %v423
  %v425 = vrot.slane %v424, 2
  %v426 = vmax.f32 %v424, %v425
  %v427 = vrot.slane %v426, 1
  %v428 = vmax.f32 %v426, %v427
  %v429 = vsel %vm253, %v33, -inf
  %v430 = vrot.slane %v429, 4
  %v431 = vmax.f32 %v429, %v430
  %v432 = vrot.slane %v431, 2
  %v433 = vmax.f32 %v431, %v432
  %v434 = vrot.slane %v433, 1
  %v435 = vmax.f32 %v433, %v434
  %v436 = vsel %vm253, %v34, -inf
  %v437 = vrot.slane %v436, 4
  %v438 = vmax.f32 %v436, %v437
  %v439 = vrot.slane %v438, 2
  %v440 = vmax.f32 %v438, %v439
  %v441 = vrot.slane %v440, 1
  %v442 = vmax.f32 %v440, %v441
  %v443 = vsel %vm253, %v35, -inf
  %v444 = vrot.slane %v443, 4
  %v445 = vmax.f32 %v443, %v444
  %v446 = vrot.slane %v445, 2
  %v447 = vmax.f32 %v445, %v446
  %v448 = vrot.slane %v447, 1
  %v449 = vmax.f32 %v447, %v448
  %v450 = vsel %vm253, %v36, -inf
  %v451 = vrot.slane %v450, 4
  %v452 = vmax.f32 %v450, %v451
  %v453 = vrot.slane %v452, 2
  %v454 = vmax.f32 %v452, %v453
  %v455 = vrot.slane %v454, 1
  %v456 = vmax.f32 %v454, %v455
  %v457 = vsel %vm253, %v37, -inf
  %v458 = vrot.slane %v457, 4
  %v459 = vmax.f32 %v457, %v458
  %v460 = vrot.slane %v459, 2
  %v461 = vmax.f32 %v459, %v460
  %v462 = vrot.slane %v461, 1
  %v463 = vmax.f32 %v461, %v462
  %v464 = vsel %vm253, %v38, -inf
  %v465 = vrot.slane %v464, 4
  %v466 = vmax.f32 %v464, %v465
  %v467 = vrot.slane %v466, 2
  %v468 = vmax.f32 %v466, %v467
  %v469 = vrot.slane %v468, 1
  %v470 = vmax.f32 %v468, %v469
  %v471 = vsel %vm253, %v39, -inf
  %v472 = vrot.slane %v471, 4
  %v473 = vmax.f32 %v471, %v472
  %v474 = vrot.slane %v473, 2
  %v475 = vmax.f32 %v473, %v474
  %v476 = vrot.slane %v475, 1
  %v477 = vmax.f32 %v475, %v476
  %v478 = vsel %vm253, %v40, -inf
  %v479 = vrot.slane %v478, 4
  %v480 = vmax.f32 %v478, %v479
  %v481 = vrot.slane %v480, 2
  %v482 = vmax.f32 %v480, %v481
  %v483 = vrot.slane %v482, 1
  %v484 = vmax.f32 %v482, %v483
  %v485 = vsel %vm253, %v41, -inf
  %v486 = vrot.slane %v485, 4
  %v487 = vmax.f32 %v485, %v486
  %v488 = vrot.slane %v487, 2
  %v489 = vmax.f32 %v487, %v488
  %v490 = vrot.slane %v489, 1
  %v491 = vmax.f32 %v489, %v490
  %v492 = vsel %vm253, %v42, -inf
  %v493 = vrot.slane %v492, 4
  %v494 = vmax.f32 %v492, %v493
  %v495 = vrot.slane %v494, 2
  %v496 = vmax.f32 %v494, %v495
  %v497 = vrot.slane %v496, 1
  %v498 = vmax.f32 %v496, %v497
  %v499 = vsel %vm253, %v43, -inf
  %v500 = vrot.slane %v499, 4
  %v501 = vmax.f32 %v499, %v500
  %v502 = vrot.slane %v501, 2
  %v503 = vmax.f32 %v501, %v502
  %v504 = vrot.slane %v503, 1
  %v505 = vmax.f32 %v503, %v504
  %v506 = vsel %vm253, %v44, -inf
  %v507 = vrot.slane %v506, 4
  %v508 = vmax.f32 %v506, %v507
  %v509 = vrot.slane %v508, 2
  %v510 = vmax.f32 %v508, %v509
  %v511 = vrot.slane %v510, 1
  %v512 = vmax.f32 %v510, %v511
  %v513 = vsel %vm253, %v45, -inf
  %v514 = vrot.slane %v513, 4
  %v515 = vmax.f32 %v513, %v514
  %v516 = vrot.slane %v515, 2
  %v517 = vmax.f32 %v515, %v516
  %v518 = vrot.slane %v517, 1
  %v519 = vmax.f32 %v517, %v518
  %v520 = vsel %vm253, %v46, -inf
  %v521 = vrot.slane %v520, 4
  %v522 = vmax.f32 %v520, %v521
  %v523 = vrot.slane %v522, 2
  %v524 = vmax.f32 %v522, %v523
  %v525 = vrot.slane %v524, 1
  %v526 = vmax.f32 %v524, %v525
  %v527 = vsel %vm253, %v47, -inf
  %v528 = vrot.slane %v527, 4
  %v529 = vmax.f32 %v527, %v528
  %v530 = vrot.slane %v529, 2
  %v531 = vmax.f32 %v529, %v530
  %v532 = vrot.slane %v531, 1
  %v533 = vmax.f32 %v531, %v532
  %v534 = vsel %vm253, %v48, -inf
  %v535 = vrot.slane %v534, 4
  %v536 = vmax.f32 %v534, %v535
  %v537 = vrot.slane %v536, 2
  %v538 = vmax.f32 %v536, %v537
  %v539 = vrot.slane %v538, 1
  %v540 = vmax.f32 %v538, %v539
  %v541 = vsel %vm253, %v49, -inf
  %v542 = vrot.slane %v541, 4
  %v543 = vmax.f32 %v541, %v542
  %v544 = vrot.slane %v543, 2
  %v545 = vmax.f32 %v543, %v544
  %v546 = vrot.slane %v545, 1
  %v547 = vmax.f32 %v545, %v546
  %v548 = vsel %vm253, %v50, -inf
  %v549 = vrot.slane %v548, 4
  %v550 = vmax.f32 %v548, %v549
  %v551 = vrot.slane %v550, 2
  %v552 = vmax.f32 %v550, %v551
  %v553 = vrot.slane %v552, 1
  %v554 = vmax.f32 %v552, %v553
  %v555 = vsel %vm253, %v51, -inf
  %v556 = vrot.slane %v555, 4
  %v557 = vmax.f32 %v555, %v556
  %v558 = vrot.slane %v557, 2
  %v559 = vmax.f32 %v557, %v558
  %v560 = vrot.slane %v559, 1
  %v561 = vmax.f32 %v559, %v560
  %v562 = vsel %vm253, %v52, -inf
  %v563 = vrot.slane %v562, 4
  %v564 = vmax.f32 %v562, %v563
  %v565 = vrot.slane %v564, 2
  %v566 = vmax.f32 %v564, %v565
  %v567 = vrot.slane %v566, 1
  %v568 = vmax.f32 %v566, %v567
  %v569 = vsel %vm253, %v53, -inf
  %v570 = vrot.slane %v569, 4
  %v571 = vmax.f32 %v569, %v570
  %v572 = vrot.slane %v571, 2
  %v573 = vmax.f32 %v571, %v572
  %v574 = vrot.slane %v573, 1
  %v575 = vmax.f32 %v573, %v574
  %v576 = vsel %vm253, %v54, -inf
  %v577 = vrot.slane %v576, 4
  %v578 = vmax.f32 %v576, %v577
  %v579 = vrot.slane %v578, 2
  %v580 = vmax.f32 %v578, %v579
  %v581 = vrot.slane %v580, 1
  %v582 = vmax.f32 %v580, %v581
  %v583 = vsel %vm253, %v55, -inf
  %v584 = vrot.slane %v583, 4
  %v585 = vmax.f32 %v583, %v584
  %v586 = vrot.slane %v585, 2
  %v587 = vmax.f32 %v585, %v586
  %v588 = vrot.slane %v587, 1
  %v589 = vmax.f32 %v587, %v588
  %v590 = vsel %vm253, %v56, -inf
  %v591 = vrot.slane %v590, 4
  %v592 = vmax.f32 %v590, %v591
  %v593 = vrot.slane %v592, 2
  %v594 = vmax.f32 %v592, %v593
  %v595 = vrot.slane %v594, 1
  %v596 = vmax.f32 %v594, %v595
  %v597 = vsel %vm253, %v57, -inf
  %v598 = vrot.slane %v597, 4
  %v599 = vmax.f32 %v597, %v598
  %v600 = vrot.slane %v599, 2
  %v601 = vmax.f32 %v599, %v600
  %v602 = vrot.slane %v601, 1
  %v603 = vmax.f32 %v601, %v602
  %v604 = vsel %vm253, %v58, -inf
  %v605 = vrot.slane %v604, 4
  %v606 = vmax.f32 %v604, %v605
  %v607 = vrot.slane %v606, 2
  %v608 = vmax.f32 %v606, %v607
  %v609 = vrot.slane %v608, 1
  %v610 = vmax.f32 %v608, %v609
  %v611 = vsel %vm253, %v59, -inf
  %v612 = vrot.slane %v611, 4
  %v613 = vmax.f32 %v611, %v612
  %v614 = vrot.slane %v613, 2
  %v615 = vmax.f32 %v613, %v614
  %v616 = vrot.slane %v615, 1
  %v617 = vmax.f32 %v615, %v616
  %v618 = vsel %vm253, %v60, -inf
  %v619 = vrot.slane %v618, 4
  %v620 = vmax.f32 %v618, %v619
  %v621 = vrot.slane %v620, 2
  %v622 = vmax.f32 %v620, %v621
  %v623 = vrot.slane %v622, 1
  %v624 = vmax.f32 %v622, %v623
  %v625 = vsel %vm253, %v61, -inf
  %v626 = vrot.slane %v625, 4
  %v627 = vmax.f32 %v625, %v626
  %v628 = vrot.slane %v627, 2
  %v629 = vmax.f32 %v627, %v628
  %v630 = vrot.slane %v629, 1
  %v631 = vmax.f32 %v629, %v630
  %v632 = vsel %vm253, %v62, -inf
  %v633 = vrot.slane %v632, 4
  %v634 = vmax.f32 %v632, %v633
  %v635 = vrot.slane %v634, 2
  %v636 = vmax.f32 %v634, %v635
  %v637 = vrot.slane %v636, 1
  %v638 = vmax.f32 %v636, %v637
  %v639 = vsel %vm253, %v63, -inf
  %v640 = vrot.slane %v639, 4
  %v641 = vmax.f32 %v639, %v640
  %v642 = vrot.slane %v641, 2
  %v643 = vmax.f32 %v641, %v642
  %v644 = vrot.slane %v643, 1
  %v645 = vmax.f32 %v643, %v644
  %v646 = vsel %vm253, %v64, -inf
  %v647 = vrot.slane %v646, 4
  %v648 = vmax.f32 %v646, %v647
  %v649 = vrot.slane %v648, 2
  %v650 = vmax.f32 %v648, %v649
  %v651 = vrot.slane %v650, 1
  %v652 = vmax.f32 %v650, %v651
  %v653 = vsel %vm253, %v65, -inf
  %v654 = vrot.slane %v653, 4
  %v655 = vmax.f32 %v653, %v654
  %v656 = vrot.slane %v655, 2
  %v657 = vmax.f32 %v655, %v656
  %v658 = vrot.slane %v657, 1
  %v659 = vmax.f32 %v657, %v658
  %v660 = vsel %vm253, %v66, -inf
  %v661 = vrot.slane %v660, 4
  %v662 = vmax.f32 %v660, %v661
  %v663 = vrot.slane %v662, 2
  %v664 = vmax.f32 %v662, %v663
  %v665 = vrot.slane %v664, 1
  %v666 = vmax.f32 %v664, %v665
  %v667 = vsel %vm253, %v67, -inf
  %v668 = vrot.slane %v667, 4
  %v669 = vmax.f32 %v667, %v668
  %v670 = vrot.slane %v669, 2
  %v671 = vmax.f32 %v669, %v670
  %v672 = vrot.slane %v671, 1
  %v673 = vmax.f32 %v671, %v672
  %v674 = vsel %vm253, %v68, -inf
  %v675 = vrot.slane %v674, 4
  %v676 = vmax.f32 %v674, %v675
  %v677 = vrot.slane %v676, 2
  %v678 = vmax.f32 %v676, %v677
  %v679 = vrot.slane %v678, 1
  %v680 = vmax.f32 %v678, %v679
  %v681 = vsel %vm253, %v69, -inf
  %v682 = vrot.slane %v681, 4
  %v683 = vmax.f32 %v681, %v682
  %v684 = vrot.slane %v683, 2
  %v685 = vmax.f32 %v683, %v684
  %v686 = vrot.slane %v685, 1
  %v687 = vmax.f32 %v685, %v686
  %v688 = vsel %vm253, %v70, -inf
  %v689 = vrot.slane %v688, 4
  %v690 = vmax.f32 %v688, %v689
  %v691 = vrot.slane %v690, 2
  %v692 = vmax.f32 %v690, %v691
  %v693 = vrot.slane %v692, 1
  %v694 = vmax.f32 %v692, %v693
  %v695 = vsel %vm253, %v71, -inf
  %v696 = vrot.slane %v695, 4
  %v697 = vmax.f32 %v695, %v696
  %v698 = vrot.slane %v697, 2
  %v699 = vmax.f32 %v697, %v698
  %v700 = vrot.slane %v699, 1
  %v701 = vmax.f32 %v699, %v700
  %v702 = vsel %vm253, %v72, -inf
  %v703 = vrot.slane %v702, 4
  %v704 = vmax.f32 %v702, %v703
  %v705 = vrot.slane %v704, 2
  %v706 = vmax.f32 %v704, %v705
  %v707 = vrot.slane %v706, 1
  %v708 = vmax.f32 %v706, %v707
  %v709 = vsel %vm253, %v73, -inf
  %v710 = vrot.slane %v709, 4
  %v711 = vmax.f32 %v709, %v710
  %v712 = vrot.slane %v711, 2
  %v713 = vmax.f32 %v711, %v712
  %v714 = vrot.slane %v713, 1
  %v715 = vmax.f32 %v713, %v714
  %v716 = vsel %vm253, %v74, -inf
  %v717 = vrot.slane %v716, 4
  %v718 = vmax.f32 %v716, %v717
  %v719 = vrot.slane %v718, 2
  %v720 = vmax.f32 %v718, %v719
  %v721 = vrot.slane %v720, 1
  %v722 = vmax.f32 %v720, %v721
  %v723 = vsel %vm253, %v75, -inf
  %v724 = vrot.slane %v723, 4
  %v725 = vmax.f32 %v723, %v724
  %v726 = vrot.slane %v725, 2
  %v727 = vmax.f32 %v725, %v726
  %v728 = vrot.slane %v727, 1
  %v729 = vmax.f32 %v727, %v728
  %v730 = vsel %vm253, %v76, -inf
  %v731 = vrot.slane %v730, 4
  %v732 = vmax.f32 %v730, %v731
  %v733 = vrot.slane %v732, 2
  %v734 = vmax.f32 %v732, %v733
  %v735 = vrot.slane %v734, 1
  %v736 = vmax.f32 %v734, %v735
  %v737 = vsel %vm253, %v77, -inf
  %v738 = vrot.slane %v737, 4
  %v739 = vmax.f32 %v737, %v738
  %v740 = vrot.slane %v739, 2
  %v741 = vmax.f32 %v739, %v740
  %v742 = vrot.slane %v741, 1
  %v743 = vmax.f32 %v741, %v742
  %v744 = vsel %vm253, %v78, -inf
  %v745 = vrot.slane %v744, 4
  %v746 = vmax.f32 %v744, %v745
  %v747 = vrot.slane %v746, 2
  %v748 = vmax.f32 %v746, %v747
  %v749 = vrot.slane %v748, 1
  %v750 = vmax.f32 %v748, %v749
  %v751 = vsel %vm253, %v79, -inf
  %v752 = vrot.slane %v751, 4
  %v753 = vmax.f32 %v751, %v752
  %v754 = vrot.slane %v753, 2
  %v755 = vmax.f32 %v753, %v754
  %v756 = vrot.slane %v755, 1
  %v757 = vmax.f32 %v755, %v756
  %v758 = vsel %vm253, %v80, -inf
  %v759 = vrot.slane %v758, 4
  %v760 = vmax.f32 %v758, %v759
  %v761 = vrot.slane %v760, 2
  %v762 = vmax.f32 %v760, %v761
  %v763 = vrot.slane %v762, 1
  %v764 = vmax.f32 %v762, %v763
  %v765 = vsel %vm253, %v81, -inf
  %v766 = vrot.slane %v765, 4
  %v767 = vmax.f32 %v765, %v766
  %v768 = vrot.slane %v767, 2
  %v769 = vmax.f32 %v767, %v768
  %v770 = vrot.slane %v769, 1
  %v771 = vmax.f32 %v769, %v770
  %v772 = vsel %vm253, %v82, -inf
  %v773 = vrot.slane %v772, 4
  %v774 = vmax.f32 %v772, %v773
  %v775 = vrot.slane %v774, 2
  %v776 = vmax.f32 %v774, %v775
  %v777 = vrot.slane %v776, 1
  %v778 = vmax.f32 %v776, %v777
  %v779 = vsel %vm253, %v83, -inf
  %v780 = vrot.slane %v779, 4
  %v781 = vmax.f32 %v779, %v780
  %v782 = vrot.slane %v781, 2
  %v783 = vmax.f32 %v781, %v782
  %v784 = vrot.slane %v783, 1
  %v785 = vmax.f32 %v783, %v784
  %v786 = vsel %vm253, %v84, -inf
  %v787 = vrot.slane %v786, 4
  %v788 = vmax.f32 %v786, %v787
  %v789 = vrot.slane %v788, 2
  %v790 = vmax.f32 %v788, %v789
  %v791 = vrot.slane %v790, 1
  %v792 = vmax.f32 %v790, %v791
  %v793 = vsel %vm253, %v85, -inf
  %v794 = vrot.slane %v793, 4
  %v795 = vmax.f32 %v793, %v794
  %v796 = vrot.slane %v795, 2
  %v797 = vmax.f32 %v795, %v796
  %v798 = vrot.slane %v797, 1
  %v799 = vmax.f32 %v797, %v798
  %v800 = vsel %vm253, %v86, -inf
  %v801 = vrot.slane %v800, 4
  %v802 = vmax.f32 %v800, %v801
  %v803 = vrot.slane %v802, 2
  %v804 = vmax.f32 %v802, %v803
  %v805 = vrot.slane %v804, 1
  %v806 = vmax.f32 %v804, %v805
  %v807 = vsel %vm253, %v87, -inf
  %v808 = vrot.slane %v807, 4
  %v809 = vmax.f32 %v807, %v808
  %v810 = vrot.slane %v809, 2
  %v811 = vmax.f32 %v809, %v810
  %v812 = vrot.slane %v811, 1
  %v813 = vmax.f32 %v811, %v812
  %v814 = vsel %vm253, %v88, -inf
  %v815 = vrot.slane %v814, 4
  %v816 = vmax.f32 %v814, %v815
  %v817 = vrot.slane %v816, 2
  %v818 = vmax.f32 %v816, %v817
  %v819 = vrot.slane %v818, 1
  %v820 = vmax.f32 %v818, %v819
  %v821 = vsel %vm253, %v89, -inf
  %v822 = vrot.slane %v821, 4
  %v823 = vmax.f32 %v821, %v822
  %v824 = vrot.slane %v823, 2
  %v825 = vmax.f32 %v823, %v824
  %v826 = vrot.slane %v825, 1
  %v827 = vmax.f32 %v825, %v826
  %v828 = vsel %vm253, %v90, -inf
  %v829 = vrot.slane %v828, 4
  %v830 = vmax.f32 %v828, %v829
  %v831 = vrot.slane %v830, 2
  %v832 = vmax.f32 %v830, %v831
  %v833 = vrot.slane %v832, 1
  %v834 = vmax.f32 %v832, %v833
  %v835 = vsel %vm253, %v91, -inf
  %v836 = vrot.slane %v835, 4
  %v837 = vmax.f32 %v835, %v836
  %v838 = vrot.slane %v837, 2
  %v839 = vmax.f32 %v837, %v838
  %v840 = vrot.slane %v839, 1
  %v841 = vmax.f32 %v839, %v840
  %v842 = vsel %vm253, %v92, -inf
  %v843 = vrot.slane %v842, 4
  %v844 = vmax.f32 %v842, %v843
  %v845 = vrot.slane %v844, 2
  %v846 = vmax.f32 %v844, %v845
  %v847 = vrot.slane %v846, 1
  %v848 = vmax.f32 %v846, %v847
  %v849 = vsel %vm253, %v93, -inf
  %v850 = vrot.slane %v849, 4
  %v851 = vmax.f32 %v849, %v850
  %v852 = vrot.slane %v851, 2
  %v853 = vmax.f32 %v851, %v852
  %v854 = vrot.slane %v853, 1
  %v855 = vmax.f32 %v853, %v854
  %v856 = vsel %vm253, %v94, -inf
  %v857 = vrot.slane %v856, 4
  %v858 = vmax.f32 %v856, %v857
  %v859 = vrot.slane %v858, 2
  %v860 = vmax.f32 %v858, %v859
  %v861 = vrot.slane %v860, 1
  %v862 = vmax.f32 %v860, %v861
  %v863 = vsel %vm253, %v95, -inf
  %v864 = vrot.slane %v863, 4
  %v865 = vmax.f32 %v863, %v864
  %v866 = vrot.slane %v865, 2
  %v867 = vmax.f32 %v865, %v866
  %v868 = vrot.slane %v867, 1
  %v869 = vmax.f32 %v867, %v868
  %v870 = vsel %vm253, %v96, -inf
  %v871 = vrot.slane %v870, 4
  %v872 = vmax.f32 %v870, %v871
  %v873 = vrot.slane %v872, 2
  %v874 = vmax.f32 %v872, %v873
  %v875 = vrot.slane %v874, 1
  %v876 = vmax.f32 %v874, %v875
  %v877 = vsel %vm253, %v97, -inf
  %v878 = vrot.slane %v877, 4
  %v879 = vmax.f32 %v877, %v878
  %v880 = vrot.slane %v879, 2
  %v881 = vmax.f32 %v879, %v880
  %v882 = vrot.slane %v881, 1
  %v883 = vmax.f32 %v881, %v882
  %v884 = vsel %vm253, %v98, -inf
  %v885 = vrot.slane %v884, 4
  %v886 = vmax.f32 %v884, %v885
  %v887 = vrot.slane %v886, 2
  %v888 = vmax.f32 %v886, %v887
  %v889 = vrot.slane %v888, 1
  %v890 = vmax.f32 %v888, %v889
  %v891 = vsel %vm253, %v99, -inf
  %v892 = vrot.slane %v891, 4
  %v893 = vmax.f32 %v891, %v892
  %v894 = vrot.slane %v893, 2
  %v895 = vmax.f32 %v893, %v894
  %v896 = vrot.slane %v895, 1
  %v897 = vmax.f32 %v895, %v896
  %v898 = vsel %vm253, %v100, -inf
  %v899 = vrot.slane %v898, 4
  %v900 = vmax.f32 %v898, %v899
  %v901 = vrot.slane %v900, 2
  %v902 = vmax.f32 %v900, %v901
  %v903 = vrot.slane %v902, 1
  %v904 = vmax.f32 %v902, %v903
  %v905 = vsel %vm253, %v101, -inf
  %v906 = vrot.slane %v905, 4
  %v907 = vmax.f32 %v905, %v906
  %v908 = vrot.slane %v907, 2
  %v909 = vmax.f32 %v907, %v908
  %v910 = vrot.slane %v909, 1
  %v911 = vmax.f32 %v909, %v910
  %v912 = vsel %vm253, %v102, -inf
  %v913 = vrot.slane %v912, 4
  %v914 = vmax.f32 %v912, %v913
  %v915 = vrot.slane %v914, 2
  %v916 = vmax.f32 %v914, %v915
  %v917 = vrot.slane %v916, 1
  %v918 = vmax.f32 %v916, %v917
  %v919 = vsel %vm253, %v103, -inf
  %v920 = vrot.slane %v919, 4
  %v921 = vmax.f32 %v919, %v920
  %v922 = vrot.slane %v921, 2
  %v923 = vmax.f32 %v921, %v922
  %v924 = vrot.slane %v923, 1
  %v925 = vmax.f32 %v923, %v924
  %v926 = vsel %vm253, %v104, -inf
  %v927 = vrot.slane %v926, 4
  %v928 = vmax.f32 %v926, %v927
  %v929 = vrot.slane %v928, 2
  %v930 = vmax.f32 %v928, %v929
  %v931 = vrot.slane %v930, 1
  %v932 = vmax.f32 %v930, %v931
  %v933 = vsel %vm253, %v105, -inf
  %v934 = vrot.slane %v933, 4
  %v935 = vmax.f32 %v933, %v934
  %v936 = vrot.slane %v935, 2
  %v937 = vmax.f32 %v935, %v936
  %v938 = vrot.slane %v937, 1
  %v939 = vmax.f32 %v937, %v938
  %v940 = vsel %vm253, %v106, -inf
  %v941 = vrot.slane %v940, 4
  %v942 = vmax.f32 %v940, %v941
  %v943 = vrot.slane %v942, 2
  %v944 = vmax.f32 %v942, %v943
  %v945 = vrot.slane %v944, 1
  %v946 = vmax.f32 %v944, %v945
  %v947 = vsel %vm253, %v107, -inf
  %v948 = vrot.slane %v947, 4
  %v949 = vmax.f32 %v947, %v948
  %v950 = vrot.slane %v949, 2
  %v951 = vmax.f32 %v949, %v950
  %v952 = vrot.slane %v951, 1
  %v953 = vmax.f32 %v951, %v952
  %v954 = vsel %vm253, %v108, -inf
  %v955 = vrot.slane %v954, 4
  %v956 = vmax.f32 %v954, %v955
  %v957 = vrot.slane %v956, 2
  %v958 = vmax.f32 %v956, %v957
  %v959 = vrot.slane %v958, 1
  %v960 = vmax.f32 %v958, %v959
  %v961 = vsel %vm253, %v109, -inf
  %v962 = vrot.slane %v961, 4
  %v963 = vmax.f32 %v961, %v962
  %v964 = vrot.slane %v963, 2
  %v965 = vmax.f32 %v963, %v964
  %v966 = vrot.slane %v965, 1
  %v967 = vmax.f32 %v965, %v966
  %v968 = vsel %vm253, %v110, -inf
  %v969 = vrot.slane %v968, 4
  %v970 = vmax.f32 %v968, %v969
  %v971 = vrot.slane %v970, 2
  %v972 = vmax.f32 %v970, %v971
  %v973 = vrot.slane %v972, 1
  %v974 = vmax.f32 %v972, %v973
  %v975 = vsel %vm253, %v111, -inf
  %v976 = vrot.slane %v975, 4
  %v977 = vmax.f32 %v975, %v976
  %v978 = vrot.slane %v977, 2
  %v979 = vmax.f32 %v977, %v978
  %v980 = vrot.slane %v979, 1
  %v981 = vmax.f32 %v979, %v980
  %v982 = vsel %vm253, %v112, -inf
  %v983 = vrot.slane %v982, 4
  %v984 = vmax.f32 %v982, %v983
  %v985 = vrot.slane %v984, 2
  %v986 = vmax.f32 %v984, %v985
  %v987 = vrot.slane %v986, 1
  %v988 = vmax.f32 %v986, %v987
  %v989 = vsel %vm253, %v113, -inf
  %v990 = vrot.slane %v989, 4
  %v991 = vmax.f32 %v989, %v990
  %v992 = vrot.slane %v991, 2
  %v993 = vmax.f32 %v991, %v992
  %v994 = vrot.slane %v993, 1
  %v995 = vmax.f32 %v993, %v994
  %v996 = vsel %vm253, %v114, -inf
  %v997 = vrot.slane %v996, 4
  %v998 = vmax.f32 %v996, %v997
  %v999 = vrot.slane %v998, 2
  %v1000 = vmax.f32 %v998, %v999
  %v1001 = vrot.slane %v1000, 1
  %v1002 = vmax.f32 %v1000, %v1001
  %v1003 = vsel %vm253, %v115, -inf
  %v1004 = vrot.slane %v1003, 4
  %v1005 = vmax.f32 %v1003, %v1004
  %v1006 = vrot.slane %v1005, 2
  %v1007 = vmax.f32 %v1005, %v1006
  %v1008 = vrot.slane %v1007, 1
  %v1009 = vmax.f32 %v1007, %v1008
  %v1010 = vsel %vm253, %v116, -inf
  %v1011 = vrot.slane %v1010, 4
  %v1012 = vmax.f32 %v1010, %v1011
  %v1013 = vrot.slane %v1012, 2
  %v1014 = vmax.f32 %v1012, %v1013
  %v1015 = vrot.slane %v1014, 1
  %v1016 = vmax.f32 %v1014, %v1015
  %v1017 = vsel %vm253, %v117, -inf
  %v1018 = vrot.slane %v1017, 4
  %v1019 = vmax.f32 %v1017, %v1018
  %v1020 = vrot.slane %v1019, 2
  %v1021 = vmax.f32 %v1019, %v1020
  %v1022 = vrot.slane %v1021, 1
  %v1023 = vmax.f32 %v1021, %v1022
  %v1024 = vsel %vm253, %v118, -inf
  %v1025 = vrot.slane %v1024, 4
  %v1026 = vmax.f32 %v1024, %v1025
  %v1027 = vrot.slane %v1026, 2
  %v1028 = vmax.f32 %v1026, %v1027
  %v1029 = vrot.slane %v1028, 1
  %v1030 = vmax.f32 %v1028, %v1029
  %v1031 = vsel %vm253, %v119, -inf
  %v1032 = vrot.slane %v1031, 4
  %v1033 = vmax.f32 %v1031, %v1032
  %v1034 = vrot.slane %v1033, 2
  %v1035 = vmax.f32 %v1033, %v1034
  %v1036 = vrot.slane %v1035, 1
  %v1037 = vmax.f32 %v1035, %v1036
  %v1038 = vsel %vm253, %v120, -inf
  %v1039 = vrot.slane %v1038, 4
  %v1040 = vmax.f32 %v1038, %v1039
  %v1041 = vrot.slane %v1040, 2
  %v1042 = vmax.f32 %v1040, %v1041
  %v1043 = vrot.slane %v1042, 1
  %v1044 = vmax.f32 %v1042, %v1043
  %v1045 = vsel %vm253, %v121, -inf
  %v1046 = vrot.slane %v1045, 4
  %v1047 = vmax.f32 %v1045, %v1046
  %v1048 = vrot.slane %v1047, 2
  %v1049 = vmax.f32 %v1047, %v1048
  %v1050 = vrot.slane %v1049, 1
  %v1051 = vmax.f32 %v1049, %v1050
  %v1052 = vsel %vm253, %v122, -inf
  %v1053 = vrot.slane %v1052, 4
  %v1054 = vmax.f32 %v1052, %v1053
  %v1055 = vrot.slane %v1054, 2
  %v1056 = vmax.f32 %v1054, %v1055
  %v1057 = vrot.slane %v1056, 1
  %v1058 = vmax.f32 %v1056, %v1057
  %v1059 = vsel %vm253, %v123, -inf
  %v1060 = vrot.slane %v1059, 4
  %v1061 = vmax.f32 %v1059, %v1060
  %v1062 = vrot.slane %v1061, 2
  %v1063 = vmax.f32 %v1061, %v1062
  %v1064 = vrot.slane %v1063, 1
  %v1065 = vmax.f32 %v1063, %v1064
  %v1066 = vsel %vm253, %v124, -inf
  %v1067 = vrot.slane %v1066, 4
  %v1068 = vmax.f32 %v1066, %v1067
  %v1069 = vrot.slane %v1068, 2
  %v1070 = vmax.f32 %v1068, %v1069
  %v1071 = vrot.slane %v1070, 1
  %v1072 = vmax.f32 %v1070, %v1071
  %v1073 = vsel %vm253, %v125, -inf
  %v1074 = vrot.slane %v1073, 4
  %v1075 = vmax.f32 %v1073, %v1074
  %v1076 = vrot.slane %v1075, 2
  %v1077 = vmax.f32 %v1075, %v1076
  %v1078 = vrot.slane %v1077, 1
  %v1079 = vmax.f32 %v1077, %v1078
  %v1080 = vsel %vm253, %v126, -inf
  %v1081 = vrot.slane %v1080, 4
  %v1082 = vmax.f32 %v1080, %v1081
  %v1083 = vrot.slane %v1082, 2
  %v1084 = vmax.f32 %v1082, %v1083
  %v1085 = vrot.slane %v1084, 1
  %v1086 = vmax.f32 %v1084, %v1085
  %v1087 = vsel %vm253, %v127, -inf
  %v1088 = vrot.slane %v1087, 4
  %v1089 = vmax.f32 %v1087, %v1088
  %v1090 = vrot.slane %v1089, 2
  %v1091 = vmax.f32 %v1089, %v1090
  %v1092 = vrot.slane %v1091, 1
  %v1093 = vmax.f32 %v1091, %v1092
  %v1094 = vsel %vm253, %v128, -inf
  %v1095 = vrot.slane %v1094, 4
  %v1096 = vmax.f32 %v1094, %v1095
  %v1097 = vrot.slane %v1096, 2
  %v1098 = vmax.f32 %v1096, %v1097
  %v1099 = vrot.slane %v1098, 1
  %v1100 = vmax.f32 %v1098, %v1099
  %v1101 = vsel %vm253, %v129, -inf
  %v1102 = vrot.slane %v1101, 4
  %v1103 = vmax.f32 %v1101, %v1102
  %v1104 = vrot.slane %v1103, 2
  %v1105 = vmax.f32 %v1103, %v1104
  %v1106 = vrot.slane %v1105, 1
  %v1107 = vmax.f32 %v1105, %v1106
  %v1108 = vsel %vm253, %v130, -inf
  %v1109 = vrot.slane %v1108, 4
  %v1110 = vmax.f32 %v1108, %v1109
  %v1111 = vrot.slane %v1110, 2
  %v1112 = vmax.f32 %v1110, %v1111
  %v1113 = vrot.slane %v1112, 1
  %v1114 = vmax.f32 %v1112, %v1113
  %v1115 = vsel %vm253, %v131, -inf
  %v1116 = vrot.slane %v1115, 4
  %v1117 = vmax.f32 %v1115, %v1116
  %v1118 = vrot.slane %v1117, 2
  %v1119 = vmax.f32 %v1117, %v1118
  %v1120 = vrot.slane %v1119, 1
  %v1121 = vmax.f32 %v1119, %v1120
  %v1122 = vsel %vm253, %v132, -inf
  %v1123 = vrot.slane %v1122, 4
  %v1124 = vmax.f32 %v1122, %v1123
  %v1125 = vrot.slane %v1124, 2
  %v1126 = vmax.f32 %v1124, %v1125
  %v1127 = vrot.slane %v1126, 1
  %v1128 = vmax.f32 %v1126, %v1127
  %v1129 = vsel %vm253, %v133, -inf
  %v1130 = vrot.slane %v1129, 4
  %v1131 = vmax.f32 %v1129, %v1130
  %v1132 = vrot.slane %v1131, 2
  %v1133 = vmax.f32 %v1131, %v1132
  %v1134 = vrot.slane %v1133, 1
  %v1135 = vmax.f32 %v1133, %v1134
  %v1136 = vsel %vm253, %v134, -inf
  %v1137 = vrot.slane %v1136, 4
  %v1138 = vmax.f32 %v1136, %v1137
  %v1139 = vrot.slane %v1138, 2
  %v1140 = vmax.f32 %v1138, %v1139
  %v1141 = vrot.slane %v1140, 1
  %v1142 = vmax.f32 %v1140, %v1141
  %v1143 = vsel %vm253, %v135, -inf
  %v1144 = vrot.slane %v1143, 4
  %v1145 = vmax.f32 %v1143, %v1144
  %v1146 = vrot.slane %v1145, 2
  %v1147 = vmax.f32 %v1145, %v1146
  %v1148 = vrot.slane %v1147, 1
  %v1149 = vmax.f32 %v1147, %v1148
  %v1150 = vsel %vm253, %v136, -inf
  %v1151 = vrot.slane %v1150, 4
  %v1152 = vmax.f32 %v1150, %v1151
  %v1153 = vrot.slane %v1152, 2
  %v1154 = vmax.f32 %v1152, %v1153
  %v1155 = vrot.slane %v1154, 1
  %v1156 = vmax.f32 %v1154, %v1155
  %v1157 = vsel %vm253, %v137, -inf
  %v1158 = vrot.slane %v1157, 4
  %v1159 = vmax.f32 %v1157, %v1158
  %v1160 = vrot.slane %v1159, 2
  %v1161 = vmax.f32 %v1159, %v1160
  %v1162 = vrot.slane %v1161, 1
  %v1163 = vmax.f32 %v1161, %v1162
  %v1164 = vsel %vm253, %v138, -inf
  %v1165 = vrot.slane %v1164, 4
  %v1166 = vmax.f32 %v1164, %v1165
  %v1167 = vrot.slane %v1166, 2
  %v1168 = vmax.f32 %v1166, %v1167
  %v1169 = vrot.slane %v1168, 1
  %v1170 = vmax.f32 %v1168, %v1169
  %v1171 = vsel %vm253, %v139, -inf
  %v1172 = vrot.slane %v1171, 4
  %v1173 = vmax.f32 %v1171, %v1172
  %v1174 = vrot.slane %v1173, 2
  %v1175 = vmax.f32 %v1173, %v1174
  %v1176 = vrot.slane %v1175, 1
  %v1177 = vmax.f32 %v1175, %v1176
  %v1178 = vsel %vm253, %v140, -inf
  %v1179 = vrot.slane %v1178, 4
  %v1180 = vmax.f32 %v1178, %v1179
  %v1181 = vrot.slane %v1180, 2
  %v1182 = vmax.f32 %v1180, %v1181
  %v1183 = vrot.slane %v1182, 1
  %v1184 = vmax.f32 %v1182, %v1183
  %v1185 = vsel %vm253, %v141, -inf
  %v1186 = vrot.slane %v1185, 4
  %v1187 = vmax.f32 %v1185, %v1186
  %v1188 = vrot.slane %v1187, 2
  %v1189 = vmax.f32 %v1187, %v1188
  %v1190 = vrot.slane %v1189, 1
  %v1191 = vmax.f32 %v1189, %v1190
  %v1192 = vsel %vm253, %v142, -inf
  %v1193 = vrot.slane %v1192, 4
  %v1194 = vmax.f32 %v1192, %v1193
  %v1195 = vrot.slane %v1194, 2
  %v1196 = vmax.f32 %v1194, %v1195
  %v1197 = vrot.slane %v1196, 1
  %v1198 = vmax.f32 %v1196, %v1197
  %v1199 = vsel %vm253, %v143, -inf
  %v1200 = vrot.slane %v1199, 4
  %v1201 = vmax.f32 %v1199, %v1200
  %v1202 = vrot.slane %v1201, 2
  %v1203 = vmax.f32 %v1201, %v1202
  %v1204 = vrot.slane %v1203, 1
  %v1205 = vmax.f32 %v1203, %v1204
  %v1206 = vsel %vm253, %v144, -inf
  %v1207 = vrot.slane %v1206, 4
  %v1208 = vmax.f32 %v1206, %v1207
  %v1209 = vrot.slane %v1208, 2
  %v1210 = vmax.f32 %v1208, %v1209
  %v1211 = vrot.slane %v1210, 1
  %v1212 = vmax.f32 %v1210, %v1211
  %v1213 = vsel %vm253, %v145, -inf
  %v1214 = vrot.slane %v1213, 4
  %v1215 = vmax.f32 %v1213, %v1214
  %v1216 = vrot.slane %v1215, 2
  %v1217 = vmax.f32 %v1215, %v1216
  %v1218 = vrot.slane %v1217, 1
  %v1219 = vmax.f32 %v1217, %v1218
  %v1220 = vsel %vm253, %v146, -inf
  %v1221 = vrot.slane %v1220, 4
  %v1222 = vmax.f32 %v1220, %v1221
  %v1223 = vrot.slane %v1222, 2
  %v1224 = vmax.f32 %v1222, %v1223
  %v1225 = vrot.slane %v1224, 1
  %v1226 = vmax.f32 %v1224, %v1225
  %v1227 = vsel %vm253, %v147, -inf
  %v1228 = vrot.slane %v1227, 4
  %v1229 = vmax.f32 %v1227, %v1228
  %v1230 = vrot.slane %v1229, 2
  %v1231 = vmax.f32 %v1229, %v1230
  %v1232 = vrot.slane %v1231, 1
  %v1233 = vmax.f32 %v1231, %v1232
  %v1234 = vsel %vm253, %v148, -inf
  %v1235 = vrot.slane %v1234, 4
  %v1236 = vmax.f32 %v1234, %v1235
  %v1237 = vrot.slane %v1236, 2
  %v1238 = vmax.f32 %v1236, %v1237
  %v1239 = vrot.slane %v1238, 1
  %v1240 = vmax.f32 %v1238, %v1239
  %v1241 = vsel %vm253, %v149, -inf
  %v1242 = vrot.slane %v1241, 4
  %v1243 = vmax.f32 %v1241, %v1242
  %v1244 = vrot.slane %v1243, 2
  %v1245 = vmax.f32 %v1243, %v1244
  %v1246 = vrot.slane %v1245, 1
  %v1247 = vmax.f32 %v1245, %v1246
  %v1248 = vsel %vm253, %v150, -inf
  %v1249 = vrot.slane %v1248, 4
  %v1250 = vmax.f32 %v1248, %v1249
  %v1251 = vrot.slane %v1250, 2
  %v1252 = vmax.f32 %v1250, %v1251
  %v1253 = vrot.slane %v1252, 1
  %v1254 = vmax.f32 %v1252, %v1253
  %v1255 = vsel %vm253, %v151, -inf
  %v1256 = vrot.slane %v1255, 4
  %v1257 = vmax.f32 %v1255, %v1256
  %v1258 = vrot.slane %v1257, 2
  %v1259 = vmax.f32 %v1257, %v1258
  %v1260 = vrot.slane %v1259, 1
  %v1261 = vmax.f32 %v1259, %v1260
  %v1262 = vsel %vm253, %v152, -inf
  %v1263 = vrot.slane %v1262, 4
  %v1264 = vmax.f32 %v1262, %v1263
  %v1265 = vrot.slane %v1264, 2
  %v1266 = vmax.f32 %v1264, %v1265
  %v1267 = vrot.slane %v1266, 1
  %v1268 = vmax.f32 %v1266, %v1267
  %v1269 = vsel %vm253, %v153, -inf
  %v1270 = vrot.slane %v1269, 4
  %v1271 = vmax.f32 %v1269, %v1270
  %v1272 = vrot.slane %v1271, 2
  %v1273 = vmax.f32 %v1271, %v1272
  %v1274 = vrot.slane %v1273, 1
  %v1275 = vmax.f32 %v1273, %v1274
  %v1276 = vsel %vm253, %v154, -inf
  %v1277 = vrot.slane %v1276, 4
  %v1278 = vmax.f32 %v1276, %v1277
  %v1279 = vrot.slane %v1278, 2
  %v1280 = vmax.f32 %v1278, %v1279
  %v1281 = vrot.slane %v1280, 1
  %v1282 = vmax.f32 %v1280, %v1281
  %v1283 = vsel %vm253, %v155, -inf
  %v1284 = vrot.slane %v1283, 4
  %v1285 = vmax.f32 %v1283, %v1284
  %v1286 = vrot.slane %v1285, 2
  %v1287 = vmax.f32 %v1285, %v1286
  %v1288 = vrot.slane %v1287, 1
  %v1289 = vmax.f32 %v1287, %v1288
  %v1290 = vsel %vm253, %v156, -inf
  %v1291 = vrot.slane %v1290, 4
  %v1292 = vmax.f32 %v1290, %v1291
  %v1293 = vrot.slane %v1292, 2
  %v1294 = vmax.f32 %v1292, %v1293
  %v1295 = vrot.slane %v1294, 1
  %v1296 = vmax.f32 %v1294, %v1295
  %v1297 = vsel %vm253, %v157, -inf
  %v1298 = vrot.slane %v1297, 4
  %v1299 = vmax.f32 %v1297, %v1298
  %v1300 = vrot.slane %v1299, 2
  %v1301 = vmax.f32 %v1299, %v1300
  %v1302 = vrot.slane %v1301, 1
  %v1303 = vmax.f32 %v1301, %v1302
  %v1304 = vsel %vm253, %v158, -inf
  %v1305 = vrot.slane %v1304, 4
  %v1306 = vmax.f32 %v1304, %v1305
  %v1307 = vrot.slane %v1306, 2
  %v1308 = vmax.f32 %v1306, %v1307
  %v1309 = vrot.slane %v1308, 1
  %v1310 = vmax.f32 %v1308, %v1309
  %v1311 = vsel %vm253, %v159, -inf
  %v1312 = vrot.slane %v1311, 4
  %v1313 = vmax.f32 %v1311, %v1312
  %v1314 = vrot.slane %v1313, 2
  %v1315 = vmax.f32 %v1313, %v1314
  %v1316 = vrot.slane %v1315, 1
  %v1317 = vmax.f32 %v1315, %v1316
  %v1318 = vsel %vm253, %v160, -inf
  %v1319 = vrot.slane %v1318, 4
  %v1320 = vmax.f32 %v1318, %v1319
  %v1321 = vrot.slane %v1320, 2
  %v1322 = vmax.f32 %v1320, %v1321
  %v1323 = vrot.slane %v1322, 1
  %v1324 = vmax.f32 %v1322, %v1323
  %v1325 = vsel %vm253, %v161, -inf
  %v1326 = vrot.slane %v1325, 4
  %v1327 = vmax.f32 %v1325, %v1326
  %v1328 = vrot.slane %v1327, 2
  %v1329 = vmax.f32 %v1327, %v1328
  %v1330 = vrot.slane %v1329, 1
  %v1331 = vmax.f32 %v1329, %v1330
  %v1332 = vsel %vm253, %v162, -inf
  %v1333 = vrot.slane %v1332, 4
  %v1334 = vmax.f32 %v1332, %v1333
  %v1335 = vrot.slane %v1334, 2
  %v1336 = vmax.f32 %v1334, %v1335
  %v1337 = vrot.slane %v1336, 1
  %v1338 = vmax.f32 %v1336, %v1337
  %v1339 = vsel %vm253, %v163, -inf
  %v1340 = vrot.slane %v1339, 4
  %v1341 = vmax.f32 %v1339, %v1340
  %v1342 = vrot.slane %v1341, 2
  %v1343 = vmax.f32 %v1341, %v1342
  %v1344 = vrot.slane %v1343, 1
  %v1345 = vmax.f32 %v1343, %v1344
  %v1346 = vsel %vm253, %v164, -inf
  %v1347 = vrot.slane %v1346, 4
  %v1348 = vmax.f32 %v1346, %v1347
  %v1349 = vrot.slane %v1348, 2
  %v1350 = vmax.f32 %v1348, %v1349
  %v1351 = vrot.slane %v1350, 1
  %v1352 = vmax.f32 %v1350, %v1351
  %v1353 = vsel %vm253, %v165, -inf
  %v1354 = vrot.slane %v1353, 4
  %v1355 = vmax.f32 %v1353, %v1354
  %v1356 = vrot.slane %v1355, 2
  %v1357 = vmax.f32 %v1355, %v1356
  %v1358 = vrot.slane %v1357, 1
  %v1359 = vmax.f32 %v1357, %v1358
  %v1360 = vsel %vm253, %v166, -inf
  %v1361 = vrot.slane %v1360, 4
  %v1362 = vmax.f32 %v1360, %v1361
  %v1363 = vrot.slane %v1362, 2
  %v1364 = vmax.f32 %v1362, %v1363
  %v1365 = vrot.slane %v1364, 1
  %v1366 = vmax.f32 %v1364, %v1365
  %v1367 = vsel %vm253, %v167, -inf
  %v1368 = vrot.slane %v1367, 4
  %v1369 = vmax.f32 %v1367, %v1368
  %v1370 = vrot.slane %v1369, 2
  %v1371 = vmax.f32 %v1369, %v1370
  %v1372 = vrot.slane %v1371, 1
  %v1373 = vmax.f32 %v1371, %v1372
  %v1374 = vsel %vm253, %v168, -inf
  %v1375 = vrot.slane %v1374, 4
  %v1376 = vmax.f32 %v1374, %v1375
  %v1377 = vrot.slane %v1376, 2
  %v1378 = vmax.f32 %v1376, %v1377
  %v1379 = vrot.slane %v1378, 1
  %v1380 = vmax.f32 %v1378, %v1379
  %v1381 = vsel %vm253, %v169, -inf
  %v1382 = vrot.slane %v1381, 4
  %v1383 = vmax.f32 %v1381, %v1382
  %v1384 = vrot.slane %v1383, 2
  %v1385 = vmax.f32 %v1383, %v1384
  %v1386 = vrot.slane %v1385, 1
  %v1387 = vmax.f32 %v1385, %v1386
  %v1388 = vsel %vm253, %v170, -inf
  %v1389 = vrot.slane %v1388, 4
  %v1390 = vmax.f32 %v1388, %v1389
  %v1391 = vrot.slane %v1390, 2
  %v1392 = vmax.f32 %v1390, %v1391
  %v1393 = vrot.slane %v1392, 1
  %v1394 = vmax.f32 %v1392, %v1393
  %v1395 = vsel %vm253, %v171, -inf
  %v1396 = vrot.slane %v1395, 4
  %v1397 = vmax.f32 %v1395, %v1396
  %v1398 = vrot.slane %v1397, 2
  %v1399 = vmax.f32 %v1397, %v1398
  %v1400 = vrot.slane %v1399, 1
  %v1401 = vmax.f32 %v1399, %v1400
  %v1402 = vsel %vm253, %v172, -inf
  %v1403 = vrot.slane %v1402, 4
  %v1404 = vmax.f32 %v1402, %v1403
  %v1405 = vrot.slane %v1404, 2
  %v1406 = vmax.f32 %v1404, %v1405
  %v1407 = vrot.slane %v1406, 1
  %v1408 = vmax.f32 %v1406, %v1407
  %v1409 = vsel %vm253, %v173, -inf
  %v1410 = vrot.slane %v1409, 4
  %v1411 = vmax.f32 %v1409, %v1410
  %v1412 = vrot.slane %v1411, 2
  %v1413 = vmax.f32 %v1411, %v1412
  %v1414 = vrot.slane %v1413, 1
  %v1415 = vmax.f32 %v1413, %v1414
  %v1416 = vsel %vm253, %v174, -inf
  %v1417 = vrot.slane %v1416, 4
  %v1418 = vmax.f32 %v1416, %v1417
  %v1419 = vrot.slane %v1418, 2
  %v1420 = vmax.f32 %v1418, %v1419
  %v1421 = vrot.slane %v1420, 1
  %v1422 = vmax.f32 %v1420, %v1421
  %v1423 = vsel %vm253, %v175, -inf
  %v1424 = vrot.slane %v1423, 4
  %v1425 = vmax.f32 %v1423, %v1424
  %v1426 = vrot.slane %v1425, 2
  %v1427 = vmax.f32 %v1425, %v1426
  %v1428 = vrot.slane %v1427, 1
  %v1429 = vmax.f32 %v1427, %v1428
  %v1430 = vsel %vm253, %v176, -inf
  %v1431 = vrot.slane %v1430, 4
  %v1432 = vmax.f32 %v1430, %v1431
  %v1433 = vrot.slane %v1432, 2
  %v1434 = vmax.f32 %v1432, %v1433
  %v1435 = vrot.slane %v1434, 1
  %v1436 = vmax.f32 %v1434, %v1435
  %v1437 = vsel %vm253, %v177, -inf
  %v1438 = vrot.slane %v1437, 4
  %v1439 = vmax.f32 %v1437, %v1438
  %v1440 = vrot.slane %v1439, 2
  %v1441 = vmax.f32 %v1439, %v1440
  %v1442 = vrot.slane %v1441, 1
  %v1443 = vmax.f32 %v1441, %v1442
  %v1444 = vsel %vm253, %v178, -inf
  %v1445 = vrot.slane %v1444, 4
  %v1446 = vmax.f32 %v1444, %v1445
  %v1447 = vrot.slane %v1446, 2
  %v1448 = vmax.f32 %v1446, %v1447
  %v1449 = vrot.slane %v1448, 1
  %v1450 = vmax.f32 %v1448, %v1449
  %v1451 = vsel %vm253, %v179, -inf
  %v1452 = vrot.slane %v1451, 4
  %v1453 = vmax.f32 %v1451, %v1452
  %v1454 = vrot.slane %v1453, 2
  %v1455 = vmax.f32 %v1453, %v1454
  %v1456 = vrot.slane %v1455, 1
  %v1457 = vmax.f32 %v1455, %v1456
  %v1458 = vsel %vm253, %v180, -inf
  %v1459 = vrot.slane %v1458, 4
  %v1460 = vmax.f32 %v1458, %v1459
  %v1461 = vrot.slane %v1460, 2
  %v1462 = vmax.f32 %v1460, %v1461
  %v1463 = vrot.slane %v1462, 1
  %v1464 = vmax.f32 %v1462, %v1463
  %v1465 = vsel %vm253, %v181, -inf
  %v1466 = vrot.slane %v1465, 4
  %v1467 = vmax.f32 %v1465, %v1466
  %v1468 = vrot.slane %v1467, 2
  %v1469 = vmax.f32 %v1467, %v1468
  %v1470 = vrot.slane %v1469, 1
  %v1471 = vmax.f32 %v1469, %v1470
  %v1472 = vsel %vm253, %v182, -inf
  %v1473 = vrot.slane %v1472, 4
  %v1474 = vmax.f32 %v1472, %v1473
  %v1475 = vrot.slane %v1474, 2
  %v1476 = vmax.f32 %v1474, %v1475
  %v1477 = vrot.slane %v1476, 1
  %v1478 = vmax.f32 %v1476, %v1477
  %v1479 = vsel %vm253, %v183, -inf
  %v1480 = vrot.slane %v1479, 4
  %v1481 = vmax.f32 %v1479, %v1480
  %v1482 = vrot.slane %v1481, 2
  %v1483 = vmax.f32 %v1481, %v1482
  %v1484 = vrot.slane %v1483, 1
  %v1485 = vmax.f32 %v1483, %v1484
  %v1486 = vsel %vm253, %v184, -inf
  %v1487 = vrot.slane %v1486, 4
  %v1488 = vmax.f32 %v1486, %v1487
  %v1489 = vrot.slane %v1488, 2
  %v1490 = vmax.f32 %v1488, %v1489
  %v1491 = vrot.slane %v1490, 1
  %v1492 = vmax.f32 %v1490, %v1491
  %v1493 = vsel %vm253, %v185, -inf
  %v1494 = vrot.slane %v1493, 4
  %v1495 = vmax.f32 %v1493, %v1494
  %v1496 = vrot.slane %v1495, 2
  %v1497 = vmax.f32 %v1495, %v1496
  %v1498 = vrot.slane %v1497, 1
  %v1499 = vmax.f32 %v1497, %v1498
  %v1500 = vsel %vm253, %v186, -inf
  %v1501 = vrot.slane %v1500, 4
  %v1502 = vmax.f32 %v1500, %v1501
  %v1503 = vrot.slane %v1502, 2
  %v1504 = vmax.f32 %v1502, %v1503
  %v1505 = vrot.slane %v1504, 1
  %v1506 = vmax.f32 %v1504, %v1505
  %v1507 = vsel %vm253, %v187, -inf
  %v1508 = vrot.slane %v1507, 4
  %v1509 = vmax.f32 %v1507, %v1508
  %v1510 = vrot.slane %v1509, 2
  %v1511 = vmax.f32 %v1509, %v1510
  %v1512 = vrot.slane %v1511, 1
  %v1513 = vmax.f32 %v1511, %v1512
  %v1514 = vsel %vm253, %v188, -inf
  %v1515 = vrot.slane %v1514, 4
  %v1516 = vmax.f32 %v1514, %v1515
  %v1517 = vrot.slane %v1516, 2
  %v1518 = vmax.f32 %v1516, %v1517
  %v1519 = vrot.slane %v1518, 1
  %v1520 = vmax.f32 %v1518, %v1519
  %v1521 = vsel %vm253, %v189, -inf
  %v1522 = vrot.slane %v1521, 4
  %v1523 = vmax.f32 %v1521, %v1522
  %v1524 = vrot.slane %v1523, 2
  %v1525 = vmax.f32 %v1523, %v1524
  %v1526 = vrot.slane %v1525, 1
  %v1527 = vmax.f32 %v1525, %v1526
  %v1528 = vsel %vm253, %v190, -inf
  %v1529 = vrot.slane %v1528, 4
  %v1530 = vmax.f32 %v1528, %v1529
  %v1531 = vrot.slane %v1530, 2
  %v1532 = vmax.f32 %v1530, %v1531
  %v1533 = vrot.slane %v1532, 1
  %v1534 = vmax.f32 %v1532, %v1533
  %v1535 = vsel %vm253, %v191, -inf
  %v1536 = vrot.slane %v1535, 4
  %v1537 = vmax.f32 %v1535, %v1536
  %v1538 = vrot.slane %v1537, 2
  %v1539 = vmax.f32 %v1537, %v1538
  %v1540 = vrot.slane %v1539, 1
  %v1541 = vmax.f32 %v1539, %v1540
  %v1542 = vsel %vm253, %v192, -inf
  %v1543 = vrot.slane %v1542, 4
  %v1544 = vmax.f32 %v1542, %v1543
  %v1545 = vrot.slane %v1544, 2
  %v1546 = vmax.f32 %v1544, %v1545
  %v1547 = vrot.slane %v1546, 1
  %v1548 = vmax.f32 %v1546, %v1547
  %v1549 = vsel %vm253, %v193, -inf
  %v1550 = vrot.slane %v1549, 4
  %v1551 = vmax.f32 %v1549, %v1550
  %v1552 = vrot.slane %v1551, 2
  %v1553 = vmax.f32 %v1551, %v1552
  %v1554 = vrot.slane %v1553, 1
  %v1555 = vmax.f32 %v1553, %v1554
  %v1556 = vsel %vm253, %v194, -inf
  %v1557 = vrot.slane %v1556, 4
  %v1558 = vmax.f32 %v1556, %v1557
  %v1559 = vrot.slane %v1558, 2
  %v1560 = vmax.f32 %v1558, %v1559
  %v1561 = vrot.slane %v1560, 1
  %v1562 = vmax.f32 %v1560, %v1561
  %v1563 = vsel %vm253, %v195, -inf
  %v1564 = vrot.slane %v1563, 4
  %v1565 = vmax.f32 %v1563, %v1564
  %v1566 = vrot.slane %v1565, 2
  %v1567 = vmax.f32 %v1565, %v1566
  %v1568 = vrot.slane %v1567, 1
  %v1569 = vmax.f32 %v1567, %v1568
  %v1570 = vsel %vm253, %v196, -inf
  %v1571 = vrot.slane %v1570, 4
  %v1572 = vmax.f32 %v1570, %v1571
  %v1573 = vrot.slane %v1572, 2
  %v1574 = vmax.f32 %v1572, %v1573
  %v1575 = vrot.slane %v1574, 1
  %v1576 = vmax.f32 %v1574, %v1575
  %v1577 = vsel %vm253, %v197, -inf
  %v1578 = vrot.slane %v1577, 4
  %v1579 = vmax.f32 %v1577, %v1578
  %v1580 = vrot.slane %v1579, 2
  %v1581 = vmax.f32 %v1579, %v1580
  %v1582 = vrot.slane %v1581, 1
  %v1583 = vmax.f32 %v1581, %v1582
  %v1584 = vsel %vm253, %v198, -inf
  %v1585 = vrot.slane %v1584, 4
  %v1586 = vmax.f32 %v1584, %v1585
  %v1587 = vrot.slane %v1586, 2
  %v1588 = vmax.f32 %v1586, %v1587
  %v1589 = vrot.slane %v1588, 1
  %v1590 = vmax.f32 %v1588, %v1589
  %v1591 = vsel %vm253, %v199, -inf
  %v1592 = vrot.slane %v1591, 4
  %v1593 = vmax.f32 %v1591, %v1592
  %v1594 = vrot.slane %v1593, 2
  %v1595 = vmax.f32 %v1593, %v1594
  %v1596 = vrot.slane %v1595, 1
  %v1597 = vmax.f32 %v1595, %v1596
  %v1598 = vsel %vm253, %v200, -inf
  %v1599 = vrot.slane %v1598, 4
  %v1600 = vmax.f32 %v1598, %v1599
  %v1601 = vrot.slane %v1600, 2
  %v1602 = vmax.f32 %v1600, %v1601
  %v1603 = vrot.slane %v1602, 1
  %v1604 = vmax.f32 %v1602, %v1603
  %v1605 = vsel %vm253, %v201, -inf
  %v1606 = vrot.slane %v1605, 4
  %v1607 = vmax.f32 %v1605, %v1606
  %v1608 = vrot.slane %v1607, 2
  %v1609 = vmax.f32 %v1607, %v1608
  %v1610 = vrot.slane %v1609, 1
  %v1611 = vmax.f32 %v1609, %v1610
  %v1612 = vsel %vm253, %v202, -inf
  %v1613 = vrot.slane %v1612, 4
  %v1614 = vmax.f32 %v1612, %v1613
  %v1615 = vrot.slane %v1614, 2
  %v1616 = vmax.f32 %v1614, %v1615
  %v1617 = vrot.slane %v1616, 1
  %v1618 = vmax.f32 %v1616, %v1617
  %v1619 = vsel %vm253, %v203, -inf
  %v1620 = vrot.slane %v1619, 4
  %v1621 = vmax.f32 %v1619, %v1620
  %v1622 = vrot.slane %v1621, 2
  %v1623 = vmax.f32 %v1621, %v1622
  %v1624 = vrot.slane %v1623, 1
  %v1625 = vmax.f32 %v1623, %v1624
  %v1626 = vsel %vm253, %v204, -inf
  %v1627 = vrot.slane %v1626, 4
  %v1628 = vmax.f32 %v1626, %v1627
  %v1629 = vrot.slane %v1628, 2
  %v1630 = vmax.f32 %v1628, %v1629
  %v1631 = vrot.slane %v1630, 1
  %v1632 = vmax.f32 %v1630, %v1631
  %v1633 = vsel %vm253, %v205, -inf
  %v1634 = vrot.slane %v1633, 4
  %v1635 = vmax.f32 %v1633, %v1634
  %v1636 = vrot.slane %v1635, 2
  %v1637 = vmax.f32 %v1635, %v1636
  %v1638 = vrot.slane %v1637, 1
  %v1639 = vmax.f32 %v1637, %v1638
  %v1640 = vsel %vm253, %v206, -inf
  %v1641 = vrot.slane %v1640, 4
  %v1642 = vmax.f32 %v1640, %v1641
  %v1643 = vrot.slane %v1642, 2
  %v1644 = vmax.f32 %v1642, %v1643
  %v1645 = vrot.slane %v1644, 1
  %v1646 = vmax.f32 %v1644, %v1645
  %v1647 = vsel %vm253, %v207, -inf
  %v1648 = vrot.slane %v1647, 4
  %v1649 = vmax.f32 %v1647, %v1648
  %v1650 = vrot.slane %v1649, 2
  %v1651 = vmax.f32 %v1649, %v1650
  %v1652 = vrot.slane %v1651, 1
  %v1653 = vmax.f32 %v1651, %v1652
  %v1654 = vsel %vm253, %v208, -inf
  %v1655 = vrot.slane %v1654, 4
  %v1656 = vmax.f32 %v1654, %v1655
  %v1657 = vrot.slane %v1656, 2
  %v1658 = vmax.f32 %v1656, %v1657
  %v1659 = vrot.slane %v1658, 1
  %v1660 = vmax.f32 %v1658, %v1659
  %v1661 = vsel %vm253, %v209, -inf
  %v1662 = vrot.slane %v1661, 4
  %v1663 = vmax.f32 %v1661, %v1662
  %v1664 = vrot.slane %v1663, 2
  %v1665 = vmax.f32 %v1663, %v1664
  %v1666 = vrot.slane %v1665, 1
  %v1667 = vmax.f32 %v1665, %v1666
  %v1668 = vsel %vm253, %v210, -inf
  %v1669 = vrot.slane %v1668, 4
  %v1670 = vmax.f32 %v1668, %v1669
  %v1671 = vrot.slane %v1670, 2
  %v1672 = vmax.f32 %v1670, %v1671
  %v1673 = vrot.slane %v1672, 1
  %v1674 = vmax.f32 %v1672, %v1673
  %v1675 = vsel %vm253, %v211, -inf
  %v1676 = vrot.slane %v1675, 4
  %v1677 = vmax.f32 %v1675, %v1676
  %v1678 = vrot.slane %v1677, 2
  %v1679 = vmax.f32 %v1677, %v1678
  %v1680 = vrot.slane %v1679, 1
  %v1681 = vmax.f32 %v1679, %v1680
  %v1682 = vsel %vm253, %v212, -inf
  %v1683 = vrot.slane %v1682, 4
  %v1684 = vmax.f32 %v1682, %v1683
  %v1685 = vrot.slane %v1684, 2
  %v1686 = vmax.f32 %v1684, %v1685
  %v1687 = vrot.slane %v1686, 1
  %v1688 = vmax.f32 %v1686, %v1687
  %v1689 = vsel %vm253, %v213, -inf
  %v1690 = vrot.slane %v1689, 4
  %v1691 = vmax.f32 %v1689, %v1690
  %v1692 = vrot.slane %v1691, 2
  %v1693 = vmax.f32 %v1691, %v1692
  %v1694 = vrot.slane %v1693, 1
  %v1695 = vmax.f32 %v1693, %v1694
  %v1696 = vsel %vm253, %v214, -inf
  %v1697 = vrot.slane %v1696, 4
  %v1698 = vmax.f32 %v1696, %v1697
  %v1699 = vrot.slane %v1698, 2
  %v1700 = vmax.f32 %v1698, %v1699
  %v1701 = vrot.slane %v1700, 1
  %v1702 = vmax.f32 %v1700, %v1701
  %v1703 = vsel %vm253, %v215, -inf
  %v1704 = vrot.slane %v1703, 4
  %v1705 = vmax.f32 %v1703, %v1704
  %v1706 = vrot.slane %v1705, 2
  %v1707 = vmax.f32 %v1705, %v1706
  %v1708 = vrot.slane %v1707, 1
  %v1709 = vmax.f32 %v1707, %v1708
  %v1710 = vsel %vm253, %v216, -inf
  %v1711 = vrot.slane %v1710, 4
  %v1712 = vmax.f32 %v1710, %v1711
  %v1713 = vrot.slane %v1712, 2
  %v1714 = vmax.f32 %v1712, %v1713
  %v1715 = vrot.slane %v1714, 1
  %v1716 = vmax.f32 %v1714, %v1715
  %v1717 = vsel %vm253, %v217, -inf
  %v1718 = vrot.slane %v1717, 4
  %v1719 = vmax.f32 %v1717, %v1718
  %v1720 = vrot.slane %v1719, 2
  %v1721 = vmax.f32 %v1719, %v1720
  %v1722 = vrot.slane %v1721, 1
  %v1723 = vmax.f32 %v1721, %v1722
  %v1724 = vsel %vm253, %v218, -inf
  %v1725 = vrot.slane %v1724, 4
  %v1726 = vmax.f32 %v1724, %v1725
  %v1727 = vrot.slane %v1726, 2
  %v1728 = vmax.f32 %v1726, %v1727
  %v1729 = vrot.slane %v1728, 1
  %v1730 = vmax.f32 %v1728, %v1729
  %v1731 = vsel %vm253, %v219, -inf
  %v1732 = vrot.slane %v1731, 4
  %v1733 = vmax.f32 %v1731, %v1732
  %v1734 = vrot.slane %v1733, 2
  %v1735 = vmax.f32 %v1733, %v1734
  %v1736 = vrot.slane %v1735, 1
  %v1737 = vmax.f32 %v1735, %v1736
  %v1738 = vsel %vm253, %v220, -inf
  %v1739 = vrot.slane %v1738, 4
  %v1740 = vmax.f32 %v1738, %v1739
  %v1741 = vrot.slane %v1740, 2
  %v1742 = vmax.f32 %v1740, %v1741
  %v1743 = vrot.slane %v1742, 1
  %v1744 = vmax.f32 %v1742, %v1743
  %v1745 = vsel %vm253, %v221, -inf
  %v1746 = vrot.slane %v1745, 4
  %v1747 = vmax.f32 %v1745, %v1746
  %v1748 = vrot.slane %v1747, 2
  %v1749 = vmax.f32 %v1747, %v1748
  %v1750 = vrot.slane %v1749, 1
  %v1751 = vmax.f32 %v1749, %v1750
  %v1752 = vsel %vm253, %v222, -inf
  %v1753 = vrot.slane %v1752, 4
  %v1754 = vmax.f32 %v1752, %v1753
  %v1755 = vrot.slane %v1754, 2
  %v1756 = vmax.f32 %v1754, %v1755
  %v1757 = vrot.slane %v1756, 1
  %v1758 = vmax.f32 %v1756, %v1757
  %v1759 = vsel %vm253, %v223, -inf
  %v1760 = vrot.slane %v1759, 4
  %v1761 = vmax.f32 %v1759, %v1760
  %v1762 = vrot.slane %v1761, 2
  %v1763 = vmax.f32 %v1761, %v1762
  %v1764 = vrot.slane %v1763, 1
  %v1765 = vmax.f32 %v1763, %v1764
  %v1766 = vsel %vm253, %v224, -inf
  %v1767 = vrot.slane %v1766, 4
  %v1768 = vmax.f32 %v1766, %v1767
  %v1769 = vrot.slane %v1768, 2
  %v1770 = vmax.f32 %v1768, %v1769
  %v1771 = vrot.slane %v1770, 1
  %v1772 = vmax.f32 %v1770, %v1771
  %v1773 = vsel %vm253, %v225, -inf
  %v1774 = vrot.slane %v1773, 4
  %v1775 = vmax.f32 %v1773, %v1774
  %v1776 = vrot.slane %v1775, 2
  %v1777 = vmax.f32 %v1775, %v1776
  %v1778 = vrot.slane %v1777, 1
  %v1779 = vmax.f32 %v1777, %v1778
  %v1780 = vsel %vm253, %v226, -inf
  %v1781 = vrot.slane %v1780, 4
  %v1782 = vmax.f32 %v1780, %v1781
  %v1783 = vrot.slane %v1782, 2
  %v1784 = vmax.f32 %v1782, %v1783
  %v1785 = vrot.slane %v1784, 1
  %v1786 = vmax.f32 %v1784, %v1785
  %v1787 = vsel %vm253, %v227, -inf
  %v1788 = vrot.slane %v1787, 4
  %v1789 = vmax.f32 %v1787, %v1788
  %v1790 = vrot.slane %v1789, 2
  %v1791 = vmax.f32 %v1789, %v1790
  %v1792 = vrot.slane %v1791, 1
  %v1793 = vmax.f32 %v1791, %v1792
  %v1794 = vsel %vm253, %v228, -inf
  %v1795 = vrot.slane %v1794, 4
  %v1796 = vmax.f32 %v1794, %v1795
  %v1797 = vrot.slane %v1796, 2
  %v1798 = vmax.f32 %v1796, %v1797
  %v1799 = vrot.slane %v1798, 1
  %v1800 = vmax.f32 %v1798, %v1799
  %v1801 = vsel %vm253, %v229, -inf
  %v1802 = vrot.slane %v1801, 4
  %v1803 = vmax.f32 %v1801, %v1802
  %v1804 = vrot.slane %v1803, 2
  %v1805 = vmax.f32 %v1803, %v1804
  %v1806 = vrot.slane %v1805, 1
  %v1807 = vmax.f32 %v1805, %v1806
  %v1808 = vsel %vm253, %v230, -inf
  %v1809 = vrot.slane %v1808, 4
  %v1810 = vmax.f32 %v1808, %v1809
  %v1811 = vrot.slane %v1810, 2
  %v1812 = vmax.f32 %v1810, %v1811
  %v1813 = vrot.slane %v1812, 1
  %v1814 = vmax.f32 %v1812, %v1813
  %v1815 = vsel %vm253, %v231, -inf
  %v1816 = vrot.slane %v1815, 4
  %v1817 = vmax.f32 %v1815, %v1816
  %v1818 = vrot.slane %v1817, 2
  %v1819 = vmax.f32 %v1817, %v1818
  %v1820 = vrot.slane %v1819, 1
  %v1821 = vmax.f32 %v1819, %v1820
  %v1822 = vsel %vm253, %v232, -inf
  %v1823 = vrot.slane %v1822, 4
  %v1824 = vmax.f32 %v1822, %v1823
  %v1825 = vrot.slane %v1824, 2
  %v1826 = vmax.f32 %v1824, %v1825
  %v1827 = vrot.slane %v1826, 1
  %v1828 = vmax.f32 %v1826, %v1827
  %v1829 = vsel %vm253, %v233, -inf
  %v1830 = vrot.slane %v1829, 4
  %v1831 = vmax.f32 %v1829, %v1830
  %v1832 = vrot.slane %v1831, 2
  %v1833 = vmax.f32 %v1831, %v1832
  %v1834 = vrot.slane %v1833, 1
  %v1835 = vmax.f32 %v1833, %v1834
  %v1836 = vsel %vm253, %v234, -inf
  %v1837 = vrot.slane %v1836, 4
  %v1838 = vmax.f32 %v1836, %v1837
  %v1839 = vrot.slane %v1838, 2
  %v1840 = vmax.f32 %v1838, %v1839
  %v1841 = vrot.slane %v1840, 1
  %v1842 = vmax.f32 %v1840, %v1841
  %v1843 = vsel %vm253, %v235, -inf
  %v1844 = vrot.slane %v1843, 4
  %v1845 = vmax.f32 %v1843, %v1844
  %v1846 = vrot.slane %v1845, 2
  %v1847 = vmax.f32 %v1845, %v1846
  %v1848 = vrot.slane %v1847, 1
  %v1849 = vmax.f32 %v1847, %v1848
  %v1850 = vsel %vm253, %v236, -inf
  %v1851 = vrot.slane %v1850, 4
  %v1852 = vmax.f32 %v1850, %v1851
  %v1853 = vrot.slane %v1852, 2
  %v1854 = vmax.f32 %v1852, %v1853
  %v1855 = vrot.slane %v1854, 1
  %v1856 = vmax.f32 %v1854, %v1855
  %v1857 = vsel %vm253, %v237, -inf
  %v1858 = vrot.slane %v1857, 4
  %v1859 = vmax.f32 %v1857, %v1858
  %v1860 = vrot.slane %v1859, 2
  %v1861 = vmax.f32 %v1859, %v1860
  %v1862 = vrot.slane %v1861, 1
  %v1863 = vmax.f32 %v1861, %v1862
  %v1864 = vsel %vm253, %v238, -inf
  %v1865 = vrot.slane %v1864, 4
  %v1866 = vmax.f32 %v1864, %v1865
  %v1867 = vrot.slane %v1866, 2
  %v1868 = vmax.f32 %v1866, %v1867
  %v1869 = vrot.slane %v1868, 1
  %v1870 = vmax.f32 %v1868, %v1869
  %v1871 = vsel %vm253, %v239, -inf
  %v1872 = vrot.slane %v1871, 4
  %v1873 = vmax.f32 %v1871, %v1872
  %v1874 = vrot.slane %v1873, 2
  %v1875 = vmax.f32 %v1873, %v1874
  %v1876 = vrot.slane %v1875, 1
  %v1877 = vmax.f32 %v1875, %v1876
  %v1878 = vsel %vm253, %v240, -inf
  %v1879 = vrot.slane %v1878, 4
  %v1880 = vmax.f32 %v1878, %v1879
  %v1881 = vrot.slane %v1880, 2
  %v1882 = vmax.f32 %v1880, %v1881
  %v1883 = vrot.slane %v1882, 1
  %v1884 = vmax.f32 %v1882, %v1883
  %v1885 = vsel %vm253, %v241, -inf
  %v1886 = vrot.slane %v1885, 4
  %v1887 = vmax.f32 %v1885, %v1886
  %v1888 = vrot.slane %v1887, 2
  %v1889 = vmax.f32 %v1887, %v1888
  %v1890 = vrot.slane %v1889, 1
  %v1891 = vmax.f32 %v1889, %v1890
  %v1892 = vsel %vm253, %v242, -inf
  %v1893 = vrot.slane %v1892, 4
  %v1894 = vmax.f32 %v1892, %v1893
  %v1895 = vrot.slane %v1894, 2
  %v1896 = vmax.f32 %v1894, %v1895
  %v1897 = vrot.slane %v1896, 1
  %v1898 = vmax.f32 %v1896, %v1897
  %v1899 = vsel %vm253, %v243, -inf
  %v1900 = vrot.slane %v1899, 4
  %v1901 = vmax.f32 %v1899, %v1900
  %v1902 = vrot.slane %v1901, 2
  %v1903 = vmax.f32 %v1901, %v1902
  %v1904 = vrot.slane %v1903, 1
  %v1905 = vmax.f32 %v1903, %v1904
  %v1906 = vsel %vm253, %v244, -inf
  %v1907 = vrot.slane %v1906, 4
  %v1908 = vmax.f32 %v1906, %v1907
  %v1909 = vrot.slane %v1908, 2
  %v1910 = vmax.f32 %v1908, %v1909
  %v1911 = vrot.slane %v1910, 1
  %v1912 = vmax.f32 %v1910, %v1911
  %v1913 = vsel %vm253, %v245, -inf
  %v1914 = vrot.slane %v1913, 4
  %v1915 = vmax.f32 %v1913, %v1914
  %v1916 = vrot.slane %v1915, 2
  %v1917 = vmax.f32 %v1915, %v1916
  %v1918 = vrot.slane %v1917, 1
  %v1919 = vmax.f32 %v1917, %v1918
  %v1920 = vsel %vm253, %v246, -inf
  %v1921 = vrot.slane %v1920, 4
  %v1922 = vmax.f32 %v1920, %v1921
  %v1923 = vrot.slane %v1922, 2
  %v1924 = vmax.f32 %v1922, %v1923
  %v1925 = vrot.slane %v1924, 1
  %v1926 = vmax.f32 %v1924, %v1925
  %v1927 = vsel %vm253, %v247, -inf
  %v1928 = vrot.slane %v1927, 4
  %v1929 = vmax.f32 %v1927, %v1928
  %v1930 = vrot.slane %v1929, 2
  %v1931 = vmax.f32 %v1929, %v1930
  %v1932 = vrot.slane %v1931, 1
  %v1933 = vmax.f32 %v1931, %v1932
  %v1934 = vsel %vm253, %v248, -inf
  %v1935 = vrot.slane %v1934, 4
  %v1936 = vmax.f32 %v1934, %v1935
  %v1937 = vrot.slane %v1936, 2
  %v1938 = vmax.f32 %v1936, %v1937
  %v1939 = vrot.slane %v1938, 1
  %v1940 = vmax.f32 %v1938, %v1939
  %v1941 = vsel %vm253, %v249, -inf
  %v1942 = vrot.slane %v1941, 4
  %v1943 = vmax.f32 %v1941, %v1942
  %v1944 = vrot.slane %v1943, 2
  %v1945 = vmax.f32 %v1943, %v1944
  %v1946 = vrot.slane %v1945, 1
  %v1947 = vmax.f32 %v1945, %v1946
  %v1948 = vsel %vm253, %v250, -inf
  %v1949 = vrot.slane %v1948, 4
  %v1950 = vmax.f32 %v1948, %v1949
  %v1951 = vrot.slane %v1950, 2
  %v1952 = vmax.f32 %v1950, %v1951
  %v1953 = vrot.slane %v1952, 1
  %v1954 = vmax.f32 %v1952, %v1953
  %v1955 = vsel %vm253, %v251, -inf
  %v1956 = vrot.slane %v1955, 4
  %v1957 = vmax.f32 %v1955, %v1956
  %v1958 = vrot.slane %v1957, 2
  %v1959 = vmax.f32 %v1957, %v1958
  %v1960 = vrot.slane %v1959, 1
  %v1961 = vmax.f32 %v1959, %v1960
  %v1962 = vsel %vm253, %v252, -inf
  %v1963 = vrot.slane %v1962, 4
  %v1964 = vmax.f32 %v1962, %v1963
  %v1965 = vrot.slane %v1964, 2
  %v1966 = vmax.f32 %v1964, %v1965
  %v1967 = vrot.slane %v1966, 1
  %v1968 = vmax.f32 %v1966, %v1967
  %v1969 = vmax.f32 %v260, %v309
  %v1970 = vmax.f32 %v267, %v316
  %v1971 = vmax.f32 %v274, %v323
  %v1972 = vmax.f32 %v281, %v330
  %v1973 = vmax.f32 %v288, %v337
  %v1974 = vmax.f32 %v295, %v344
  %v1975 = vmax.f32 %v302, %v351
  %v1976 = vmax.f32 %v505, %v554
  %v1977 = vmax.f32 %v512, %v561
  %v1978 = vmax.f32 %v519, %v568
  %v1979 = vmax.f32 %v526, %v575
  %v1980 = vmax.f32 %v533, %v582
  %v1981 = vmax.f32 %v540, %v589
  %v1982 = vmax.f32 %v547, %v596
  %v1983 = vmax.f32 %v750, %v799
  %v1984 = vmax.f32 %v757, %v806
  %v1985 = vmax.f32 %v764, %v813
  %v1986 = vmax.f32 %v771, %v820
  %v1987 = vmax.f32 %v778, %v827
  %v1988 = vmax.f32 %v785, %v834
  %v1989 = vmax.f32 %v792, %v841
  %v1990 = vmax.f32 %v995, %v1044
  %v1991 = vmax.f32 %v1002, %v1051
  %v1992 = vmax.f32 %v1009, %v1058
  %v1993 = vmax.f32 %v1016, %v1065
  %v1994 = vmax.f32 %v1023, %v1072
  %v1995 = vmax.f32 %v1030, %v1079
  %v1996 = vmax.f32 %v1037, %v1086
  %v1997 = vmax.f32 %v1240, %v1289
  %v1998 = vmax.f32 %v1247, %v1296
  %v1999 = vmax.f32 %v1254, %v1303
  %v2000 = vmax.f32 %v1261, %v1310
  %v2001 = vmax.f32 %v1268, %v1317
  %v2002 = vmax.f32 %v1275, %v1324
  %v2003 = vmax.f32 %v1282, %v1331
  %v2004 = vmax.f32 %v1485, %v1534
  %v2005 = vmax.f32 %v1492, %v1541
  %v2006 = vmax.f32 %v1499, %v1548
  %v2007 = vmax.f32 %v1506, %v1555
  %v2008 = vmax.f32 %v1513, %v1562
  %v2009 = vmax.f32 %v1520, %v1569
  %v2010 = vmax.f32 %v1527, %v1576
  %v2011 = vmax.f32 %v1730, %v1779
  %v2012 = vmax.f32 %v1737, %v1786
  %v2013 = vmax.f32 %v1744, %v1793
  %v2014 = vmax.f32 %v1751, %v1800
  %v2015 = vmax.f32 %v1758, %v1807
  %v2016 = vmax.f32 %v1765, %v1814
  %v2017 = vmax.f32 %v1772, %v1821
  %v2018 = vmax.f32 %v358, %v407
  %v2019 = vmax.f32 %v365, %v414
  %v2020 = vmax.f32 %v372, %v421
  %v2021 = vmax.f32 %v379, %v428
  %v2022 = vmax.f32 %v386, %v435
  %v2023 = vmax.f32 %v393, %v442
  %v2024 = vmax.f32 %v400, %v449
  %v2025 = vmax.f32 %v603, %v652
  %v2026 = vmax.f32 %v610, %v659
  %v2027 = vmax.f32 %v617, %v666
  %v2028 = vmax.f32 %v624, %v673
  %v2029 = vmax.f32 %v631, %v680
  %v2030 = vmax.f32 %v638, %v687
  %v2031 = vmax.f32 %v645, %v694
  %v2032 = vmax.f32 %v848, %v897
  %v2033 = vmax.f32 %v855, %v904
  %v2034 = vmax.f32 %v862, %v911
  %v2035 = vmax.f32 %v869, %v918
  %v2036 = vmax.f32 %v876, %v925
  %v2037 = vmax.f32 %v883, %v932
  %v2038 = vmax.f32 %v890, %v939
  %v2039 = vmax.f32 %v1093, %v1142
  %v2040 = vmax.f32 %v1100, %v1149
  %v2041 = vmax.f32 %v1107, %v1156
  %v2042 = vmax.f32 %v1114, %v1163
  %v2043 = vmax.f32 %v1121, %v1170
  %v2044 = vmax.f32 %v1128, %v1177
  %v2045 = vmax.f32 %v1135, %v1184
  %v2046 = vmax.f32 %v1338, %v1387
  %v2047 = vmax.f32 %v1345, %v1394
  %v2048 = vmax.f32 %v1352, %v1401
  %v2049 = vmax.f32 %v1359, %v1408
  %v2050 = vmax.f32 %v1366, %v1415
  %v2051 = vmax.f32 %v1373, %v1422
  %v2052 = vmax.f32 %v1380, %v1429
  %v2053 = vmax.f32 %v1583, %v1632
  %v2054 = vmax.f32 %v1590, %v1639
  %v2055 = vmax.f32 %v1597, %v1646
  %v2056 = vmax.f32 %v1604, %v1653
  %v2057 = vmax.f32 %v1611, %v1660
  %v2058 = vmax.f32 %v1618, %v1667
  %v2059 = vmax.f32 %v1625, %v1674
  %v2060 = vmax.f32 %v1828, %v1877
  %v2061 = vmax.f32 %v1835, %v1884
  %v2062 = vmax.f32 %v1842, %v1891
  %v2063 = vmax.f32 %v1849, %v1898
  %v2064 = vmax.f32 %v1856, %v1905
  %v2065 = vmax.f32 %v1863, %v1912
  %v2066 = vmax.f32 %v1870, %v1919
  %v2067 = vmax.f32 %v1969, %v2018
  %v2068 = vmax.f32 %v1970, %v2019
  %v2069 = vmax.f32 %v1971, %v2020
  %v2070 = vmax.f32 %v1972, %v2021
  %v2071 = vmax.f32 %v1973, %v2022
  %v2072 = vmax.f32 %v1974, %v2023
  %v2073 = vmax.f32 %v1975, %v2024
  %v2074 = vmax.f32 %v1976, %v2025
  %v2075 = vmax.f32 %v1977, %v2026
  %v2076 = vmax.f32 %v1978, %v2027
  %v2077 = vmax.f32 %v1979, %v2028
  %v2078 = vmax.f32 %v1980, %v2029
  %v2079 = vmax.f32 %v1981, %v2030
  %v2080 = vmax.f32 %v1982, %v2031
  %v2081 = vmax.f32 %v1983, %v2032
  %v2082 = vmax.f32 %v1984, %v2033
  %v2083 = vmax.f32 %v1985, %v2034
  %v2084 = vmax.f32 %v1986, %v2035
  %v2085 = vmax.f32 %v1987, %v2036
  %v2086 = vmax.f32 %v1988, %v2037
  %v2087 = vmax.f32 %v1989, %v2038
  %v2088 = vmax.f32 %v1990, %v2039
  %v2089 = vmax.f32 %v1991, %v2040
  %v2090 = vmax.f32 %v1992, %v2041
  %v2091 = vmax.f32 %v1993, %v2042
  %v2092 = vmax.f32 %v1994, %v2043
  %v2093 = vmax.f32 %v1995, %v2044
  %v2094 = vmax.f32 %v1996, %v2045
  %v2095 = vmax.f32 %v1997, %v2046
  %v2096 = vmax.f32 %v1998, %v2047
  %v2097 = vmax.f32 %v1999, %v2048
  %v2098 = vmax.f32 %v2000, %v2049
  %v2099 = vmax.f32 %v2001, %v2050
  %v2100 = vmax.f32 %v2002, %v2051
  %v2101 = vmax.f32 %v2003, %v2052
  %v2102 = vmax.f32 %v2004, %v2053
  %v2103 = vmax.f32 %v2005, %v2054
  %v2104 = vmax.f32 %v2006, %v2055
  %v2105 = vmax.f32 %v2007, %v2056
  %v2106 = vmax.f32 %v2008, %v2057
  %v2107 = vmax.f32 %v2009, %v2058
  %v2108 = vmax.f32 %v2010, %v2059
  %v2109 = vmax.f32 %v2011, %v2060
  %v2110 = vmax.f32 %v2012, %v2061
  %v2111 = vmax.f32 %v2013, %v2062
  %v2112 = vmax.f32 %v2014, %v2063
  %v2113 = vmax.f32 %v2015, %v2064
  %v2114 = vmax.f32 %v2016, %v2065
  %v2115 = vmax.f32 %v2017, %v2066
  %v2116 = vmax.f32 %v2067, %v456
  %v2117 = vmax.f32 %v2068, %v463
  %v2118 = vmax.f32 %v2069, %v470
  %v2119 = vmax.f32 %v2070, %v477
  %v2120 = vmax.f32 %v2071, %v484
  %v2121 = vmax.f32 %v2072, %v491
  %v2122 = vmax.f32 %v2073, %v498
  %v2123 = vmax.f32 %v2074, %v701
  %v2124 = vmax.f32 %v2075, %v708
  %v2125 = vmax.f32 %v2076, %v715
  %v2126 = vmax.f32 %v2077, %v722
  %v2127 = vmax.f32 %v2078, %v729
  %v2128 = vmax.f32 %v2079, %v736
  %v2129 = vmax.f32 %v2080, %v743
  %v2130 = vmax.f32 %v2081, %v946
  %v2131 = vmax.f32 %v2082, %v953
  %v2132 = vmax.f32 %v2083, %v960
  %v2133 = vmax.f32 %v2084, %v967
  %v2134 = vmax.f32 %v2085, %v974
  %v2135 = vmax.f32 %v2086, %v981
  %v2136 = vmax.f32 %v2087, %v988
  %v2137 = vmax.f32 %v2088, %v1191
  %v2138 = vmax.f32 %v2089, %v1198
  %v2139 = vmax.f32 %v2090, %v1205
  %v2140 = vmax.f32 %v2091, %v1212
  %v2141 = vmax.f32 %v2092, %v1219
  %v2142 = vmax.f32 %v2093, %v1226
  %v2143 = vmax.f32 %v2094, %v1233
  %v2144 = vmax.f32 %v2095, %v1436
  %v2145 = vmax.f32 %v2096, %v1443
  %v2146 = vmax.f32 %v2097, %v1450
  %v2147 = vmax.f32 %v2098, %v1457
  %v2148 = vmax.f32 %v2099, %v1464
  %v2149 = vmax.f32 %v2100, %v1471
  %v2150 = vmax.f32 %v2101, %v1478
  %v2151 = vmax.f32 %v2102, %v1681
  %v2152 = vmax.f32 %v2103, %v1688
  %v2153 = vmax.f32 %v2104, %v1695
  %v2154 = vmax.f32 %v2105, %v1702
  %v2155 = vmax.f32 %v2106, %v1709
  %v2156 = vmax.f32 %v2107, %v1716
  %v2157 = vmax.f32 %v2108, %v1723
  %v2158 = vmax.f32 %v2109, %v1926
  %v2159 = vmax.f32 %v2110, %v1933
  %v2160 = vmax.f32 %v2111, %v1940
  %v2161 = vmax.f32 %v2112, %v1947
  %v2162 = vmax.f32 %v2113, %v1954
  %v2163 = vmax.f32 %v2114, %v1961
  %v2164 = vmax.f32 %v2115, %v1968
  %vm2214 = vcmask 1041409
  %v2215 = vsel %vm2214, %v2117, %v2116
  %vm2216 = vcmask 1042434
  %v2217 = vsel %vm2216, %v2118, %v2215
  %vm2218 = vcmask 1043459
  %v2219 = vsel %vm2218, %v2119, %v2217
  %vm2220 = vcmask 1044484
  %v2221 = vsel %vm2220, %v2120, %v2219
  %vm2222 = vcmask 1045509
  %v2223 = vsel %vm2222, %v2121, %v2221
  %vm2224 = vcmask 1046534
  %v2225 = vsel %vm2224, %v2122, %v2223
  %v2226 = vsel %vm2214, %v2124, %v2123
  %v2227 = vsel %vm2216, %v2125, %v2226
  %v2228 = vsel %vm2218, %v2126, %v2227
  %v2229 = vsel %vm2220, %v2127, %v2228
  %v2230 = vsel %vm2222, %v2128, %v2229
  %v2231 = vsel %vm2224, %v2129, %v2230
  %v2232 = vsel %vm2214, %v2131, %v2130
  %v2233 = vsel %vm2216, %v2132, %v2232
  %v2234 = vsel %vm2218, %v2133, %v2233
  %v2235 = vsel %vm2220, %v2134, %v2234
  %v2236 = vsel %vm2222, %v2135, %v2235
  %v2237 = vsel %vm2224, %v2136, %v2236
  %v2238 = vsel %vm2214, %v2138, %v2137
  %v2239 = vsel %vm2216, %v2139, %v2238
  %v2240 = vsel %vm2218, %v2140, %v2239
  %v2241 = vsel %vm2220, %v2141, %v2240
  %v2242 = vsel %vm2222, %v2142, %v2241
  %v2243 = vsel %vm2224, %v2143, %v2242
  %v2244 = vsel %vm2214, %v2145, %v2144
  %v2245 = vsel %vm2216, %v2146, %v2244
  %v2246 = vsel %vm2218, %v2147, %v2245
  %v2247 = vsel %vm2220, %v2148, %v2246
  %v2248 = vsel %vm2222, %v2149, %v2247
  %v2249 = vsel %vm2224, %v2150, %v2248
  %v2250 = vsel %vm2214, %v2152, %v2151
  %v2251 = vsel %vm2216, %v2153, %v2250
  %v2252 = vsel %vm2218, %v2154, %v2251
  %v2253 = vsel %vm2220, %v2155, %v2252
  %v2254 = vsel %vm2222, %v2156, %v2253
  %v2255 = vsel %vm2224, %v2157, %v2254
  %v2256 = vsel %vm2214, %v2159, %v2158
  %v2257 = vsel %vm2216, %v2160, %v2256
  %v2258 = vsel %vm2218, %v2161, %v2257
  %v2259 = vsel %vm2220, %v2162, %v2258
  %v2260 = vsel %vm2222, %v2163, %v2259
  %v2261 = vsel %vm2224, %v2164, %v2260
  %vm2269 = vcmask 260096
  %2270 = vst.msk [vmem:[%s1] sm:$0x7f] %vm2269, %v2225
  %2271 = vst.msk [vmem:[%s1 + $0x8] sm:$0x7f] %vm2269, %v2231
  %2272 = vst.msk [vmem:[%s1 + $0x10] sm:$0x7f] %vm2269, %v2237
  %2273 = vst.msk [vmem:[%s1 + $0x18] sm:$0x7f] %vm2269, %v2243
  %2274 = vst.msk [vmem:[%s1 + $0x20] sm:$0x7f] %vm2269, %v2249
  %2275 = vst.msk [vmem:[%s1 + $0x28] sm:$0x7f] %vm2269, %v2255
  %2276 = vst.msk [vmem:[%s1 + $0x30] sm:$0x7f] %vm2269, %v2261
  // Predicated region
  $region6: #{model_forward.4} parent=0 // pred_check
    _
  $region7: #{model_forward.4} parent=0 // pred_check_branch
    %2278 = sbr.rel (0) target = $region9
  $region8: #{model_forward.4} parent=0 // pred_region
    _
  $region9: #{model_forward.4} parent=0 // pred_fallthru
    _
  // Predicated region
  $region10: #{model_forward.4} parent=0 // pred_check
    _
  $region11: #{model_forward.4} parent=0 // pred_check_branch
    %2280 = sbr.rel (0) target = $region13
  $region12: #{model_forward.4} parent=0 // pred_region
    _
  $region13: #{model_forward.4} parent=0 // pred_fallthru
    _

</llo_original>
